<compile_context>
chip_gen: v7x
topology: tpu7x:2x2x1
jax: 0.10.0
libtpu: 0.0.40
codegen_flags: <defaults>
</compile_context>

<pallas_src>
import jax
import jax.numpy as jnp
from jax.experimental import pallas as pl
from jax.experimental.pallas import tpu as pltpu


def _round_up(n, m):
    return ((n + m - 1) // m) * m


# ----------------------------------------------------------------------------
# Pallas kernels
# ----------------------------------------------------------------------------
def _conv_bn_relu_pool_kernel(w_ref, p_ref, shift_ref, o_ref):
    """Fused Conv2d + BatchNorm(eval) + ReLU + MaxPool2d(3,3), transposed GEMM.

    w_ref    : (cout, K)    bf16  conv weight with BN scale folded in
    p_ref    : (9, K, TM)   bf16  im2col patches, one slab per 3x3 pool tap,
                                  columns = pooled output positions (lane axis)
    shift_ref: (cout, 1)    f32   folded BN shift + conv bias
    o_ref    : (cout, TM)   f32   pooled activations (lane-dense store)
    """
    acc = jnp.dot(w_ref[...], p_ref[0], preferred_element_type=jnp.float32)
    for t in range(1, 9):
        acc = jnp.maximum(
            acc, jnp.dot(w_ref[...], p_ref[t], preferred_element_type=jnp.float32))
    # max over pool taps commutes with the per-channel shift and the ReLU.
    o_ref[...] = jnp.maximum(acc + shift_ref[...], 0.0).astype(o_ref.dtype)


def _fc_tail_kernel(x_ref, wf_ref, bf_ref, w1_ref, b1_ref, w2_ref, b2_ref,
                    w3_ref, b3_ref, w4_ref, b4_ref, o_ref):
    """features (Linear li->16) + fcb (3x Linear/ReLU + Linear) fused in VMEM.

    Only the fc4 weight / bias / output are tiled along the output dim (grid).
    """
    f = jnp.dot(x_ref[...], wf_ref[...], preferred_element_type=jnp.float32) + bf_ref[...]
    h = jnp.maximum(jnp.dot(f, w1_ref[...], preferred_element_type=jnp.float32) + b1_ref[...], 0.0)
    h = jnp.maximum(jnp.dot(h, w2_ref[...], preferred_element_type=jnp.float32) + b2_ref[...], 0.0)
    h = jnp.maximum(jnp.dot(h, w3_ref[...], preferred_element_type=jnp.float32) + b3_ref[...], 0.0)
    o_ref[...] = (jnp.dot(h, w4_ref[...], preferred_element_type=jnp.float32)
                  + b4_ref[...]).astype(o_ref.dtype)


# ----------------------------------------------------------------------------
# Kernel wrappers
# ----------------------------------------------------------------------------
def conv_bn_relu_pool(x_nchw, w, b, gamma, beta, mean, var, eps=1e-5):
    """Conv2d(k=4,s=1,p=1) + BatchNorm2d(eval) + ReLU + MaxPool2d(3,3).

    x_nchw: (B, Cin, H, W);  w: (Cout, Cin, k, k)  -> returns (B, Cout, Hp, Wp).
    """
    B, cin, H, W = x_nchw.shape
    cout, _, k, _ = w.shape
    pad = 1
    K = cin * k * k
    Ho, Wo = H + 2 * pad - k + 1, W + 2 * pad - k + 1
    Hp, Wp = Ho // 3, Wo // 3            # MaxPool2d(3,3) floor-crops
    Mw = B * Hp * Wp

    # Fold BN(eval) + conv bias:  y = s*conv(x) + (beta - s*mean + s*b)
    s = gamma / jnp.sqrt(var + eps)
    shift = (beta - mean * s + b * s).reshape(cout, 1).astype(jnp.float32)
    w_s = (w.reshape(cout, K) * s[:, None]).astype(jnp.bfloat16)

    # Pool-window-grouped im2col (XLA layout glue): (9, K, Mw)
    #   tap index = (dh, dw) of the 3x3 pool window; K ordered (cin, kh, kw)
    #   to match w.reshape(cout, cin*k*k); columns ordered (b, hp, wp).
    xp = jnp.pad(x_nchw, ((0, 0), (0, 0), (pad, pad), (pad, pad)))
    taps = []
    for dh in range(3):
        for dw in range(3):
            cols = []
            for ih in range(k):
                for iw in range(k):
                    cols.append(xp[:, :, dh + ih: dh + ih + 3 * Hp: 3,
                                         dw + iw: dw + iw + 3 * Wp: 3])
            tap = jnp.stack(cols, axis=2)          # (B, cin, k*k, Hp, Wp)
            tap = tap.transpose(1, 2, 0, 3, 4)     # (cin, k*k, B, Hp, Wp)
            taps.append(tap.reshape(K, Mw))
    pT = jnp.stack(taps, axis=0).astype(jnp.bfloat16)   # (9, K, Mw)

    TM = min(512, _round_up(Mw, 128))
    Mwp = _round_up(Mw, TM)
    if Mwp != Mw:
        pT = jnp.pad(pT, ((0, 0), (0, 0), (0, Mwp - Mw)))

    out = pl.pallas_call(
        _conv_bn_relu_pool_kernel,
        out_shape=jax.ShapeDtypeStruct((cout, Mwp), jnp.float32),
        grid=(Mwp // TM,),
        in_specs=[
            pl.BlockSpec((cout, K), lambda i: (0, 0)),
            pl.BlockSpec((9, K, TM), lambda i: (0, 0, i)),
            pl.BlockSpec((cout, 1), lambda i: (0, 0)),
        ],
        out_specs=pl.BlockSpec((cout, TM), lambda i: (0, i)),
        compiler_params=pltpu.CompilerParams(dimension_semantics=("parallel",)),
    )(w_s, pT, shift)

    # (cout, B*Hp*Wp) -> NCHW
    return out[:, :Mw].reshape(cout, B, Hp, Wp).transpose(1, 0, 2, 3)


def fc_tail(x, p):
    """features + fcb fused into one pallas_call.  x: (B, li) -> (B, lo)."""
    B, li = x.shape
    Bp = _round_up(max(B, 8), 8)
    if Bp != B:
        x = jnp.pad(x, ((0, Bp - B), (0, 0)))

    wf, bf = p["feat_w"], p["feat_b"].reshape(1, -1)
    w1, b1 = p["fc1_w"], p["fc1_b"].reshape(1, -1)
    w2, b2 = p["fc2_w"], p["fc2_b"].reshape(1, -1)
    w3, b3 = p["fc3_w"], p["fc3_b"].reshape(1, -1)

    lo = p["fc4_w"].shape[1]
    TN = min(512, _round_up(lo, 128))
    lop = _round_up(lo, TN)
    w4 = jnp.pad(p["fc4_w"], ((0, 0), (0, lop - lo)))
    b4 = jnp.pad(p["fc4_b"].reshape(1, -1), ((0, 0), (0, lop - lo)))

    def _full(a):
        return pl.BlockSpec(a.shape, lambda j: (0, 0))

    out = pl.pallas_call(
        _fc_tail_kernel,
        out_shape=jax.ShapeDtypeStruct((Bp, lop), jnp.float32),
        grid=(lop // TN,),
        in_specs=[_full(x), _full(wf), _full(bf), _full(w1), _full(b1),
                  _full(w2), _full(b2), _full(w3), _full(b3),
                  pl.BlockSpec((w4.shape[0], TN), lambda j: (0, j)),
                  pl.BlockSpec((1, TN), lambda j: (0, j))],
        out_specs=pl.BlockSpec((Bp, TN), lambda j: (0, j)),
        compiler_params=pltpu.CompilerParams(dimension_semantics=("parallel",)),
    )(x, wf, bf, w1, b1, w2, b2, w3, b3, w4, b4)
    return out[:B, :lo]


# ----------------------------------------------------------------------------
# Model: parameters + forward
# ----------------------------------------------------------------------------
def init_params(key, li, l1, l2, l3, lo):
    ks = iter(jax.random.split(key, 32))

    def nrm(shape, s=0.05):
        return jax.random.normal(next(ks), shape, jnp.float32) * s

    p = {}
    # conv weights in PyTorch layout: (cout, cin, kh, kw)
    p["conv1_w"], p["conv1_b"] = nrm((4, 1, 4, 4)), nrm((4,))
    p["conv2_w"], p["conv2_b"] = nrm((16, 4, 4, 4)), nrm((16,))
    p["conv3_w"], p["conv3_b"] = nrm((64, 16, 4, 4)), nrm((64,))
    for i, c in zip((1, 2, 3), (4, 16, 64)):
        p[f"bn{i}_gamma"] = 1.0 + nrm((c,), 0.1)
        p[f"bn{i}_beta"] = nrm((c,), 0.1)
        p[f"bn{i}_mean"] = jnp.zeros((c,), jnp.float32)
        p[f"bn{i}_var"] = jnp.ones((c,), jnp.float32)
    p["feat_w"], p["feat_b"] = nrm((li, 16)), nrm((16,))
    p["fc1_w"], p["fc1_b"] = nrm((16, l1)), nrm((l1,))
    p["fc2_w"], p["fc2_b"] = nrm((l1, l2)), nrm((l2,))
    p["fc3_w"], p["fc3_b"] = nrm((l2, l3)), nrm((l3,))
    p["fc4_w"], p["fc4_b"] = nrm((l3, lo)), nrm((lo,))
    return p


def autoencoder_mlp_forward(params, x_nchw, li):
    p = params
    B = x_nchw.shape[0]
    a1 = conv_bn_relu_pool(x_nchw, p["conv1_w"], p["conv1_b"],
                           p["bn1_gamma"], p["bn1_beta"], p["bn1_mean"], p["bn1_var"])
    a2 = conv_bn_relu_pool(a1, p["conv2_w"], p["conv2_b"],
                           p["bn2_gamma"], p["bn2_beta"], p["bn2_mean"], p["bn2_var"])
    a3 = conv_bn_relu_pool(a2, p["conv3_w"], p["conv3_b"],
                           p["bn3_gamma"], p["bn3_beta"], p["bn3_mean"], p["bn3_var"])
    a3_flat = a3.reshape(B, -1)   # NCHW flatten == PyTorch .view(-1, li)
    assert a3_flat.shape[1] == li, (a3_flat.shape, li)
    return fc_tail(a3_flat, p)


# ----------------------------------------------------------------------------
if __name__ == "__main__":
    # Small config: 68x68 single-channel input -> conv/pool stack gives 64x2x2
    # features, so li = 256 (the default li=3136 corresponds to 224x224 inputs).
    B, S = 2, 68
    li, l1, l2, l3, lo = 256, 128, 128, 128, 1000

    key = jax.random.PRNGKey(0)
    k_params, k_x = jax.random.split(key)
    params = init_params(k_params, li, l1, l2, l3, lo)
    x = jax.random.normal(k_x, (B, 1, S, S), jnp.float32)  # NCHW, like PyTorch

    fwd = jax.jit(autoencoder_mlp_forward, static_argnums=2)
    out = jax.block_until_ready(fwd(params, x, li))
    assert out.shape == (B, lo), out.shape
    assert bool(jnp.all(jnp.isfinite(out)))
    print("KERNEL_OK")
</pallas_src>

<mosaic_0001>
module attributes {stable_mosaic.version = 11 : i64} {
  func.func @_conv_bn_relu_pool_kernel(%arg0: i32, %arg1: memref<4x16xbf16, #tpu.memory_space<vmem>>, %arg2: memref<9x16x512xbf16, #tpu.memory_space<vmem>>, %arg3: memref<4x1xf32, #tpu.memory_space<vmem>>, %arg4: memref<4x512xf32, #tpu.memory_space<vmem>>) attributes {dimension_semantics = [#tpu.dimension_semantics<parallel>], iteration_bounds = array<i64: 2>, scalar_prefetch = 0 : i64, scratch_operands = 0 : i64, tpu.core_type = #tpu.core_type<tc>, window_params = [{pipeline_mode = #tpu.pipeline_mode<synchronous>, transform_indices = @transform_0, window_bounds = array<i64: 4, 16>}, {transform_indices = @transform_1, window_bounds = array<i64: 9, 16, 512>}, {pipeline_mode = #tpu.pipeline_mode<synchronous>, transform_indices = @transform_2, window_bounds = array<i64: 4, 1>}, {transform_indices = @transform_3, window_bounds = array<i64: 4, 512>}]} {
    %c0 = arith.constant 0 : index
    %c0_0 = arith.constant 0 : index
    %0 = vector.load %arg1[%c0, %c0_0] : memref<4x16xbf16, #tpu.memory_space<vmem>>, vector<4x16xbf16>
    %c0_1 = arith.constant 0 : index
    %c0_2 = arith.constant 0 : index
    %c0_3 = arith.constant 0 : index
    %1 = vector.load %arg2[%c0_1, %c0_2, %c0_3] : memref<9x16x512xbf16, #tpu.memory_space<vmem>>, vector<1x16x512xbf16>
    %2 = vector.shape_cast %1 : vector<1x16x512xbf16> to vector<16x512xbf16>
    %cst = arith.constant dense<0.000000e+00> : vector<4x512xf32>
    %3 = tpu.matmul %0, %2, %cst {dimension_numbers = #tpu.dot_dimension_numbers<[1], [0], [0], [1], [0, 0, 1, 1], [], []>} : vector<4x16xbf16>, vector<16x512xbf16>, vector<4x512xf32> -> vector<4x512xf32>
    %c0_4 = arith.constant 0 : index
    %c0_5 = arith.constant 0 : index
    %4 = vector.load %arg1[%c0_4, %c0_5] : memref<4x16xbf16, #tpu.memory_space<vmem>>, vector<4x16xbf16>
    %c1 = arith.constant 1 : index
    %c0_6 = arith.constant 0 : index
    %c0_7 = arith.constant 0 : index
    %5 = vector.load %arg2[%c1, %c0_6, %c0_7] : memref<9x16x512xbf16, #tpu.memory_space<vmem>>, vector<1x16x512xbf16>
    %6 = vector.shape_cast %5 : vector<1x16x512xbf16> to vector<16x512xbf16>
    %cst_8 = arith.constant dense<0.000000e+00> : vector<4x512xf32>
    %7 = tpu.matmul %4, %6, %cst_8 {dimension_numbers = #tpu.dot_dimension_numbers<[1], [0], [0], [1], [0, 0, 1, 1], [], []>} : vector<4x16xbf16>, vector<16x512xbf16>, vector<4x512xf32> -> vector<4x512xf32>
    %8 = arith.maximumf %3, %7 : vector<4x512xf32>
    %c0_9 = arith.constant 0 : index
    %c0_10 = arith.constant 0 : index
    %9 = vector.load %arg1[%c0_9, %c0_10] : memref<4x16xbf16, #tpu.memory_space<vmem>>, vector<4x16xbf16>
    %c2 = arith.constant 2 : index
    %c0_11 = arith.constant 0 : index
    %c0_12 = arith.constant 0 : index
    %10 = vector.load %arg2[%c2, %c0_11, %c0_12] : memref<9x16x512xbf16, #tpu.memory_space<vmem>>, vector<1x16x512xbf16>
    %11 = vector.shape_cast %10 : vector<1x16x512xbf16> to vector<16x512xbf16>
    %cst_13 = arith.constant dense<0.000000e+00> : vector<4x512xf32>
    %12 = tpu.matmul %9, %11, %cst_13 {dimension_numbers = #tpu.dot_dimension_numbers<[1], [0], [0], [1], [0, 0, 1, 1], [], []>} : vector<4x16xbf16>, vector<16x512xbf16>, vector<4x512xf32> -> vector<4x512xf32>
    %13 = arith.maximumf %8, %12 : vector<4x512xf32>
    %c0_14 = arith.constant 0 : index
    %c0_15 = arith.constant 0 : index
    %14 = vector.load %arg1[%c0_14, %c0_15] : memref<4x16xbf16, #tpu.memory_space<vmem>>, vector<4x16xbf16>
    %c3 = arith.constant 3 : index
    %c0_16 = arith.constant 0 : index
    %c0_17 = arith.constant 0 : index
    %15 = vector.load %arg2[%c3, %c0_16, %c0_17] : memref<9x16x512xbf16, #tpu.memory_space<vmem>>, vector<1x16x512xbf16>
    %16 = vector.shape_cast %15 : vector<1x16x512xbf16> to vector<16x512xbf16>
    %cst_18 = arith.constant dense<0.000000e+00> : vector<4x512xf32>
    %17 = tpu.matmul %14, %16, %cst_18 {dimension_numbers = #tpu.dot_dimension_numbers<[1], [0], [0], [1], [0, 0, 1, 1], [], []>} : vector<4x16xbf16>, vector<16x512xbf16>, vector<4x512xf32> -> vector<4x512xf32>
    %18 = arith.maximumf %13, %17 : vector<4x512xf32>
    %c0_19 = arith.constant 0 : index
    %c0_20 = arith.constant 0 : index
    %19 = vector.load %arg1[%c0_19, %c0_20] : memref<4x16xbf16, #tpu.memory_space<vmem>>, vector<4x16xbf16>
    %c4 = arith.constant 4 : index
    %c0_21 = arith.constant 0 : index
    %c0_22 = arith.constant 0 : index
    %20 = vector.load %arg2[%c4, %c0_21, %c0_22] : memref<9x16x512xbf16, #tpu.memory_space<vmem>>, vector<1x16x512xbf16>
    %21 = vector.shape_cast %20 : vector<1x16x512xbf16> to vector<16x512xbf16>
    %cst_23 = arith.constant dense<0.000000e+00> : vector<4x512xf32>
    %22 = tpu.matmul %19, %21, %cst_23 {dimension_numbers = #tpu.dot_dimension_numbers<[1], [0], [0], [1], [0, 0, 1, 1], [], []>} : vector<4x16xbf16>, vector<16x512xbf16>, vector<4x512xf32> -> vector<4x512xf32>
    %23 = arith.maximumf %18, %22 : vector<4x512xf32>
    %c0_24 = arith.constant 0 : index
    %c0_25 = arith.constant 0 : index
    %24 = vector.load %arg1[%c0_24, %c0_25] : memref<4x16xbf16, #tpu.memory_space<vmem>>, vector<4x16xbf16>
    %c5 = arith.constant 5 : index
    %c0_26 = arith.constant 0 : index
    %c0_27 = arith.constant 0 : index
    %25 = vector.load %arg2[%c5, %c0_26, %c0_27] : memref<9x16x512xbf16, #tpu.memory_space<vmem>>, vector<1x16x512xbf16>
    %26 = vector.shape_cast %25 : vector<1x16x512xbf16> to vector<16x512xbf16>
    %cst_28 = arith.constant dense<0.000000e+00> : vector<4x512xf32>
    %27 = tpu.matmul %24, %26, %cst_28 {dimension_numbers = #tpu.dot_dimension_numbers<[1], [0], [0], [1], [0, 0, 1, 1], [], []>} : vector<4x16xbf16>, vector<16x512xbf16>, vector<4x512xf32> -> vector<4x512xf32>
    %28 = arith.maximumf %23, %27 : vector<4x512xf32>
    %c0_29 = arith.constant 0 : index
    %c0_30 = arith.constant 0 : index
    %29 = vector.load %arg1[%c0_29, %c0_30] : memref<4x16xbf16, #tpu.memory_space<vmem>>, vector<4x16xbf16>
    %c6 = arith.constant 6 : index
    %c0_31 = arith.constant 0 : index
    %c0_32 = arith.constant 0 : index
    %30 = vector.load %arg2[%c6, %c0_31, %c0_32] : memref<9x16x512xbf16, #tpu.memory_space<vmem>>, vector<1x16x512xbf16>
    %31 = vector.shape_cast %30 : vector<1x16x512xbf16> to vector<16x512xbf16>
    %cst_33 = arith.constant dense<0.000000e+00> : vector<4x512xf32>
    %32 = tpu.matmul %29, %31, %cst_33 {dimension_numbers = #tpu.dot_dimension_numbers<[1], [0], [0], [1], [0, 0, 1, 1], [], []>} : vector<4x16xbf16>, vector<16x512xbf16>, vector<4x512xf32> -> vector<4x512xf32>
    %33 = arith.maximumf %28, %32 : vector<4x512xf32>
    %c0_34 = arith.constant 0 : index
    %c0_35 = arith.constant 0 : index
    %34 = vector.load %arg1[%c0_34, %c0_35] : memref<4x16xbf16, #tpu.memory_space<vmem>>, vector<4x16xbf16>
    %c7 = arith.constant 7 : index
    %c0_36 = arith.constant 0 : index
    %c0_37 = arith.constant 0 : index
    %35 = vector.load %arg2[%c7, %c0_36, %c0_37] : memref<9x16x512xbf16, #tpu.memory_space<vmem>>, vector<1x16x512xbf16>
    %36 = vector.shape_cast %35 : vector<1x16x512xbf16> to vector<16x512xbf16>
    %cst_38 = arith.constant dense<0.000000e+00> : vector<4x512xf32>
    %37 = tpu.matmul %34, %36, %cst_38 {dimension_numbers = #tpu.dot_dimension_numbers<[1], [0], [0], [1], [0, 0, 1, 1], [], []>} : vector<4x16xbf16>, vector<16x512xbf16>, vector<4x512xf32> -> vector<4x512xf32>
    %38 = arith.maximumf %33, %37 : vector<4x512xf32>
    %c0_39 = arith.constant 0 : index
    %c0_40 = arith.constant 0 : index
    %39 = vector.load %arg1[%c0_39, %c0_40] : memref<4x16xbf16, #tpu.memory_space<vmem>>, vector<4x16xbf16>
    %c8 = arith.constant 8 : index
    %c0_41 = arith.constant 0 : index
    %c0_42 = arith.constant 0 : index
    %40 = vector.load %arg2[%c8, %c0_41, %c0_42] : memref<9x16x512xbf16, #tpu.memory_space<vmem>>, vector<1x16x512xbf16>
    %41 = vector.shape_cast %40 : vector<1x16x512xbf16> to vector<16x512xbf16>
    %cst_43 = arith.constant dense<0.000000e+00> : vector<4x512xf32>
    %42 = tpu.matmul %39, %41, %cst_43 {dimension_numbers = #tpu.dot_dimension_numbers<[1], [0], [0], [1], [0, 0, 1, 1], [], []>} : vector<4x16xbf16>, vector<16x512xbf16>, vector<4x512xf32> -> vector<4x512xf32>
    %43 = arith.maximumf %38, %42 : vector<4x512xf32>
    %c0_44 = arith.constant 0 : index
    %c0_45 = arith.constant 0 : index
    %44 = vector.load %arg3[%c0_44, %c0_45] : memref<4x1xf32, #tpu.memory_space<vmem>>, vector<4x1xf32>
    %45 = vector.broadcast %44 : vector<4x1xf32> to vector<4x512xf32>
    %46 = arith.addf %43, %45 : vector<4x512xf32>
    %cst_46 = arith.constant 0.000000e+00 : f32
    %47 = vector.broadcast %cst_46 : f32 to vector<4x512xf32>
    %48 = arith.maximumf %46, %47 : vector<4x512xf32>
    %c0_47 = arith.constant 0 : index
    %c0_48 = arith.constant 0 : index
    %49 = vector.load %arg4[%c0_47, %c0_48] : memref<4x512xf32, #tpu.memory_space<vmem>>, vector<4x512xf32>
    tpu.vector_store %arg4[%c0_47, %c0_48], %48 {strides = array<i32>} : memref<4x512xf32, #tpu.memory_space<vmem>>, vector<4x512xf32>,
    return
  }
  func.func @transform_0(%arg0: i32) -> (i32, i32) {
    %c0_i32 = arith.constant 0 : i32
    %c0_i32_0 = arith.constant 0 : i32
    %c0_i32_1 = arith.constant 0 : i32
    return %c0_i32, %c0_i32_0 : i32, i32
  }
  func.func @transform_1(%arg0: i32) -> (i32, i32, i32) {
    %c0_i32 = arith.constant 0 : i32
    %c0_i32_0 = arith.constant 0 : i32
    %c0_i32_1 = arith.constant 0 : i32
    return %c0_i32, %c0_i32_0, %arg0 : i32, i32, i32
  }
  func.func @transform_2(%arg0: i32) -> (i32, i32) {
    %c0_i32 = arith.constant 0 : i32
    %c0_i32_0 = arith.constant 0 : i32
    %c0_i32_1 = arith.constant 0 : i32
    return %c0_i32, %c0_i32_0 : i32, i32
  }
  func.func @transform_3(%arg0: i32) -> (i32, i32) {
    %c0_i32 = arith.constant 0 : i32
    %c0_i32_0 = arith.constant 0 : i32
    return %c0_i32, %arg0 : i32, i32
  }
}

module attributes {stable_mosaic.version = 11 : i64} {
  func.func @_conv_bn_relu_pool_kernel(%arg0: i32, %arg1: memref<16x64xbf16, #tpu.memory_space<vmem>>, %arg2: memref<9x64x128xbf16, #tpu.memory_space<vmem>>, %arg3: memref<16x1xf32, #tpu.memory_space<vmem>>, %arg4: memref<16x128xf32, #tpu.memory_space<vmem>>) attributes {dimension_semantics = [#tpu.dimension_semantics<parallel>], iteration_bounds = array<i64: 1>, scalar_prefetch = 0 : i64, scratch_operands = 0 : i64, tpu.core_type = #tpu.core_type<tc>, window_params = [{pipeline_mode = #tpu.pipeline_mode<synchronous>, transform_indices = @transform_0, window_bounds = array<i64: 16, 64>}, {transform_indices = @transform_1, window_bounds = array<i64: 9, 64, 128>}, {pipeline_mode = #tpu.pipeline_mode<synchronous>, transform_indices = @transform_2, window_bounds = array<i64: 16, 1>}, {transform_indices = @transform_3, window_bounds = array<i64: 16, 128>}]} {
    %c0 = arith.constant 0 : index
    %c0_0 = arith.constant 0 : index
    %0 = vector.load %arg1[%c0, %c0_0] : memref<16x64xbf16, #tpu.memory_space<vmem>>, vector<16x64xbf16>
    %c0_1 = arith.constant 0 : index
    %c0_2 = arith.constant 0 : index
    %c0_3 = arith.constant 0 : index
    %1 = vector.load %arg2[%c0_1, %c0_2, %c0_3] : memref<9x64x128xbf16, #tpu.memory_space<vmem>>, vector<1x64x128xbf16>
    %2 = vector.shape_cast %1 : vector<1x64x128xbf16> to vector<64x128xbf16>
    %cst = arith.constant dense<0.000000e+00> : vector<16x128xf32>
    %3 = tpu.matmul %0, %2, %cst {dimension_numbers = #tpu.dot_dimension_numbers<[1], [0], [0], [1], [0, 0, 1, 1], [], []>} : vector<16x64xbf16>, vector<64x128xbf16>, vector<16x128xf32> -> vector<16x128xf32>
    %c0_4 = arith.constant 0 : index
    %c0_5 = arith.constant 0 : index
    %4 = vector.load %arg1[%c0_4, %c0_5] : memref<16x64xbf16, #tpu.memory_space<vmem>>, vector<16x64xbf16>
    %c1 = arith.constant 1 : index
    %c0_6 = arith.constant 0 : index
    %c0_7 = arith.constant 0 : index
    %5 = vector.load %arg2[%c1, %c0_6, %c0_7] : memref<9x64x128xbf16, #tpu.memory_space<vmem>>, vector<1x64x128xbf16>
    %6 = vector.shape_cast %5 : vector<1x64x128xbf16> to vector<64x128xbf16>
    %cst_8 = arith.constant dense<0.000000e+00> : vector<16x128xf32>
    %7 = tpu.matmul %4, %6, %cst_8 {dimension_numbers = #tpu.dot_dimension_numbers<[1], [0], [0], [1], [0, 0, 1, 1], [], []>} : vector<16x64xbf16>, vector<64x128xbf16>, vector<16x128xf32> -> vector<16x128xf32>
    %8 = arith.maximumf %3, %7 : vector<16x128xf32>
    %c0_9 = arith.constant 0 : index
    %c0_10 = arith.constant 0 : index
    %9 = vector.load %arg1[%c0_9, %c0_10] : memref<16x64xbf16, #tpu.memory_space<vmem>>, vector<16x64xbf16>
    %c2 = arith.constant 2 : index
    %c0_11 = arith.constant 0 : index
    %c0_12 = arith.constant 0 : index
    %10 = vector.load %arg2[%c2, %c0_11, %c0_12] : memref<9x64x128xbf16, #tpu.memory_space<vmem>>, vector<1x64x128xbf16>
    %11 = vector.shape_cast %10 : vector<1x64x128xbf16> to vector<64x128xbf16>
    %cst_13 = arith.constant dense<0.000000e+00> : vector<16x128xf32>
    %12 = tpu.matmul %9, %11, %cst_13 {dimension_numbers = #tpu.dot_dimension_numbers<[1], [0], [0], [1], [0, 0, 1, 1], [], []>} : vector<16x64xbf16>, vector<64x128xbf16>, vector<16x128xf32> -> vector<16x128xf32>
    %13 = arith.maximumf %8, %12 : vector<16x128xf32>
    %c0_14 = arith.constant 0 : index
    %c0_15 = arith.constant 0 : index
    %14 = vector.load %arg1[%c0_14, %c0_15] : memref<16x64xbf16, #tpu.memory_space<vmem>>, vector<16x64xbf16>
    %c3 = arith.constant 3 : index
    %c0_16 = arith.constant 0 : index
    %c0_17 = arith.constant 0 : index
    %15 = vector.load %arg2[%c3, %c0_16, %c0_17] : memref<9x64x128xbf16, #tpu.memory_space<vmem>>, vector<1x64x128xbf16>
    %16 = vector.shape_cast %15 : vector<1x64x128xbf16> to vector<64x128xbf16>
    %cst_18 = arith.constant dense<0.000000e+00> : vector<16x128xf32>
    %17 = tpu.matmul %14, %16, %cst_18 {dimension_numbers = #tpu.dot_dimension_numbers<[1], [0], [0], [1], [0, 0, 1, 1], [], []>} : vector<16x64xbf16>, vector<64x128xbf16>, vector<16x128xf32> -> vector<16x128xf32>
    %18 = arith.maximumf %13, %17 : vector<16x128xf32>
    %c0_19 = arith.constant 0 : index
    %c0_20 = arith.constant 0 : index
    %19 = vector.load %arg1[%c0_19, %c0_20] : memref<16x64xbf16, #tpu.memory_space<vmem>>, vector<16x64xbf16>
    %c4 = arith.constant 4 : index
    %c0_21 = arith.constant 0 : index
    %c0_22 = arith.constant 0 : index
    %20 = vector.load %arg2[%c4, %c0_21, %c0_22] : memref<9x64x128xbf16, #tpu.memory_space<vmem>>, vector<1x64x128xbf16>
    %21 = vector.shape_cast %20 : vector<1x64x128xbf16> to vector<64x128xbf16>
    %cst_23 = arith.constant dense<0.000000e+00> : vector<16x128xf32>
    %22 = tpu.matmul %19, %21, %cst_23 {dimension_numbers = #tpu.dot_dimension_numbers<[1], [0], [0], [1], [0, 0, 1, 1], [], []>} : vector<16x64xbf16>, vector<64x128xbf16>, vector<16x128xf32> -> vector<16x128xf32>
    %23 = arith.maximumf %18, %22 : vector<16x128xf32>
    %c0_24 = arith.constant 0 : index
    %c0_25 = arith.constant 0 : index
    %24 = vector.load %arg1[%c0_24, %c0_25] : memref<16x64xbf16, #tpu.memory_space<vmem>>, vector<16x64xbf16>
    %c5 = arith.constant 5 : index
    %c0_26 = arith.constant 0 : index
    %c0_27 = arith.constant 0 : index
    %25 = vector.load %arg2[%c5, %c0_26, %c0_27] : memref<9x64x128xbf16, #tpu.memory_space<vmem>>, vector<1x64x128xbf16>
    %26 = vector.shape_cast %25 : vector<1x64x128xbf16> to vector<64x128xbf16>
    %cst_28 = arith.constant dense<0.000000e+00> : vector<16x128xf32>
    %27 = tpu.matmul %24, %26, %cst_28 {dimension_numbers = #tpu.dot_dimension_numbers<[1], [0], [0], [1], [0, 0, 1, 1], [], []>} : vector<16x64xbf16>, vector<64x128xbf16>, vector<16x128xf32> -> vector<16x128xf32>
    %28 = arith.maximumf %23, %27 : vector<16x128xf32>
    %c0_29 = arith.constant 0 : index
    %c0_30 = arith.constant 0 : index
    %29 = vector.load %arg1[%c0_29, %c0_30] : memref<16x64xbf16, #tpu.memory_space<vmem>>, vector<16x64xbf16>
    %c6 = arith.constant 6 : index
    %c0_31 = arith.constant 0 : index
    %c0_32 = arith.constant 0 : index
    %30 = vector.load %arg2[%c6, %c0_31, %c0_32] : memref<9x64x128xbf16, #tpu.memory_space<vmem>>, vector<1x64x128xbf16>
    %31 = vector.shape_cast %30 : vector<1x64x128xbf16> to vector<64x128xbf16>
    %cst_33 = arith.constant dense<0.000000e+00> : vector<16x128xf32>
    %32 = tpu.matmul %29, %31, %cst_33 {dimension_numbers = #tpu.dot_dimension_numbers<[1], [0], [0], [1], [0, 0, 1, 1], [], []>} : vector<16x64xbf16>, vector<64x128xbf16>, vector<16x128xf32> -> vector<16x128xf32>
    %33 = arith.maximumf %28, %32 : vector<16x128xf32>
    %c0_34 = arith.constant 0 : index
    %c0_35 = arith.constant 0 : index
    %34 = vector.load %arg1[%c0_34, %c0_35] : memref<16x64xbf16, #tpu.memory_space<vmem>>, vector<16x64xbf16>
    %c7 = arith.constant 7 : index
    %c0_36 = arith.constant 0 : index
    %c0_37 = arith.constant 0 : index
    %35 = vector.load %arg2[%c7, %c0_36, %c0_37] : memref<9x64x128xbf16, #tpu.memory_space<vmem>>, vector<1x64x128xbf16>
    %36 = vector.shape_cast %35 : vector<1x64x128xbf16> to vector<64x128xbf16>
    %cst_38 = arith.constant dense<0.000000e+00> : vector<16x128xf32>
    %37 = tpu.matmul %34, %36, %cst_38 {dimension_numbers = #tpu.dot_dimension_numbers<[1], [0], [0], [1], [0, 0, 1, 1], [], []>} : vector<16x64xbf16>, vector<64x128xbf16>, vector<16x128xf32> -> vector<16x128xf32>
    %38 = arith.maximumf %33, %37 : vector<16x128xf32>
    %c0_39 = arith.constant 0 : index
    %c0_40 = arith.constant 0 : index
    %39 = vector.load %arg1[%c0_39, %c0_40] : memref<16x64xbf16, #tpu.memory_space<vmem>>, vector<16x64xbf16>
    %c8 = arith.constant 8 : index
    %c0_41 = arith.constant 0 : index
    %c0_42 = arith.constant 0 : index
    %40 = vector.load %arg2[%c8, %c0_41, %c0_42] : memref<9x64x128xbf16, #tpu.memory_space<vmem>>, vector<1x64x128xbf16>
    %41 = vector.shape_cast %40 : vector<1x64x128xbf16> to vector<64x128xbf16>
    %cst_43 = arith.constant dense<0.000000e+00> : vector<16x128xf32>
    %42 = tpu.matmul %39, %41, %cst_43 {dimension_numbers = #tpu.dot_dimension_numbers<[1], [0], [0], [1], [0, 0, 1, 1], [], []>} : vector<16x64xbf16>, vector<64x128xbf16>, vector<16x128xf32> -> vector<16x128xf32>
    %43 = arith.maximumf %38, %42 : vector<16x128xf32>
    %c0_44 = arith.constant 0 : index
    %c0_45 = arith.constant 0 : index
    %44 = vector.load %arg3[%c0_44, %c0_45] : memref<16x1xf32, #tpu.memory_space<vmem>>, vector<16x1xf32>
    %45 = vector.broadcast %44 : vector<16x1xf32> to vector<16x128xf32>
    %46 = arith.addf %43, %45 : vector<16x128xf32>
    %cst_46 = arith.constant 0.000000e+00 : f32
    %47 = vector.broadcast %cst_46 : f32 to vector<16x128xf32>
    %48 = arith.maximumf %46, %47 : vector<16x128xf32>
    %c0_47 = arith.constant 0 : index
    %c0_48 = arith.constant 0 : index
    %49 = vector.load %arg4[%c0_47, %c0_48] : memref<16x128xf32, #tpu.memory_space<vmem>>, vector<16x128xf32>
    tpu.vector_store %arg4[%c0_47, %c0_48], %48 {strides = array<i32>} : memref<16x128xf32, #tpu.memory_space<vmem>>, vector<16x128xf32>,
    return
  }
  func.func @transform_0(%arg0: i32) -> (i32, i32) {
    %c0_i32 = arith.constant 0 : i32
    %c0_i32_0 = arith.constant 0 : i32
    %c0_i32_1 = arith.constant 0 : i32
    return %c0_i32, %c0_i32_0 : i32, i32
  }
  func.func @transform_1(%arg0: i32) -> (i32, i32, i32) {
    %c0_i32 = arith.constant 0 : i32
    %c0_i32_0 = arith.constant 0 : i32
    %c0_i32_1 = arith.constant 0 : i32
    return %c0_i32, %c0_i32_0, %arg0 : i32, i32, i32
  }
  func.func @transform_2(%arg0: i32) -> (i32, i32) {
    %c0_i32 = arith.constant 0 : i32
    %c0_i32_0 = arith.constant 0 : i32
    %c0_i32_1 = arith.constant 0 : i32
    return %c0_i32, %c0_i32_0 : i32, i32
  }
  func.func @transform_3(%arg0: i32) -> (i32, i32) {
    %c0_i32 = arith.constant 0 : i32
    %c0_i32_0 = arith.constant 0 : i32
    return %c0_i32, %arg0 : i32, i32
  }
}

module attributes {stable_mosaic.version = 11 : i64} {
  func.func @_conv_bn_relu_pool_kernel(%arg0: i32, %arg1: memref<64x256xbf16, #tpu.memory_space<vmem>>, %arg2: memref<9x256x128xbf16, #tpu.memory_space<vmem>>, %arg3: memref<64x1xf32, #tpu.memory_space<vmem>>, %arg4: memref<64x128xf32, #tpu.memory_space<vmem>>) attributes {dimension_semantics = [#tpu.dimension_semantics<parallel>], iteration_bounds = array<i64: 1>, scalar_prefetch = 0 : i64, scratch_operands = 0 : i64, tpu.core_type = #tpu.core_type<tc>, window_params = [{pipeline_mode = #tpu.pipeline_mode<synchronous>, transform_indices = @transform_0, window_bounds = array<i64: 64, 256>}, {transform_indices = @transform_1, window_bounds = array<i64: 9, 256, 128>}, {pipeline_mode = #tpu.pipeline_mode<synchronous>, transform_indices = @transform_2, window_bounds = array<i64: 64, 1>}, {transform_indices = @transform_3, window_bounds = array<i64: 64, 128>}]} {
    %c0 = arith.constant 0 : index
    %c0_0 = arith.constant 0 : index
    %0 = vector.load %arg1[%c0, %c0_0] : memref<64x256xbf16, #tpu.memory_space<vmem>>, vector<64x256xbf16>
    %c0_1 = arith.constant 0 : index
    %c0_2 = arith.constant 0 : index
    %c0_3 = arith.constant 0 : index
    %1 = vector.load %arg2[%c0_1, %c0_2, %c0_3] : memref<9x256x128xbf16, #tpu.memory_space<vmem>>, vector<1x256x128xbf16>
    %2 = vector.shape_cast %1 : vector<1x256x128xbf16> to vector<256x128xbf16>
    %cst = arith.constant dense<0.000000e+00> : vector<64x128xf32>
    %3 = tpu.matmul %0, %2, %cst {dimension_numbers = #tpu.dot_dimension_numbers<[1], [0], [0], [1], [0, 0, 1, 1], [], []>} : vector<64x256xbf16>, vector<256x128xbf16>, vector<64x128xf32> -> vector<64x128xf32>
    %c0_4 = arith.constant 0 : index
    %c0_5 = arith.constant 0 : index
    %4 = vector.load %arg1[%c0_4, %c0_5] : memref<64x256xbf16, #tpu.memory_space<vmem>>, vector<64x256xbf16>
    %c1 = arith.constant 1 : index
    %c0_6 = arith.constant 0 : index
    %c0_7 = arith.constant 0 : index
    %5 = vector.load %arg2[%c1, %c0_6, %c0_7] : memref<9x256x128xbf16, #tpu.memory_space<vmem>>, vector<1x256x128xbf16>
    %6 = vector.shape_cast %5 : vector<1x256x128xbf16> to vector<256x128xbf16>
    %cst_8 = arith.constant dense<0.000000e+00> : vector<64x128xf32>
    %7 = tpu.matmul %4, %6, %cst_8 {dimension_numbers = #tpu.dot_dimension_numbers<[1], [0], [0], [1], [0, 0, 1, 1], [], []>} : vector<64x256xbf16>, vector<256x128xbf16>, vector<64x128xf32> -> vector<64x128xf32>
    %8 = arith.maximumf %3, %7 : vector<64x128xf32>
    %c0_9 = arith.constant 0 : index
    %c0_10 = arith.constant 0 : index
    %9 = vector.load %arg1[%c0_9, %c0_10] : memref<64x256xbf16, #tpu.memory_space<vmem>>, vector<64x256xbf16>
    %c2 = arith.constant 2 : index
    %c0_11 = arith.constant 0 : index
    %c0_12 = arith.constant 0 : index
    %10 = vector.load %arg2[%c2, %c0_11, %c0_12] : memref<9x256x128xbf16, #tpu.memory_space<vmem>>, vector<1x256x128xbf16>
    %11 = vector.shape_cast %10 : vector<1x256x128xbf16> to vector<256x128xbf16>
    %cst_13 = arith.constant dense<0.000000e+00> : vector<64x128xf32>
    %12 = tpu.matmul %9, %11, %cst_13 {dimension_numbers = #tpu.dot_dimension_numbers<[1], [0], [0], [1], [0, 0, 1, 1], [], []>} : vector<64x256xbf16>, vector<256x128xbf16>, vector<64x128xf32> -> vector<64x128xf32>
    %13 = arith.maximumf %8, %12 : vector<64x128xf32>
    %c0_14 = arith.constant 0 : index
    %c0_15 = arith.constant 0 : index
    %14 = vector.load %arg1[%c0_14, %c0_15] : memref<64x256xbf16, #tpu.memory_space<vmem>>, vector<64x256xbf16>
    %c3 = arith.constant 3 : index
    %c0_16 = arith.constant 0 : index
    %c0_17 = arith.constant 0 : index
    %15 = vector.load %arg2[%c3, %c0_16, %c0_17] : memref<9x256x128xbf16, #tpu.memory_space<vmem>>, vector<1x256x128xbf16>
    %16 = vector.shape_cast %15 : vector<1x256x128xbf16> to vector<256x128xbf16>
    %cst_18 = arith.constant dense<0.000000e+00> : vector<64x128xf32>
    %17 = tpu.matmul %14, %16, %cst_18 {dimension_numbers = #tpu.dot_dimension_numbers<[1], [0], [0], [1], [0, 0, 1, 1], [], []>} : vector<64x256xbf16>, vector<256x128xbf16>, vector<64x128xf32> -> vector<64x128xf32>
    %18 = arith.maximumf %13, %17 : vector<64x128xf32>
    %c0_19 = arith.constant 0 : index
    %c0_20 = arith.constant 0 : index
    %19 = vector.load %arg1[%c0_19, %c0_20] : memref<64x256xbf16, #tpu.memory_space<vmem>>, vector<64x256xbf16>
    %c4 = arith.constant 4 : index
    %c0_21 = arith.constant 0 : index
    %c0_22 = arith.constant 0 : index
    %20 = vector.load %arg2[%c4, %c0_21, %c0_22] : memref<9x256x128xbf16, #tpu.memory_space<vmem>>, vector<1x256x128xbf16>
    %21 = vector.shape_cast %20 : vector<1x256x128xbf16> to vector<256x128xbf16>
    %cst_23 = arith.constant dense<0.000000e+00> : vector<64x128xf32>
    %22 = tpu.matmul %19, %21, %cst_23 {dimension_numbers = #tpu.dot_dimension_numbers<[1], [0], [0], [1], [0, 0, 1, 1], [], []>} : vector<64x256xbf16>, vector<256x128xbf16>, vector<64x128xf32> -> vector<64x128xf32>
    %23 = arith.maximumf %18, %22 : vector<64x128xf32>
    %c0_24 = arith.constant 0 : index
    %c0_25 = arith.constant 0 : index
    %24 = vector.load %arg1[%c0_24, %c0_25] : memref<64x256xbf16, #tpu.memory_space<vmem>>, vector<64x256xbf16>
    %c5 = arith.constant 5 : index
    %c0_26 = arith.constant 0 : index
    %c0_27 = arith.constant 0 : index
    %25 = vector.load %arg2[%c5, %c0_26, %c0_27] : memref<9x256x128xbf16, #tpu.memory_space<vmem>>, vector<1x256x128xbf16>
    %26 = vector.shape_cast %25 : vector<1x256x128xbf16> to vector<256x128xbf16>
    %cst_28 = arith.constant dense<0.000000e+00> : vector<64x128xf32>
    %27 = tpu.matmul %24, %26, %cst_28 {dimension_numbers = #tpu.dot_dimension_numbers<[1], [0], [0], [1], [0, 0, 1, 1], [], []>} : vector<64x256xbf16>, vector<256x128xbf16>, vector<64x128xf32> -> vector<64x128xf32>
    %28 = arith.maximumf %23, %27 : vector<64x128xf32>
    %c0_29 = arith.constant 0 : index
    %c0_30 = arith.constant 0 : index
    %29 = vector.load %arg1[%c0_29, %c0_30] : memref<64x256xbf16, #tpu.memory_space<vmem>>, vector<64x256xbf16>
    %c6 = arith.constant 6 : index
    %c0_31 = arith.constant 0 : index
    %c0_32 = arith.constant 0 : index
    %30 = vector.load %arg2[%c6, %c0_31, %c0_32] : memref<9x256x128xbf16, #tpu.memory_space<vmem>>, vector<1x256x128xbf16>
    %31 = vector.shape_cast %30 : vector<1x256x128xbf16> to vector<256x128xbf16>
    %cst_33 = arith.constant dense<0.000000e+00> : vector<64x128xf32>
    %32 = tpu.matmul %29, %31, %cst_33 {dimension_numbers = #tpu.dot_dimension_numbers<[1], [0], [0], [1], [0, 0, 1, 1], [], []>} : vector<64x256xbf16>, vector<256x128xbf16>, vector<64x128xf32> -> vector<64x128xf32>
    %33 = arith.maximumf %28, %32 : vector<64x128xf32>
    %c0_34 = arith.constant 0 : index
    %c0_35 = arith.constant 0 : index
    %34 = vector.load %arg1[%c0_34, %c0_35] : memref<64x256xbf16, #tpu.memory_space<vmem>>, vector<64x256xbf16>
    %c7 = arith.constant 7 : index
    %c0_36 = arith.constant 0 : index
    %c0_37 = arith.constant 0 : index
    %35 = vector.load %arg2[%c7, %c0_36, %c0_37] : memref<9x256x128xbf16, #tpu.memory_space<vmem>>, vector<1x256x128xbf16>
    %36 = vector.shape_cast %35 : vector<1x256x128xbf16> to vector<256x128xbf16>
    %cst_38 = arith.constant dense<0.000000e+00> : vector<64x128xf32>
    %37 = tpu.matmul %34, %36, %cst_38 {dimension_numbers = #tpu.dot_dimension_numbers<[1], [0], [0], [1], [0, 0, 1, 1], [], []>} : vector<64x256xbf16>, vector<256x128xbf16>, vector<64x128xf32> -> vector<64x128xf32>
    %38 = arith.maximumf %33, %37 : vector<64x128xf32>
    %c0_39 = arith.constant 0 : index
    %c0_40 = arith.constant 0 : index
    %39 = vector.load %arg1[%c0_39, %c0_40] : memref<64x256xbf16, #tpu.memory_space<vmem>>, vector<64x256xbf16>
    %c8 = arith.constant 8 : index
    %c0_41 = arith.constant 0 : index
    %c0_42 = arith.constant 0 : index
    %40 = vector.load %arg2[%c8, %c0_41, %c0_42] : memref<9x256x128xbf16, #tpu.memory_space<vmem>>, vector<1x256x128xbf16>
    %41 = vector.shape_cast %40 : vector<1x256x128xbf16> to vector<256x128xbf16>
    %cst_43 = arith.constant dense<0.000000e+00> : vector<64x128xf32>
    %42 = tpu.matmul %39, %41, %cst_43 {dimension_numbers = #tpu.dot_dimension_numbers<[1], [0], [0], [1], [0, 0, 1, 1], [], []>} : vector<64x256xbf16>, vector<256x128xbf16>, vector<64x128xf32> -> vector<64x128xf32>
    %43 = arith.maximumf %38, %42 : vector<64x128xf32>
    %c0_44 = arith.constant 0 : index
    %c0_45 = arith.constant 0 : index
    %44 = vector.load %arg3[%c0_44, %c0_45] : memref<64x1xf32, #tpu.memory_space<vmem>>, vector<64x1xf32>
    %45 = vector.broadcast %44 : vector<64x1xf32> to vector<64x128xf32>
    %46 = arith.addf %43, %45 : vector<64x128xf32>
    %cst_46 = arith.constant 0.000000e+00 : f32
    %47 = vector.broadcast %cst_46 : f32 to vector<64x128xf32>
    %48 = arith.maximumf %46, %47 : vector<64x128xf32>
    %c0_47 = arith.constant 0 : index
    %c0_48 = arith.constant 0 : index
    %49 = vector.load %arg4[%c0_47, %c0_48] : memref<64x128xf32, #tpu.memory_space<vmem>>, vector<64x128xf32>
    tpu.vector_store %arg4[%c0_47, %c0_48], %48 {strides = array<i32>} : memref<64x128xf32, #tpu.memory_space<vmem>>, vector<64x128xf32>,
    return
  }
  func.func @transform_0(%arg0: i32) -> (i32, i32) {
    %c0_i32 = arith.constant 0 : i32
    %c0_i32_0 = arith.constant 0 : i32
    %c0_i32_1 = arith.constant 0 : i32
    return %c0_i32, %c0_i32_0 : i32, i32
  }
  func.func @transform_1(%arg0: i32) -> (i32, i32, i32) {
    %c0_i32 = arith.constant 0 : i32
    %c0_i32_0 = arith.constant 0 : i32
    %c0_i32_1 = arith.constant 0 : i32
    return %c0_i32, %c0_i32_0, %arg0 : i32, i32, i32
  }
  func.func @transform_2(%arg0: i32) -> (i32, i32) {
    %c0_i32 = arith.constant 0 : i32
    %c0_i32_0 = arith.constant 0 : i32
    %c0_i32_1 = arith.constant 0 : i32
    return %c0_i32, %c0_i32_0 : i32, i32
  }
  func.func @transform_3(%arg0: i32) -> (i32, i32) {
    %c0_i32 = arith.constant 0 : i32
    %c0_i32_0 = arith.constant 0 : i32
    return %c0_i32, %arg0 : i32, i32
  }
}

module attributes {stable_mosaic.version = 11 : i64} {
  func.func @_fc_tail_kernel(%arg0: i32, %arg1: memref<8x256xf32, #tpu.memory_space<vmem>>, %arg2: memref<256x16xf32, #tpu.memory_space<vmem>>, %arg3: memref<1x16xf32, #tpu.memory_space<vmem>>, %arg4: memref<16x128xf32, #tpu.memory_space<vmem>>, %arg5: memref<1x128xf32, #tpu.memory_space<vmem>>, %arg6: memref<128x128xf32, #tpu.memory_space<vmem>>, %arg7: memref<1x128xf32, #tpu.memory_space<vmem>>, %arg8: memref<128x128xf32, #tpu.memory_space<vmem>>, %arg9: memref<1x128xf32, #tpu.memory_space<vmem>>, %arg10: memref<128x512xf32, #tpu.memory_space<vmem>>, %arg11: memref<1x512xf32, #tpu.memory_space<vmem>>, %arg12: memref<8x512xf32, #tpu.memory_space<vmem>>) attributes {dimension_semantics = [#tpu.dimension_semantics<parallel>], iteration_bounds = array<i64: 2>, scalar_prefetch = 0 : i64, scratch_operands = 0 : i64, tpu.core_type = #tpu.core_type<tc>, window_params = [{pipeline_mode = #tpu.pipeline_mode<synchronous>, transform_indices = @transform_0, window_bounds = array<i64: 8, 256>}, {pipeline_mode = #tpu.pipeline_mode<synchronous>, transform_indices = @transform_1, window_bounds = array<i64: 256, 16>}, {pipeline_mode = #tpu.pipeline_mode<synchronous>, transform_indices = @transform_2, window_bounds = array<i64: 1, 16>}, {pipeline_mode = #tpu.pipeline_mode<synchronous>, transform_indices = @transform_3, window_bounds = array<i64: 16, 128>}, {pipeline_mode = #tpu.pipeline_mode<synchronous>, transform_indices = @transform_4, window_bounds = array<i64: 1, 128>}, {pipeline_mode = #tpu.pipeline_mode<synchronous>, transform_indices = @transform_5, window_bounds = array<i64: 128, 128>}, {pipeline_mode = #tpu.pipeline_mode<synchronous>, transform_indices = @transform_6, window_bounds = array<i64: 1, 128>}, {pipeline_mode = #tpu.pipeline_mode<synchronous>, transform_indices = @transform_7, window_bounds = array<i64: 128, 128>}, {pipeline_mode = #tpu.pipeline_mode<synchronous>, transform_indices = @transform_8, window_bounds = array<i64: 1, 128>}, {transform_indices = @transform_9, window_bounds = array<i64: 128, 512>}, {transform_indices = @transform_10, window_bounds = array<i64: 1, 512>}, {transform_indices = @transform_11, window_bounds = array<i64: 8, 512>}]} {
    %c0 = arith.constant 0 : index
    %c0_0 = arith.constant 0 : index
    %0 = vector.load %arg1[%c0, %c0_0] : memref<8x256xf32, #tpu.memory_space<vmem>>, vector<8x256xf32>
    %c0_1 = arith.constant 0 : index
    %c0_2 = arith.constant 0 : index
    %1 = vector.load %arg2[%c0_1, %c0_2] : memref<256x16xf32, #tpu.memory_space<vmem>>, vector<256x16xf32>
    %cst = arith.constant dense<0.000000e+00> : vector<8x16xf32>
    %2 = tpu.matmul %0, %1, %cst {dimension_numbers = #tpu.dot_dimension_numbers<[1], [0], [0], [1], [0, 0, 1, 1], [], []>} : vector<8x256xf32>, vector<256x16xf32>, vector<8x16xf32> -> vector<8x16xf32>
    %c0_3 = arith.constant 0 : index
    %c0_4 = arith.constant 0 : index
    %3 = vector.load %arg3[%c0_3, %c0_4] : memref<1x16xf32, #tpu.memory_space<vmem>>, vector<1x16xf32>
    %4 = vector.broadcast %3 : vector<1x16xf32> to vector<8x16xf32>
    %5 = arith.addf %2, %4 : vector<8x16xf32>
    %c0_5 = arith.constant 0 : index
    %c0_6 = arith.constant 0 : index
    %6 = vector.load %arg4[%c0_5, %c0_6] : memref<16x128xf32, #tpu.memory_space<vmem>>, vector<16x128xf32>
    %cst_7 = arith.constant dense<0.000000e+00> : vector<8x128xf32>
    %7 = tpu.matmul %5, %6, %cst_7 {dimension_numbers = #tpu.dot_dimension_numbers<[1], [0], [0], [1], [0, 0, 1, 1], [], []>} : vector<8x16xf32>, vector<16x128xf32>, vector<8x128xf32> -> vector<8x128xf32>
    %c0_8 = arith.constant 0 : index
    %c0_9 = arith.constant 0 : index
    %8 = vector.load %arg5[%c0_8, %c0_9] : memref<1x128xf32, #tpu.memory_space<vmem>>, vector<1x128xf32>
    %9 = vector.broadcast %8 : vector<1x128xf32> to vector<8x128xf32>
    %10 = arith.addf %7, %9 : vector<8x128xf32>
    %cst_10 = arith.constant 0.000000e+00 : f32
    %11 = vector.broadcast %cst_10 : f32 to vector<8x128xf32>
    %12 = arith.maximumf %10, %11 : vector<8x128xf32>
    %c0_11 = arith.constant 0 : index
    %c0_12 = arith.constant 0 : index
    %13 = vector.load %arg6[%c0_11, %c0_12] : memref<128x128xf32, #tpu.memory_space<vmem>>, vector<128x128xf32>
    %cst_13 = arith.constant dense<0.000000e+00> : vector<8x128xf32>
    %14 = tpu.matmul %12, %13, %cst_13 {dimension_numbers = #tpu.dot_dimension_numbers<[1], [0], [0], [1], [0, 0, 1, 1], [], []>} : vector<8x128xf32>, vector<128x128xf32>, vector<8x128xf32> -> vector<8x128xf32>
    %c0_14 = arith.constant 0 : index
    %c0_15 = arith.constant 0 : index
    %15 = vector.load %arg7[%c0_14, %c0_15] : memref<1x128xf32, #tpu.memory_space<vmem>>, vector<1x128xf32>
    %16 = vector.broadcast %15 : vector<1x128xf32> to vector<8x128xf32>
    %17 = arith.addf %14, %16 : vector<8x128xf32>
    %cst_16 = arith.constant 0.000000e+00 : f32
    %18 = vector.broadcast %cst_16 : f32 to vector<8x128xf32>
    %19 = arith.maximumf %17, %18 : vector<8x128xf32>
    %c0_17 = arith.constant 0 : index
    %c0_18 = arith.constant 0 : index
    %20 = vector.load %arg8[%c0_17, %c0_18] : memref<128x128xf32, #tpu.memory_space<vmem>>, vector<128x128xf32>
    %cst_19 = arith.constant dense<0.000000e+00> : vector<8x128xf32>
    %21 = tpu.matmul %19, %20, %cst_19 {dimension_numbers = #tpu.dot_dimension_numbers<[1], [0], [0], [1], [0, 0, 1, 1], [], []>} : vector<8x128xf32>, vector<128x128xf32>, vector<8x128xf32> -> vector<8x128xf32>
    %c0_20 = arith.constant 0 : index
    %c0_21 = arith.constant 0 : index
    %22 = vector.load %arg9[%c0_20, %c0_21] : memref<1x128xf32, #tpu.memory_space<vmem>>, vector<1x128xf32>
    %23 = vector.broadcast %22 : vector<1x128xf32> to vector<8x128xf32>
    %24 = arith.addf %21, %23 : vector<8x128xf32>
    %cst_22 = arith.constant 0.000000e+00 : f32
    %25 = vector.broadcast %cst_22 : f32 to vector<8x128xf32>
    %26 = arith.maximumf %24, %25 : vector<8x128xf32>
    %c0_23 = arith.constant 0 : index
    %c0_24 = arith.constant 0 : index
    %27 = vector.load %arg10[%c0_23, %c0_24] : memref<128x512xf32, #tpu.memory_space<vmem>>, vector<128x512xf32>
    %cst_25 = arith.constant dense<0.000000e+00> : vector<8x512xf32>
    %28 = tpu.matmul %26, %27, %cst_25 {dimension_numbers = #tpu.dot_dimension_numbers<[1], [0], [0], [1], [0, 0, 1, 1], [], []>} : vector<8x128xf32>, vector<128x512xf32>, vector<8x512xf32> -> vector<8x512xf32>
    %c0_26 = arith.constant 0 : index
    %c0_27 = arith.constant 0 : index
    %29 = vector.load %arg11[%c0_26, %c0_27] : memref<1x512xf32, #tpu.memory_space<vmem>>, vector<1x512xf32>
    %30 = vector.broadcast %29 : vector<1x512xf32> to vector<8x512xf32>
    %31 = arith.addf %28, %30 : vector<8x512xf32>
    %c0_28 = arith.constant 0 : index
    %c0_29 = arith.constant 0 : index
    %32 = vector.load %arg12[%c0_28, %c0_29] : memref<8x512xf32, #tpu.memory_space<vmem>>, vector<8x512xf32>
    tpu.vector_store %arg12[%c0_28, %c0_29], %31 {strides = array<i32>} : memref<8x512xf32, #tpu.memory_space<vmem>>, vector<8x512xf32>,
    return
  }
  func.func @transform_0(%arg0: i32) -> (i32, i32) {
    %c0_i32 = arith.constant 0 : i32
    %c0_i32_0 = arith.constant 0 : i32
    %c0_i32_1 = arith.constant 0 : i32
    return %c0_i32, %c0_i32_0 : i32, i32
  }
  func.func @transform_1(%arg0: i32) -> (i32, i32) {
    %c0_i32 = arith.constant 0 : i32
    %c0_i32_0 = arith.constant 0 : i32
    %c0_i32_1 = arith.constant 0 : i32
    return %c0_i32, %c0_i32_0 : i32, i32
  }
  func.func @transform_2(%arg0: i32) -> (i32, i32) {
    %c0_i32 = arith.constant 0 : i32
    %c0_i32_0 = arith.constant 0 : i32
    %c0_i32_1 = arith.constant 0 : i32
    return %c0_i32, %c0_i32_0 : i32, i32
  }
  func.func @transform_3(%arg0: i32) -> (i32, i32) {
    %c0_i32 = arith.constant 0 : i32
    %c0_i32_0 = arith.constant 0 : i32
    %c0_i32_1 = arith.constant 0 : i32
    return %c0_i32, %c0_i32_0 : i32, i32
  }
  func.func @transform_4(%arg0: i32) -> (i32, i32) {
    %c0_i32 = arith.constant 0 : i32
    %c0_i32_0 = arith.constant 0 : i32
    %c0_i32_1 = arith.constant 0 : i32
    return %c0_i32, %c0_i32_0 : i32, i32
  }
  func.func @transform_5(%arg0: i32) -> (i32, i32) {
    %c0_i32 = arith.constant 0 : i32
    %c0_i32_0 = arith.constant 0 : i32
    %c0_i32_1 = arith.constant 0 : i32
    return %c0_i32, %c0_i32_0 : i32, i32
  }
  func.func @transform_6(%arg0: i32) -> (i32, i32) {
    %c0_i32 = arith.constant 0 : i32
    %c0_i32_0 = arith.constant 0 : i32
    %c0_i32_1 = arith.constant 0 : i32
    return %c0_i32, %c0_i32_0 : i32, i32
  }
  func.func @transform_7(%arg0: i32) -> (i32, i32) {
    %c0_i32 = arith.constant 0 : i32
    %c0_i32_0 = arith.constant 0 : i32
    %c0_i32_1 = arith.constant 0 : i32
    return %c0_i32, %c0_i32_0 : i32, i32
  }
  func.func @transform_8(%arg0: i32) -> (i32, i32) {
    %c0_i32 = arith.constant 0 : i32
    %c0_i32_0 = arith.constant 0 : i32
    %c0_i32_1 = arith.constant 0 : i32
    return %c0_i32, %c0_i32_0 : i32, i32
  }
  func.func @transform_9(%arg0: i32) -> (i32, i32) {
    %c0_i32 = arith.constant 0 : i32
    %c0_i32_0 = arith.constant 0 : i32
    return %c0_i32, %arg0 : i32, i32
  }
  func.func @transform_10(%arg0: i32) -> (i32, i32) {
    %c0_i32 = arith.constant 0 : i32
    %c0_i32_0 = arith.constant 0 : i32
    return %c0_i32, %arg0 : i32, i32
  }
  func.func @transform_11(%arg0: i32) -> (i32, i32) {
    %c0_i32 = arith.constant 0 : i32
    %c0_i32_0 = arith.constant 0 : i32
    return %c0_i32, %arg0 : i32, i32
  }
}

</mosaic_0001>

<llo_original>
// kernel: autoencoder_mlp_forward.4
$region0: #{autoencoder_mlp_forward.4}
  #allocation0 [shape = 'u32[]', space=smem, size = 0x4, offset = 0x4, fixed_abs, tag = 'smem constant byte address 0x4 - core index']
  #allocation1 [shape = 'u32[144,128]{1,0:T(1,128)}', space=vmem, size = 0x12000, scoped, tag = 'internal scratch']
  %s0 = inlined_call_operand.vmem [shape: bf16[4,16], index: 0, kind: input, shape index: {}]
  %s1 = inlined_call_operand.vmem [shape: bf16[9,16,1024], index: 1, kind: input, shape index: {}]
  %s2 = inlined_call_operand.vmem [shape: f32[4,1], index: 2, kind: input, shape index: {}]
  %s3 = inlined_call_operand.vmem [shape: f32[4,1024], index: 3, kind: output, shape index: {}]
  %s4 = sld [smem:[#allocation0]]
  $region68: #{autoencoder_mlp_forward.4} parent=0
    _
  %s6 = ssub.s32 1, %s4
  %s7 = scalar_select 0, %s6, %s4
  $region1: #{autoencoder_mlp_forward.4} parent=0
    #allocation2 [shape = 'u8[294912]{0}', space=vmem, size = 0x48000, scoped, tag = 'input window, operand 1']
    loop: start=0, step=1, limit=4
    $region2: #{autoencoder_mlp_forward.4} parent=1 // loop_pre_header
      _
    $region3: #{autoencoder_mlp_forward.4} parent=1 // loop_header
      %s9 = sphi 0, %s13
      %p10 = scmp.ge.s32.totalorder %s9, 4
      %s17 = sphi 0, %s17
      %s19 = sphi 0, %s17
      %s20 = sphi 0, %s19
      %s34 = sphi 0, %s20
      %s40 = sphi 0, %s42
      %s43 = sphi 0, %s40
      %s44 = sphi 0, %s43
      %s60 = sphi 0, %s44
      %s64 = sphi 0, %s64
      %s66 = sphi 0, %s64
      %s67 = sphi 0, %s66
      %s81 = sphi 0, %s67
      %s87 = sphi 0, %s89
      %s90 = sphi 0, %s87
      %s91 = sphi 0, %s90
      %s107 = sphi 0, %s91
    $region4: #{autoencoder_mlp_forward.4} parent=1 // loop_header_branch
      %12 = sbr.rel (%p10) target = $region8
    $region5: #{autoencoder_mlp_forward.4} parent=1 // loop_body
      %s14 = ssub.s32 %s9, 1
      %s15 = ssub.s32 %s9, 2
      %s16 = sadd.s32 %s9, 1
      %s18 = sadd.s32 %s17, 1
      %p21 = scmp.eq.s32.totalorder %s9, 1
      %p22 = scmp.ne.s32.totalorder %s17, %s19
      %p23 = scmp.eq.s32.totalorder %s9, 0
      %p24 = por %p22, %p23
      %p25 = scmp.ne.s32.totalorder %s17, %s19
      %p26 = scmp.eq.s32.totalorder %s14, 1
      %p27 = por %p25, %p26
      %p28 = scmp.ne.s32.totalorder %s19, %s20
      %p29 = scmp.eq.s32.totalorder %s14, 0
      %p30 = por %p28, %p29
      %p31 = scmp.ne.s32.totalorder %s19, %s20
      %p32 = scmp.eq.s32.totalorder %s15, 1
      %p33 = por %p31, %p32
      %p35 = scmp.ne.s32.totalorder %s20, %s34
      %p36 = scmp.eq.s32.totalorder %s15, 0
      %p37 = por %p35, %p36
      %s38 = ssub.s32 %s9, %s16
      %p39 = scmp.eq.s32.totalorder %s38, 0
      %s41 = sadd.s32 %s40, 1
      %s42 = scalar_select %p39, %s40, %s41
      %p45 = pneg %p39
      %p46 = scmp.eq.s32.totalorder %s9, 1
      %p47 = por %p45, %p46
      %p48 = scmp.ne.s32.totalorder %s40, %s43
      %p49 = scmp.eq.s32.totalorder %s9, 0
      %p50 = por %p48, %p49
      %p51 = scmp.ne.s32.totalorder %s40, %s43
      %p52 = scmp.eq.s32.totalorder %s14, 1
      %p53 = por %p51, %p52
      %p54 = scmp.ne.s32.totalorder %s43, %s44
      %p55 = scmp.eq.s32.totalorder %s14, 0
      %p56 = por %p54, %p55
      %p57 = scmp.ne.s32.totalorder %s43, %s44
      %p58 = scmp.eq.s32.totalorder %s15, 1
      %p59 = por %p57, %p58
      %p61 = scmp.ne.s32.totalorder %s44, %s60
      %p62 = scmp.eq.s32.totalorder %s15, 0
      %p63 = por %p61, %p62
      %s65 = sadd.s32 %s64, 1
      %p68 = scmp.eq.s32.totalorder %s9, 1
      %p69 = scmp.ne.s32.totalorder %s64, %s66
      %p70 = scmp.eq.s32.totalorder %s9, 0
      %p71 = por %p69, %p70
      %p72 = scmp.ne.s32.totalorder %s64, %s66
      %p73 = scmp.eq.s32.totalorder %s14, 1
      %p74 = por %p72, %p73
      %p75 = scmp.ne.s32.totalorder %s66, %s67
      %p76 = scmp.eq.s32.totalorder %s14, 0
      %p77 = por %p75, %p76
      %p78 = scmp.ne.s32.totalorder %s66, %s67
      %p79 = scmp.eq.s32.totalorder %s15, 1
      %p80 = por %p78, %p79
      %p82 = scmp.ne.s32.totalorder %s67, %s81
      %p83 = scmp.eq.s32.totalorder %s15, 0
      %p84 = por %p82, %p83
      %s85 = ssub.s32 %s9, %s16
      %p86 = scmp.eq.s32.totalorder %s85, 0
      %s88 = sadd.s32 %s87, 1
      %s89 = scalar_select %p86, %s87, %s88
      %p92 = pneg %p86
      %p93 = scmp.eq.s32.totalorder %s9, 1
      %p94 = por %p92, %p93
      %p95 = scmp.ne.s32.totalorder %s87, %s90
      %p96 = scmp.eq.s32.totalorder %s9, 0
      %p97 = por %p95, %p96
      %p98 = scmp.ne.s32.totalorder %s87, %s90
      %p99 = scmp.eq.s32.totalorder %s14, 1
      %p100 = por %p98, %p99
      %p101 = scmp.ne.s32.totalorder %s90, %s91
      %p102 = scmp.eq.s32.totalorder %s14, 0
      %p103 = por %p101, %p102
      %p104 = scmp.ne.s32.totalorder %s90, %s91
      %p105 = scmp.eq.s32.totalorder %s15, 1
      %p106 = por %p104, %p105
      %p108 = scmp.ne.s32.totalorder %s91, %s107
      %p109 = scmp.eq.s32.totalorder %s15, 0
      %p110 = por %p108, %p109
      %p111 = scmp.le.s32.totalorder 1, %s9
      %p112 = scmp.lt.s32.totalorder %s9, 3
      %p113 = pnand %p111, %p112
      %p114 = pneg %p113
      // Predicated region
      $region9: #{autoencoder_mlp_forward.4} parent=5 // pred_check
        _
      $region10: #{autoencoder_mlp_forward.4} parent=5 // pred_check_branch
        %116 = sbr.rel (%p113) target = $region12
      $region11: #{autoencoder_mlp_forward.4} parent=5 // pred_region
        %s117 = ssub.s32 %s9, 1
        // Predicated region
        $region13: #{autoencoder_mlp_forward.4} parent=11 // pred_check
          %p118 = pneg %p30
        $region14: #{autoencoder_mlp_forward.4} parent=11 // pred_check_branch
          %120 = sbr.rel (%p118) target = $region16
        $region15: #{autoencoder_mlp_forward.4} parent=11 // pred_region
          _
        $region16: #{autoencoder_mlp_forward.4} parent=11 // pred_fallthru
          _
        // Predicated region
        $region17: #{autoencoder_mlp_forward.4} parent=11 // pred_check
          %p121 = pneg %p77
        $region18: #{autoencoder_mlp_forward.4} parent=11 // pred_check_branch
          %123 = sbr.rel (%p121) target = $region20
        $region19: #{autoencoder_mlp_forward.4} parent=11 // pred_region
          _
        $region20: #{autoencoder_mlp_forward.4} parent=11 // pred_fallthru
          _
      $region12: #{autoencoder_mlp_forward.4} parent=5 // pred_fallthru
        _
      %p124 = scmp.lt.s32.totalorder %s9, 2
      // Predicated region
      $region21: #{autoencoder_mlp_forward.4} parent=5 // pred_check
        %p125 = pneg %p124
      $region22: #{autoencoder_mlp_forward.4} parent=5 // pred_check_branch
        %127 = sbr.rel (%p125) target = $region24
      $region23: #{autoencoder_mlp_forward.4} parent=5 // pred_region
        // Predicated region
        $region25: #{autoencoder_mlp_forward.4} parent=23 // pred_check
          %p128 = pneg %p50
        $region26: #{autoencoder_mlp_forward.4} parent=23 // pred_check_branch
          %130 = sbr.rel (%p128) target = $region28
        $region27: #{autoencoder_mlp_forward.4} parent=23 // pred_region
          %s131 = sand.u32 %s40, 1
          %s132 = sand.u32 %s40, 1
          %s133 = smul.addr %s132, 288
          %s134 = scalar_lea.vmem [#allocation2], %s133
          %s135 = smul.u32 4, %s9
          %s136 = smul.addr %s135, 4
          %s137 = scalar_lea.vmem %s1, %s136
          // Predicated region
          $region29: #{autoencoder_mlp_forward.4} parent=27 // pred_check
            _
          $region30: #{autoencoder_mlp_forward.4} parent=27 // pred_check_branch
            %139 = sbr.rel (0) target = $region32
          $region31: #{autoencoder_mlp_forward.4} parent=27 // pred_region
            // Predicated region
            $region33: #{autoencoder_mlp_forward.4} parent=31 // pred_check
              _
            $region34: #{autoencoder_mlp_forward.4} parent=31 // pred_check_branch
              %141 = sbr.rel (0) target = $region36
            $region35: #{autoencoder_mlp_forward.4} parent=31 // pred_region
              loop: start=0, step=1, limit=1
              $region37: #{autoencoder_mlp_forward.4} parent=35 // loop_pre_header
                _
              $region38: #{autoencoder_mlp_forward.4} parent=35 // loop_header
                %s143 = sphi 0, %s147
                %p144 = scmp.ge.s32.totalorder %s143, 1
                %s148 = sphi %s137, %s137
                %s149 = sphi %s134, %s134
              $region39: #{autoencoder_mlp_forward.4} parent=35 // loop_header_branch
                %146 = sbr.rel (%p144) target = $region43
              $region40: #{autoencoder_mlp_forward.4} parent=35 // loop_body
                %v150 = vld [vmem:[%s148] sm:$0xff]
                %151 = vst [vmem:[%s149] sm:$0xff] %v150
                %v152 = vld [vmem:[%s148 + $0x8] sm:$0xff]
                %153 = vst [vmem:[%s149 + $0x8] sm:$0xff] %v152
                %v154 = vld [vmem:[%s148 + $0x20] sm:$0xff]
                %155 = vst [vmem:[%s149 + $0x10] sm:$0xff] %v154
                %v156 = vld [vmem:[%s148 + $0x28] sm:$0xff]
                %157 = vst [vmem:[%s149 + $0x18] sm:$0xff] %v156
                %v158 = vld [vmem:[%s148 + $0x40] sm:$0xff]
                %159 = vst [vmem:[%s149 + $0x20] sm:$0xff] %v158
                %v160 = vld [vmem:[%s148 + $0x48] sm:$0xff]
                %161 = vst [vmem:[%s149 + $0x28] sm:$0xff] %v160
                %v162 = vld [vmem:[%s148 + $0x60] sm:$0xff]
                %163 = vst [vmem:[%s149 + $0x30] sm:$0xff] %v162
                %v164 = vld [vmem:[%s148 + $0x68] sm:$0xff]
                %165 = vst [vmem:[%s149 + $0x38] sm:$0xff] %v164
                %v166 = vld [vmem:[%s148 + $0x80] sm:$0xff]
                %167 = vst [vmem:[%s149 + $0x40] sm:$0xff] %v166
                %v168 = vld [vmem:[%s148 + $0x88] sm:$0xff]
                %169 = vst [vmem:[%s149 + $0x48] sm:$0xff] %v168
                %v170 = vld [vmem:[%s148 + $0xa0] sm:$0xff]
                %171 = vst [vmem:[%s149 + $0x50] sm:$0xff] %v170
                %v172 = vld [vmem:[%s148 + $0xa8] sm:$0xff]
                %173 = vst [vmem:[%s149 + $0x58] sm:$0xff] %v172
                %v174 = vld [vmem:[%s148 + $0xc0] sm:$0xff]
                %175 = vst [vmem:[%s149 + $0x60] sm:$0xff] %v174
                %v176 = vld [vmem:[%s148 + $0xc8] sm:$0xff]
                %177 = vst [vmem:[%s149 + $0x68] sm:$0xff] %v176
                %v178 = vld [vmem:[%s148 + $0xe0] sm:$0xff]
                %179 = vst [vmem:[%s149 + $0x70] sm:$0xff] %v178
                %v180 = vld [vmem:[%s148 + $0xe8] sm:$0xff]
                %181 = vst [vmem:[%s149 + $0x78] sm:$0xff] %v180
                %v182 = vld [vmem:[%s148 + $0x100] sm:$0xff]
                %183 = vst [vmem:[%s149 + $0x80] sm:$0xff] %v182
                %v184 = vld [vmem:[%s148 + $0x108] sm:$0xff]
                %185 = vst [vmem:[%s149 + $0x88] sm:$0xff] %v184
                %v186 = vld [vmem:[%s148 + $0x120] sm:$0xff]
                %187 = vst [vmem:[%s149 + $0x90] sm:$0xff] %v186
                %v188 = vld [vmem:[%s148 + $0x128] sm:$0xff]
                %189 = vst [vmem:[%s149 + $0x98] sm:$0xff] %v188
                %v190 = vld [vmem:[%s148 + $0x140] sm:$0xff]
                %191 = vst [vmem:[%s149 + $0xa0] sm:$0xff] %v190
                %v192 = vld [vmem:[%s148 + $0x148] sm:$0xff]
                %193 = vst [vmem:[%s149 + $0xa8] sm:$0xff] %v192
                %v194 = vld [vmem:[%s148 + $0x160] sm:$0xff]
                %195 = vst [vmem:[%s149 + $0xb0] sm:$0xff] %v194
                %v196 = vld [vmem:[%s148 + $0x168] sm:$0xff]
                %197 = vst [vmem:[%s149 + $0xb8] sm:$0xff] %v196
                %v198 = vld [vmem:[%s148 + $0x180] sm:$0xff]
                %199 = vst [vmem:[%s149 + $0xc0] sm:$0xff] %v198
                %v200 = vld [vmem:[%s148 + $0x188] sm:$0xff]
                %201 = vst [vmem:[%s149 + $0xc8] sm:$0xff] %v200
                %v202 = vld [vmem:[%s148 + $0x1a0] sm:$0xff]
                %203 = vst [vmem:[%s149 + $0xd0] sm:$0xff] %v202
                %v204 = vld [vmem:[%s148 + $0x1a8] sm:$0xff]
                %205 = vst [vmem:[%s149 + $0xd8] sm:$0xff] %v204
                %v206 = vld [vmem:[%s148 + $0x1c0] sm:$0xff]
                %207 = vst [vmem:[%s149 + $0xe0] sm:$0xff] %v206
                %v208 = vld [vmem:[%s148 + $0x1c8] sm:$0xff]
                %209 = vst [vmem:[%s149 + $0xe8] sm:$0xff] %v208
                %v210 = vld [vmem:[%s148 + $0x1e0] sm:$0xff]
                %211 = vst [vmem:[%s149 + $0xf0] sm:$0xff] %v210
                %v212 = vld [vmem:[%s148 + $0x1e8] sm:$0xff]
                %213 = vst [vmem:[%s149 + $0xf8] sm:$0xff] %v212
                %v214 = vld [vmem:[%s148 + $0x200] sm:$0xff]
                %215 = vst [vmem:[%s149 + $0x100] sm:$0xff] %v214
                %v216 = vld [vmem:[%s148 + $0x208] sm:$0xff]
                %217 = vst [vmem:[%s149 + $0x108] sm:$0xff] %v216
                %v218 = vld [vmem:[%s148 + $0x220] sm:$0xff]
                %219 = vst [vmem:[%s149 + $0x110] sm:$0xff] %v218
                %v220 = vld [vmem:[%s148 + $0x228] sm:$0xff]
                %221 = vst [vmem:[%s149 + $0x118] sm:$0xff] %v220
              $region41: #{autoencoder_mlp_forward.4} parent=35 // loop_footer
                %s147 = sadd.s32 1, %s143
              $region42: #{autoencoder_mlp_forward.4} parent=35 // loop_footer_branch
                %142 = sbr.rel target = $region38
              $region43: #{autoencoder_mlp_forward.4} parent=35 // loop_exit
                _
            $region36: #{autoencoder_mlp_forward.4} parent=31 // pred_fallthru
              _
            // Predicated region
            $region44: #{autoencoder_mlp_forward.4} parent=31 // pred_check
              _
            $region45: #{autoencoder_mlp_forward.4} parent=31 // pred_check_branch
              %223 = sbr.rel target = $region47
            $region46: #{autoencoder_mlp_forward.4} parent=31 // pred_region
              _
            $region47: #{autoencoder_mlp_forward.4} parent=31 // pred_fallthru
              _
          $region32: #{autoencoder_mlp_forward.4} parent=27 // pred_fallthru
            _
          %224 = vnop
        $region28: #{autoencoder_mlp_forward.4} parent=23 // pred_fallthru
          _
      $region24: #{autoencoder_mlp_forward.4} parent=5 // pred_fallthru
        _
      %p225 = scmp.le.s32.totalorder 1, %s9
      %p226 = scmp.lt.s32.totalorder %s9, 3
      %p227 = pnand %p225, %p226
      %p228 = pneg %p227
      // Predicated region
      $region48: #{autoencoder_mlp_forward.4} parent=5 // pred_check
        _
      $region49: #{autoencoder_mlp_forward.4} parent=5 // pred_check_branch
        %230 = sbr.rel (%p227) target = $region51
      $region50: #{autoencoder_mlp_forward.4} parent=5 // pred_region
        %s231 = ssub.s32 %s9, 1
        %s232 = sand.u32 %s43, 1
        %s233 = sand.u32 %s43, 1
        %s234 = smul.addr %s233, 288
        %s235 = scalar_lea.vmem [#allocation2], %s234
        // Predicated region
        $region52: #{autoencoder_mlp_forward.4} parent=50 // pred_check
          %p236 = pneg %p56
        $region53: #{autoencoder_mlp_forward.4} parent=50 // pred_check_branch
          %238 = sbr.rel (%p236) target = $region55
        $region54: #{autoencoder_mlp_forward.4} parent=50 // pred_region
          _
        $region55: #{autoencoder_mlp_forward.4} parent=50 // pred_fallthru
          _
        %p239 = pneg %p30
        %p240 = pneg %p27
        %s241 = sand.u32 %s43, 1
        %s242 = sand.u32 %s43, 1
        %s243 = smul.addr %s242, 288
        %s244 = scalar_lea.vmem [#allocation2], %s243
        %p245 = pneg %p56
        %p246 = pneg %p53
        %p247 = pneg %p77
        %p248 = pneg %p74
        %p249 = pneg %p103
        %p250 = pneg %p100
        %s251 = smul.u32 4, %s14
        %p252 = scmp.lt.s32.totalorder %s251, 7
        %s253 = scalar_select %p252, %s251, 7
        %s254 = smul.addr %s253, 4
        %s255 = scalar_lea.vmem %s3, %s254
        %s256 = smul.u32 4, %s14
        %s257 = smul.u32 4, %s14
        %p258 = scmp.lt.s32.totalorder %s257, 7
        %s259 = scalar_select %p258, %s257, 7
        %s260 = smul.addr %s259, 4
        %s261 = scalar_lea.vmem %s3, %s260
        %s262 = smul.u32 4, %s14
        %v264 = vld [vmem:[%s0] sm:$0x3]
        %v265 = vld [vmem:[%s235] sm:$0xff]
        %v266 = vld [vmem:[%s235 + $0x8] sm:$0xff]
        %v267 = vld [vmem:[%s235 + $0x10] sm:$0xff]
        %v268 = vld [vmem:[%s235 + $0x18] sm:$0xff]
        %v273 = vunpack.c.l.b16 %v265
        %v274 = vunpack.c.h.b16 %v265
        %v275 = vunpack.c.l.b16 %v266
        %v276 = vunpack.c.h.b16 %v266
        %v277 = vunpack.c.l.b16 %v267
        %v278 = vunpack.c.h.b16 %v267
        %v279 = vunpack.c.l.b16 %v268
        %v280 = vunpack.c.h.b16 %v268
        %v281 = vpack.c.b16 %v277, %v273
        %v282 = vpack.c.b16 %v278, %v274
        %v283 = vpack.c.b16 %v279, %v275
        %v284 = vpack.c.b16 %v280, %v276
        %vm289 = vcmask 130048
        %v291 = vsel %vm289, %v264, 0
        %293 = vmatprep.subr.bf16.mxu0 %v282
        %294 = vmatpush1.bf16.msra.mxu0 %v281
        %295 = vmatprep.subr.bf16.mxu0 0
        %296 = vmatpush1.bf16.msra.mxu0 0
        %297 = vmatprep.subr.bf16.mxu0 0
        %298 = vmatpush1.bf16.msra.mxu0 0
        %299 = vmatprep.subr.bf16.mxu0 0
        %300 = vmatpush1.bf16.msra.mxu0 0
        %301 = vmatprep.subr.bf16.mxu0 0
        %302 = vmatpush1.bf16.msra.mxu0 0
        %303 = vmatprep.subr.bf16.mxu0 0
        %304 = vmatpush1.bf16.msra.mxu0 0
        %305 = vmatprep.subr.bf16.mxu0 0
        %306 = vmatpush1.bf16.msra.mxu0 0
        %307 = vmatprep.subr.bf16.mxu0 0
        %308 = vmatpush1.bf16.msra.mxu0 0
        %309 = vmatprep.subr.bf16.mxu0 0
        %310 = vmatpush1.bf16.msra.mxu0 0
        %311 = vmatprep.subr.bf16.mxu0 0
        %312 = vmatpush1.bf16.msra.mxu0 0
        %313 = vmatprep.subr.bf16.mxu0 0
        %314 = vmatpush1.bf16.msra.mxu0 0
        %315 = vmatprep.subr.bf16.mxu0 0
        %316 = vmatpush1.bf16.msra.mxu0 0
        %317 = vmatprep.subr.bf16.mxu0 0
        %318 = vmatpush1.bf16.msra.mxu0 0
        %319 = vmatprep.subr.bf16.mxu0 0
        %320 = vmatpush1.bf16.msra.mxu0 0
        %321 = vmatprep.subr.bf16.mxu0 0
        %322 = vmatpush1.bf16.msra.mxu0 0
        %323 = vmatprep.subr.bf16.mxu0 0
        %324 = vmatpush1.bf16.msra.mxu0 0
        %325 = vmatprep.mubr.bf16.mxu0 0
        %326 = vmatmul.mubr.bf16.gmra.mrb[0].mxu0 %v291
        %v327 = vpop.f32.mrb[0].mxu0
        %v328 = vadd.f32 0.0, %v327
        %v329 = vpop.f32.mrb[0].mxu0
        %v330 = vadd.f32 0.0, %v329
        %v331 = vpop.f32.mrb[0].mxu0
        %v332 = vpop.f32.mrb[0].mxu0
        %333 = vdwg.mxu0
        %334 = vmatprep.subr.bf16.mxu0 %v284
        %335 = vmatpush1.bf16.msra.mxu0 %v283
        %336 = vmatprep.subr.bf16.mxu0 0
        %337 = vmatpush1.bf16.msra.mxu0 0
        %338 = vmatprep.subr.bf16.mxu0 0
        %339 = vmatpush1.bf16.msra.mxu0 0
        %340 = vmatprep.subr.bf16.mxu0 0
        %341 = vmatpush1.bf16.msra.mxu0 0
        %342 = vmatprep.subr.bf16.mxu0 0
        %343 = vmatpush1.bf16.msra.mxu0 0
        %344 = vmatprep.subr.bf16.mxu0 0
        %345 = vmatpush1.bf16.msra.mxu0 0
        %346 = vmatprep.subr.bf16.mxu0 0
        %347 = vmatpush1.bf16.msra.mxu0 0
        %348 = vmatprep.subr.bf16.mxu0 0
        %349 = vmatpush1.bf16.msra.mxu0 0
        %350 = vmatprep.subr.bf16.mxu0 0
        %351 = vmatpush1.bf16.msra.mxu0 0
        %352 = vmatprep.subr.bf16.mxu0 0
        %353 = vmatpush1.bf16.msra.mxu0 0
        %354 = vmatprep.subr.bf16.mxu0 0
        %355 = vmatpush1.bf16.msra.mxu0 0
        %356 = vmatprep.subr.bf16.mxu0 0
        %357 = vmatpush1.bf16.msra.mxu0 0
        %358 = vmatprep.subr.bf16.mxu0 0
        %359 = vmatpush1.bf16.msra.mxu0 0
        %360 = vmatprep.subr.bf16.mxu0 0
        %361 = vmatpush1.bf16.msra.mxu0 0
        %362 = vmatprep.subr.bf16.mxu0 0
        %363 = vmatpush1.bf16.msra.mxu0 0
        %364 = vmatprep.subr.bf16.mxu0 0
        %365 = vmatpush1.bf16.msra.mxu0 0
        %366 = vmatprep.mubr.bf16.mxu0 0
        %367 = vmatmul.mubr.bf16.gmra.mrb[0].mxu0 %v291
        %v368 = vpop.f32.mrb[0].mxu0
        %v369 = vadd.f32 0.0, %v368
        %v370 = vpop.f32.mrb[0].mxu0
        %v371 = vadd.f32 0.0, %v370
        %v372 = vpop.f32.mrb[0].mxu0
        %v373 = vpop.f32.mrb[0].mxu0
        %374 = vdwg.mxu0
        %s375 = scalar_lea.vmem %s235, 32 [#allocation2]
        %v376 = vld [vmem:[%s375] sm:$0xff]
        %v377 = vld [vmem:[%s375 + $0x8] sm:$0xff]
        %v378 = vld [vmem:[%s375 + $0x10] sm:$0xff]
        %v379 = vld [vmem:[%s375 + $0x18] sm:$0xff]
        %v384 = vunpack.c.l.b16 %v376
        %v385 = vunpack.c.h.b16 %v376
        %v386 = vunpack.c.l.b16 %v377
        %v387 = vunpack.c.h.b16 %v377
        %v388 = vunpack.c.l.b16 %v378
        %v389 = vunpack.c.h.b16 %v378
        %v390 = vunpack.c.l.b16 %v379
        %v391 = vunpack.c.h.b16 %v379
        %v392 = vpack.c.b16 %v388, %v384
        %v393 = vpack.c.b16 %v389, %v385
        %v394 = vpack.c.b16 %v390, %v386
        %v395 = vpack.c.b16 %v391, %v387
        %400 = vmatprep.subr.bf16.mxu0 %v393
        %401 = vmatpush1.bf16.msra.mxu0 %v392
        %402 = vmatprep.subr.bf16.mxu0 0
        %403 = vmatpush1.bf16.msra.mxu0 0
        %404 = vmatprep.subr.bf16.mxu0 0
        %405 = vmatpush1.bf16.msra.mxu0 0
        %406 = vmatprep.subr.bf16.mxu0 0
        %407 = vmatpush1.bf16.msra.mxu0 0
        %408 = vmatprep.subr.bf16.mxu0 0
        %409 = vmatpush1.bf16.msra.mxu0 0
        %410 = vmatprep.subr.bf16.mxu0 0
        %411 = vmatpush1.bf16.msra.mxu0 0
        %412 = vmatprep.subr.bf16.mxu0 0
        %413 = vmatpush1.bf16.msra.mxu0 0
        %414 = vmatprep.subr.bf16.mxu0 0
        %415 = vmatpush1.bf16.msra.mxu0 0
        %416 = vmatprep.subr.bf16.mxu0 0
        %417 = vmatpush1.bf16.msra.mxu0 0
        %418 = vmatprep.subr.bf16.mxu0 0
        %419 = vmatpush1.bf16.msra.mxu0 0
        %420 = vmatprep.subr.bf16.mxu0 0
        %421 = vmatpush1.bf16.msra.mxu0 0
        %422 = vmatprep.subr.bf16.mxu0 0
        %423 = vmatpush1.bf16.msra.mxu0 0
        %424 = vmatprep.subr.bf16.mxu0 0
        %425 = vmatpush1.bf16.msra.mxu0 0
        %426 = vmatprep.subr.bf16.mxu0 0
        %427 = vmatpush1.bf16.msra.mxu0 0
        %428 = vmatprep.subr.bf16.mxu0 0
        %429 = vmatpush1.bf16.msra.mxu0 0
        %430 = vmatprep.subr.bf16.mxu0 0
        %431 = vmatpush1.bf16.msra.mxu0 0
        %432 = vmatprep.mubr.bf16.mxu0 0
        %433 = vmatmul.mubr.bf16.gmra.mrb[0].mxu0 %v291
        %v434 = vpop.f32.mrb[0].mxu0
        %v435 = vadd.f32 0.0, %v434
        %v436 = vpop.f32.mrb[0].mxu0
        %v437 = vadd.f32 0.0, %v436
        %v438 = vpop.f32.mrb[0].mxu0
        %v439 = vpop.f32.mrb[0].mxu0
        %440 = vdwg.mxu0
        %441 = vmatprep.subr.bf16.mxu0 %v395
        %442 = vmatpush1.bf16.msra.mxu0 %v394
        %443 = vmatprep.subr.bf16.mxu0 0
        %444 = vmatpush1.bf16.msra.mxu0 0
        %445 = vmatprep.subr.bf16.mxu0 0
        %446 = vmatpush1.bf16.msra.mxu0 0
        %447 = vmatprep.subr.bf16.mxu0 0
        %448 = vmatpush1.bf16.msra.mxu0 0
        %449 = vmatprep.subr.bf16.mxu0 0
        %450 = vmatpush1.bf16.msra.mxu0 0
        %451 = vmatprep.subr.bf16.mxu0 0
        %452 = vmatpush1.bf16.msra.mxu0 0
        %453 = vmatprep.subr.bf16.mxu0 0
        %454 = vmatpush1.bf16.msra.mxu0 0
        %455 = vmatprep.subr.bf16.mxu0 0
        %456 = vmatpush1.bf16.msra.mxu0 0
        %457 = vmatprep.subr.bf16.mxu0 0
        %458 = vmatpush1.bf16.msra.mxu0 0
        %459 = vmatprep.subr.bf16.mxu0 0
        %460 = vmatpush1.bf16.msra.mxu0 0
        %461 = vmatprep.subr.bf16.mxu0 0
        %462 = vmatpush1.bf16.msra.mxu0 0
        %463 = vmatprep.subr.bf16.mxu0 0
        %464 = vmatpush1.bf16.msra.mxu0 0
        %465 = vmatprep.subr.bf16.mxu0 0
        %466 = vmatpush1.bf16.msra.mxu0 0
        %467 = vmatprep.subr.bf16.mxu0 0
        %468 = vmatpush1.bf16.msra.mxu0 0
        %469 = vmatprep.subr.bf16.mxu0 0
        %470 = vmatpush1.bf16.msra.mxu0 0
        %471 = vmatprep.subr.bf16.mxu0 0
        %472 = vmatpush1.bf16.msra.mxu0 0
        %473 = vmatprep.mubr.bf16.mxu0 0
        %474 = vmatmul.mubr.bf16.gmra.mrb[0].mxu0 %v291
        %v475 = vpop.f32.mrb[0].mxu0
        %v476 = vadd.f32 0.0, %v475
        %v477 = vpop.f32.mrb[0].mxu0
        %v478 = vadd.f32 0.0, %v477
        %v479 = vpop.f32.mrb[0].mxu0
        %v480 = vpop.f32.mrb[0].mxu0
        %481 = vdwg.mxu0
        %v482 = vmax.f32 %v328, %v435
        %v483 = vmax.f32 %v330, %v437
        %v484 = vmax.f32 %v369, %v476
        %v485 = vmax.f32 %v371, %v478
        %s486 = scalar_lea.vmem %s235, 64 [#allocation2]
        %v487 = vld [vmem:[%s486] sm:$0xff]
        %v488 = vld [vmem:[%s486 + $0x8] sm:$0xff]
        %v489 = vld [vmem:[%s486 + $0x10] sm:$0xff]
        %v490 = vld [vmem:[%s486 + $0x18] sm:$0xff]
        %v495 = vunpack.c.l.b16 %v487
        %v496 = vunpack.c.h.b16 %v487
        %v497 = vunpack.c.l.b16 %v488
        %v498 = vunpack.c.h.b16 %v488
        %v499 = vunpack.c.l.b16 %v489
        %v500 = vunpack.c.h.b16 %v489
        %v501 = vunpack.c.l.b16 %v490
        %v502 = vunpack.c.h.b16 %v490
        %v503 = vpack.c.b16 %v499, %v495
        %v504 = vpack.c.b16 %v500, %v496
        %v505 = vpack.c.b16 %v501, %v497
        %v506 = vpack.c.b16 %v502, %v498
        %511 = vmatprep.subr.bf16.mxu0 %v504
        %512 = vmatpush1.bf16.msra.mxu0 %v503
        %513 = vmatprep.subr.bf16.mxu0 0
        %514 = vmatpush1.bf16.msra.mxu0 0
        %515 = vmatprep.subr.bf16.mxu0 0
        %516 = vmatpush1.bf16.msra.mxu0 0
        %517 = vmatprep.subr.bf16.mxu0 0
        %518 = vmatpush1.bf16.msra.mxu0 0
        %519 = vmatprep.subr.bf16.mxu0 0
        %520 = vmatpush1.bf16.msra.mxu0 0
        %521 = vmatprep.subr.bf16.mxu0 0
        %522 = vmatpush1.bf16.msra.mxu0 0
        %523 = vmatprep.subr.bf16.mxu0 0
        %524 = vmatpush1.bf16.msra.mxu0 0
        %525 = vmatprep.subr.bf16.mxu0 0
        %526 = vmatpush1.bf16.msra.mxu0 0
        %527 = vmatprep.subr.bf16.mxu0 0
        %528 = vmatpush1.bf16.msra.mxu0 0
        %529 = vmatprep.subr.bf16.mxu0 0
        %530 = vmatpush1.bf16.msra.mxu0 0
        %531 = vmatprep.subr.bf16.mxu0 0
        %532 = vmatpush1.bf16.msra.mxu0 0
        %533 = vmatprep.subr.bf16.mxu0 0
        %534 = vmatpush1.bf16.msra.mxu0 0
        %535 = vmatprep.subr.bf16.mxu0 0
        %536 = vmatpush1.bf16.msra.mxu0 0
        %537 = vmatprep.subr.bf16.mxu0 0
        %538 = vmatpush1.bf16.msra.mxu0 0
        %539 = vmatprep.subr.bf16.mxu0 0
        %540 = vmatpush1.bf16.msra.mxu0 0
        %541 = vmatprep.subr.bf16.mxu0 0
        %542 = vmatpush1.bf16.msra.mxu0 0
        %543 = vmatprep.mubr.bf16.mxu0 0
        %544 = vmatmul.mubr.bf16.gmra.mrb[0].mxu0 %v291
        %v545 = vpop.f32.mrb[0].mxu0
        %v546 = vadd.f32 0.0, %v545
        %v547 = vpop.f32.mrb[0].mxu0
        %v548 = vadd.f32 0.0, %v547
        %v549 = vpop.f32.mrb[0].mxu0
        %v550 = vpop.f32.mrb[0].mxu0
        %551 = vdwg.mxu0
        %552 = vmatprep.subr.bf16.mxu0 %v506
        %553 = vmatpush1.bf16.msra.mxu0 %v505
        %554 = vmatprep.subr.bf16.mxu0 0
        %555 = vmatpush1.bf16.msra.mxu0 0
        %556 = vmatprep.subr.bf16.mxu0 0
        %557 = vmatpush1.bf16.msra.mxu0 0
        %558 = vmatprep.subr.bf16.mxu0 0
        %559 = vmatpush1.bf16.msra.mxu0 0
        %560 = vmatprep.subr.bf16.mxu0 0
        %561 = vmatpush1.bf16.msra.mxu0 0
        %562 = vmatprep.subr.bf16.mxu0 0
        %563 = vmatpush1.bf16.msra.mxu0 0
        %564 = vmatprep.subr.bf16.mxu0 0
        %565 = vmatpush1.bf16.msra.mxu0 0
        %566 = vmatprep.subr.bf16.mxu0 0
        %567 = vmatpush1.bf16.msra.mxu0 0
        %568 = vmatprep.subr.bf16.mxu0 0
        %569 = vmatpush1.bf16.msra.mxu0 0
        %570 = vmatprep.subr.bf16.mxu0 0
        %571 = vmatpush1.bf16.msra.mxu0 0
        %572 = vmatprep.subr.bf16.mxu0 0
        %573 = vmatpush1.bf16.msra.mxu0 0
        %574 = vmatprep.subr.bf16.mxu0 0
        %575 = vmatpush1.bf16.msra.mxu0 0
        %576 = vmatprep.subr.bf16.mxu0 0
        %577 = vmatpush1.bf16.msra.mxu0 0
        %578 = vmatprep.subr.bf16.mxu0 0
        %579 = vmatpush1.bf16.msra.mxu0 0
        %580 = vmatprep.subr.bf16.mxu0 0
        %581 = vmatpush1.bf16.msra.mxu0 0
        %582 = vmatprep.subr.bf16.mxu0 0
        %583 = vmatpush1.bf16.msra.mxu0 0
        %584 = vmatprep.mubr.bf16.mxu0 0
        %585 = vmatmul.mubr.bf16.gmra.mrb[0].mxu0 %v291
        %v586 = vpop.f32.mrb[0].mxu0
        %v587 = vadd.f32 0.0, %v586
        %v588 = vpop.f32.mrb[0].mxu0
        %v589 = vadd.f32 0.0, %v588
        %v590 = vpop.f32.mrb[0].mxu0
        %v591 = vpop.f32.mrb[0].mxu0
        %592 = vdwg.mxu0
        %v593 = vmax.f32 %v482, %v546
        %v594 = vmax.f32 %v483, %v548
        %v595 = vmax.f32 %v484, %v587
        %v596 = vmax.f32 %v485, %v589
        %s597 = scalar_lea.vmem %s235, 96 [#allocation2]
        %v598 = vld [vmem:[%s597] sm:$0xff]
        %v599 = vld [vmem:[%s597 + $0x8] sm:$0xff]
        %v600 = vld [vmem:[%s597 + $0x10] sm:$0xff]
        %v601 = vld [vmem:[%s597 + $0x18] sm:$0xff]
        %v606 = vunpack.c.l.b16 %v598
        %v607 = vunpack.c.h.b16 %v598
        %v608 = vunpack.c.l.b16 %v599
        %v609 = vunpack.c.h.b16 %v599
        %v610 = vunpack.c.l.b16 %v600
        %v611 = vunpack.c.h.b16 %v600
        %v612 = vunpack.c.l.b16 %v601
        %v613 = vunpack.c.h.b16 %v601
        %v614 = vpack.c.b16 %v610, %v606
        %v615 = vpack.c.b16 %v611, %v607
        %v616 = vpack.c.b16 %v612, %v608
        %v617 = vpack.c.b16 %v613, %v609
        %622 = vmatprep.subr.bf16.mxu0 %v615
        %623 = vmatpush1.bf16.msra.mxu0 %v614
        %624 = vmatprep.subr.bf16.mxu0 0
        %625 = vmatpush1.bf16.msra.mxu0 0
        %626 = vmatprep.subr.bf16.mxu0 0
        %627 = vmatpush1.bf16.msra.mxu0 0
        %628 = vmatprep.subr.bf16.mxu0 0
        %629 = vmatpush1.bf16.msra.mxu0 0
        %630 = vmatprep.subr.bf16.mxu0 0
        %631 = vmatpush1.bf16.msra.mxu0 0
        %632 = vmatprep.subr.bf16.mxu0 0
        %633 = vmatpush1.bf16.msra.mxu0 0
        %634 = vmatprep.subr.bf16.mxu0 0
        %635 = vmatpush1.bf16.msra.mxu0 0
        %636 = vmatprep.subr.bf16.mxu0 0
        %637 = vmatpush1.bf16.msra.mxu0 0
        %638 = vmatprep.subr.bf16.mxu0 0
        %639 = vmatpush1.bf16.msra.mxu0 0
        %640 = vmatprep.subr.bf16.mxu0 0
        %641 = vmatpush1.bf16.msra.mxu0 0
        %642 = vmatprep.subr.bf16.mxu0 0
        %643 = vmatpush1.bf16.msra.mxu0 0
        %644 = vmatprep.subr.bf16.mxu0 0
        %645 = vmatpush1.bf16.msra.mxu0 0
        %646 = vmatprep.subr.bf16.mxu0 0
        %647 = vmatpush1.bf16.msra.mxu0 0
        %648 = vmatprep.subr.bf16.mxu0 0
        %649 = vmatpush1.bf16.msra.mxu0 0
        %650 = vmatprep.subr.bf16.mxu0 0
        %651 = vmatpush1.bf16.msra.mxu0 0
        %652 = vmatprep.subr.bf16.mxu0 0
        %653 = vmatpush1.bf16.msra.mxu0 0
        %654 = vmatprep.mubr.bf16.mxu0 0
        %655 = vmatmul.mubr.bf16.gmra.mrb[0].mxu0 %v291
        %v656 = vpop.f32.mrb[0].mxu0
        %v657 = vadd.f32 0.0, %v656
        %v658 = vpop.f32.mrb[0].mxu0
        %v659 = vadd.f32 0.0, %v658
        %v660 = vpop.f32.mrb[0].mxu0
        %v661 = vpop.f32.mrb[0].mxu0
        %662 = vdwg.mxu0
        %663 = vmatprep.subr.bf16.mxu0 %v617
        %664 = vmatpush1.bf16.msra.mxu0 %v616
        %665 = vmatprep.subr.bf16.mxu0 0
        %666 = vmatpush1.bf16.msra.mxu0 0
        %667 = vmatprep.subr.bf16.mxu0 0
        %668 = vmatpush1.bf16.msra.mxu0 0
        %669 = vmatprep.subr.bf16.mxu0 0
        %670 = vmatpush1.bf16.msra.mxu0 0
        %671 = vmatprep.subr.bf16.mxu0 0
        %672 = vmatpush1.bf16.msra.mxu0 0
        %673 = vmatprep.subr.bf16.mxu0 0
        %674 = vmatpush1.bf16.msra.mxu0 0
        %675 = vmatprep.subr.bf16.mxu0 0
        %676 = vmatpush1.bf16.msra.mxu0 0
        %677 = vmatprep.subr.bf16.mxu0 0
        %678 = vmatpush1.bf16.msra.mxu0 0
        %679 = vmatprep.subr.bf16.mxu0 0
        %680 = vmatpush1.bf16.msra.mxu0 0
        %681 = vmatprep.subr.bf16.mxu0 0
        %682 = vmatpush1.bf16.msra.mxu0 0
        %683 = vmatprep.subr.bf16.mxu0 0
        %684 = vmatpush1.bf16.msra.mxu0 0
        %685 = vmatprep.subr.bf16.mxu0 0
        %686 = vmatpush1.bf16.msra.mxu0 0
        %687 = vmatprep.subr.bf16.mxu0 0
        %688 = vmatpush1.bf16.msra.mxu0 0
        %689 = vmatprep.subr.bf16.mxu0 0
        %690 = vmatpush1.bf16.msra.mxu0 0
        %691 = vmatprep.subr.bf16.mxu0 0
        %692 = vmatpush1.bf16.msra.mxu0 0
        %693 = vmatprep.subr.bf16.mxu0 0
        %694 = vmatpush1.bf16.msra.mxu0 0
        %695 = vmatprep.mubr.bf16.mxu0 0
        %696 = vmatmul.mubr.bf16.gmra.mrb[0].mxu0 %v291
        %v697 = vpop.f32.mrb[0].mxu0
        %v698 = vadd.f32 0.0, %v697
        %v699 = vpop.f32.mrb[0].mxu0
        %v700 = vadd.f32 0.0, %v699
        %v701 = vpop.f32.mrb[0].mxu0
        %v702 = vpop.f32.mrb[0].mxu0
        %703 = vdwg.mxu0
        %v704 = vmax.f32 %v593, %v657
        %v705 = vmax.f32 %v594, %v659
        %v706 = vmax.f32 %v595, %v698
        %v707 = vmax.f32 %v596, %v700
        %s708 = scalar_lea.vmem %s235, 128 [#allocation2]
        %v709 = vld [vmem:[%s708] sm:$0xff]
        %v710 = vld [vmem:[%s708 + $0x8] sm:$0xff]
        %v711 = vld [vmem:[%s708 + $0x10] sm:$0xff]
        %v712 = vld [vmem:[%s708 + $0x18] sm:$0xff]
        %v717 = vunpack.c.l.b16 %v709
        %v718 = vunpack.c.h.b16 %v709
        %v719 = vunpack.c.l.b16 %v710
        %v720 = vunpack.c.h.b16 %v710
        %v721 = vunpack.c.l.b16 %v711
        %v722 = vunpack.c.h.b16 %v711
        %v723 = vunpack.c.l.b16 %v712
        %v724 = vunpack.c.h.b16 %v712
        %v725 = vpack.c.b16 %v721, %v717
        %v726 = vpack.c.b16 %v722, %v718
        %v727 = vpack.c.b16 %v723, %v719
        %v728 = vpack.c.b16 %v724, %v720
        %733 = vmatprep.subr.bf16.mxu0 %v726
        %734 = vmatpush1.bf16.msra.mxu0 %v725
        %735 = vmatprep.subr.bf16.mxu0 0
        %736 = vmatpush1.bf16.msra.mxu0 0
        %737 = vmatprep.subr.bf16.mxu0 0
        %738 = vmatpush1.bf16.msra.mxu0 0
        %739 = vmatprep.subr.bf16.mxu0 0
        %740 = vmatpush1.bf16.msra.mxu0 0
        %741 = vmatprep.subr.bf16.mxu0 0
        %742 = vmatpush1.bf16.msra.mxu0 0
        %743 = vmatprep.subr.bf16.mxu0 0
        %744 = vmatpush1.bf16.msra.mxu0 0
        %745 = vmatprep.subr.bf16.mxu0 0
        %746 = vmatpush1.bf16.msra.mxu0 0
        %747 = vmatprep.subr.bf16.mxu0 0
        %748 = vmatpush1.bf16.msra.mxu0 0
        %749 = vmatprep.subr.bf16.mxu0 0
        %750 = vmatpush1.bf16.msra.mxu0 0
        %751 = vmatprep.subr.bf16.mxu0 0
        %752 = vmatpush1.bf16.msra.mxu0 0
        %753 = vmatprep.subr.bf16.mxu0 0
        %754 = vmatpush1.bf16.msra.mxu0 0
        %755 = vmatprep.subr.bf16.mxu0 0
        %756 = vmatpush1.bf16.msra.mxu0 0
        %757 = vmatprep.subr.bf16.mxu0 0
        %758 = vmatpush1.bf16.msra.mxu0 0
        %759 = vmatprep.subr.bf16.mxu0 0
        %760 = vmatpush1.bf16.msra.mxu0 0
        %761 = vmatprep.subr.bf16.mxu0 0
        %762 = vmatpush1.bf16.msra.mxu0 0
        %763 = vmatprep.subr.bf16.mxu0 0
        %764 = vmatpush1.bf16.msra.mxu0 0
        %765 = vmatprep.mubr.bf16.mxu0 0
        %766 = vmatmul.mubr.bf16.gmra.mrb[0].mxu0 %v291
        %v767 = vpop.f32.mrb[0].mxu0
        %v768 = vadd.f32 0.0, %v767
        %v769 = vpop.f32.mrb[0].mxu0
        %v770 = vadd.f32 0.0, %v769
        %v771 = vpop.f32.mrb[0].mxu0
        %v772 = vpop.f32.mrb[0].mxu0
        %773 = vdwg.mxu0
        %774 = vmatprep.subr.bf16.mxu0 %v728
        %775 = vmatpush1.bf16.msra.mxu0 %v727
        %776 = vmatprep.subr.bf16.mxu0 0
        %777 = vmatpush1.bf16.msra.mxu0 0
        %778 = vmatprep.subr.bf16.mxu0 0
        %779 = vmatpush1.bf16.msra.mxu0 0
        %780 = vmatprep.subr.bf16.mxu0 0
        %781 = vmatpush1.bf16.msra.mxu0 0
        %782 = vmatprep.subr.bf16.mxu0 0
        %783 = vmatpush1.bf16.msra.mxu0 0
        %784 = vmatprep.subr.bf16.mxu0 0
        %785 = vmatpush1.bf16.msra.mxu0 0
        %786 = vmatprep.subr.bf16.mxu0 0
        %787 = vmatpush1.bf16.msra.mxu0 0
        %788 = vmatprep.subr.bf16.mxu0 0
        %789 = vmatpush1.bf16.msra.mxu0 0
        %790 = vmatprep.subr.bf16.mxu0 0
        %791 = vmatpush1.bf16.msra.mxu0 0
        %792 = vmatprep.subr.bf16.mxu0 0
        %793 = vmatpush1.bf16.msra.mxu0 0
        %794 = vmatprep.subr.bf16.mxu0 0
        %795 = vmatpush1.bf16.msra.mxu0 0
        %796 = vmatprep.subr.bf16.mxu0 0
        %797 = vmatpush1.bf16.msra.mxu0 0
        %798 = vmatprep.subr.bf16.mxu0 0
        %799 = vmatpush1.bf16.msra.mxu0 0
        %800 = vmatprep.subr.bf16.mxu0 0
        %801 = vmatpush1.bf16.msra.mxu0 0
        %802 = vmatprep.subr.bf16.mxu0 0
        %803 = vmatpush1.bf16.msra.mxu0 0
        %804 = vmatprep.subr.bf16.mxu0 0
        %805 = vmatpush1.bf16.msra.mxu0 0
        %806 = vmatprep.mubr.bf16.mxu0 0
        %807 = vmatmul.mubr.bf16.gmra.mrb[0].mxu0 %v291
        %v808 = vpop.f32.mrb[0].mxu0
        %v809 = vadd.f32 0.0, %v808
        %v810 = vpop.f32.mrb[0].mxu0
        %v811 = vadd.f32 0.0, %v810
        %v812 = vpop.f32.mrb[0].mxu0
        %v813 = vpop.f32.mrb[0].mxu0
        %814 = vdwg.mxu0
        %v815 = vmax.f32 %v704, %v768
        %v816 = vmax.f32 %v705, %v770
        %v817 = vmax.f32 %v706, %v809
        %v818 = vmax.f32 %v707, %v811
        %s819 = scalar_lea.vmem %s235, 160 [#allocation2]
        %v820 = vld [vmem:[%s819] sm:$0xff]
        %v821 = vld [vmem:[%s819 + $0x8] sm:$0xff]
        %v822 = vld [vmem:[%s819 + $0x10] sm:$0xff]
        %v823 = vld [vmem:[%s819 + $0x18] sm:$0xff]
        %v828 = vunpack.c.l.b16 %v820
        %v829 = vunpack.c.h.b16 %v820
        %v830 = vunpack.c.l.b16 %v821
        %v831 = vunpack.c.h.b16 %v821
        %v832 = vunpack.c.l.b16 %v822
        %v833 = vunpack.c.h.b16 %v822
        %v834 = vunpack.c.l.b16 %v823
        %v835 = vunpack.c.h.b16 %v823
        %v836 = vpack.c.b16 %v832, %v828
        %v837 = vpack.c.b16 %v833, %v829
        %v838 = vpack.c.b16 %v834, %v830
        %v839 = vpack.c.b16 %v835, %v831
        %844 = vmatprep.subr.bf16.mxu0 %v837
        %845 = vmatpush1.bf16.msra.mxu0 %v836
        %846 = vmatprep.subr.bf16.mxu0 0
        %847 = vmatpush1.bf16.msra.mxu0 0
        %848 = vmatprep.subr.bf16.mxu0 0
        %849 = vmatpush1.bf16.msra.mxu0 0
        %850 = vmatprep.subr.bf16.mxu0 0
        %851 = vmatpush1.bf16.msra.mxu0 0
        %852 = vmatprep.subr.bf16.mxu0 0
        %853 = vmatpush1.bf16.msra.mxu0 0
        %854 = vmatprep.subr.bf16.mxu0 0
        %855 = vmatpush1.bf16.msra.mxu0 0
        %856 = vmatprep.subr.bf16.mxu0 0
        %857 = vmatpush1.bf16.msra.mxu0 0
        %858 = vmatprep.subr.bf16.mxu0 0
        %859 = vmatpush1.bf16.msra.mxu0 0
        %860 = vmatprep.subr.bf16.mxu0 0
        %861 = vmatpush1.bf16.msra.mxu0 0
        %862 = vmatprep.subr.bf16.mxu0 0
        %863 = vmatpush1.bf16.msra.mxu0 0
        %864 = vmatprep.subr.bf16.mxu0 0
        %865 = vmatpush1.bf16.msra.mxu0 0
        %866 = vmatprep.subr.bf16.mxu0 0
        %867 = vmatpush1.bf16.msra.mxu0 0
        %868 = vmatprep.subr.bf16.mxu0 0
        %869 = vmatpush1.bf16.msra.mxu0 0
        %870 = vmatprep.subr.bf16.mxu0 0
        %871 = vmatpush1.bf16.msra.mxu0 0
        %872 = vmatprep.subr.bf16.mxu0 0
        %873 = vmatpush1.bf16.msra.mxu0 0
        %874 = vmatprep.subr.bf16.mxu0 0
        %875 = vmatpush1.bf16.msra.mxu0 0
        %876 = vmatprep.mubr.bf16.mxu0 0
        %877 = vmatmul.mubr.bf16.gmra.mrb[0].mxu0 %v291
        %v878 = vpop.f32.mrb[0].mxu0
        %v879 = vadd.f32 0.0, %v878
        %v880 = vpop.f32.mrb[0].mxu0
        %v881 = vadd.f32 0.0, %v880
        %v882 = vpop.f32.mrb[0].mxu0
        %v883 = vpop.f32.mrb[0].mxu0
        %884 = vdwg.mxu0
        %885 = vmatprep.subr.bf16.mxu0 %v839
        %886 = vmatpush1.bf16.msra.mxu0 %v838
        %887 = vmatprep.subr.bf16.mxu0 0
        %888 = vmatpush1.bf16.msra.mxu0 0
        %889 = vmatprep.subr.bf16.mxu0 0
        %890 = vmatpush1.bf16.msra.mxu0 0
        %891 = vmatprep.subr.bf16.mxu0 0
        %892 = vmatpush1.bf16.msra.mxu0 0
        %893 = vmatprep.subr.bf16.mxu0 0
        %894 = vmatpush1.bf16.msra.mxu0 0
        %895 = vmatprep.subr.bf16.mxu0 0
        %896 = vmatpush1.bf16.msra.mxu0 0
        %897 = vmatprep.subr.bf16.mxu0 0
        %898 = vmatpush1.bf16.msra.mxu0 0
        %899 = vmatprep.subr.bf16.mxu0 0
        %900 = vmatpush1.bf16.msra.mxu0 0
        %901 = vmatprep.subr.bf16.mxu0 0
        %902 = vmatpush1.bf16.msra.mxu0 0
        %903 = vmatprep.subr.bf16.mxu0 0
        %904 = vmatpush1.bf16.msra.mxu0 0
        %905 = vmatprep.subr.bf16.mxu0 0
        %906 = vmatpush1.bf16.msra.mxu0 0
        %907 = vmatprep.subr.bf16.mxu0 0
        %908 = vmatpush1.bf16.msra.mxu0 0
        %909 = vmatprep.subr.bf16.mxu0 0
        %910 = vmatpush1.bf16.msra.mxu0 0
        %911 = vmatprep.subr.bf16.mxu0 0
        %912 = vmatpush1.bf16.msra.mxu0 0
        %913 = vmatprep.subr.bf16.mxu0 0
        %914 = vmatpush1.bf16.msra.mxu0 0
        %915 = vmatprep.subr.bf16.mxu0 0
        %916 = vmatpush1.bf16.msra.mxu0 0
        %917 = vmatprep.mubr.bf16.mxu0 0
        %918 = vmatmul.mubr.bf16.gmra.mrb[0].mxu0 %v291
        %v919 = vpop.f32.mrb[0].mxu0
        %v920 = vadd.f32 0.0, %v919
        %v921 = vpop.f32.mrb[0].mxu0
        %v922 = vadd.f32 0.0, %v921
        %v923 = vpop.f32.mrb[0].mxu0
        %v924 = vpop.f32.mrb[0].mxu0
        %925 = vdwg.mxu0
        %v926 = vmax.f32 %v815, %v879
        %v927 = vmax.f32 %v816, %v881
        %v928 = vmax.f32 %v817, %v920
        %v929 = vmax.f32 %v818, %v922
        %s930 = scalar_lea.vmem %s235, 192 [#allocation2]
        %v931 = vld [vmem:[%s930] sm:$0xff]
        %v932 = vld [vmem:[%s930 + $0x8] sm:$0xff]
        %v933 = vld [vmem:[%s930 + $0x10] sm:$0xff]
        %v934 = vld [vmem:[%s930 + $0x18] sm:$0xff]
        %v939 = vunpack.c.l.b16 %v931
        %v940 = vunpack.c.h.b16 %v931
        %v941 = vunpack.c.l.b16 %v932
        %v942 = vunpack.c.h.b16 %v932
        %v943 = vunpack.c.l.b16 %v933
        %v944 = vunpack.c.h.b16 %v933
        %v945 = vunpack.c.l.b16 %v934
        %v946 = vunpack.c.h.b16 %v934
        %v947 = vpack.c.b16 %v943, %v939
        %v948 = vpack.c.b16 %v944, %v940
        %v949 = vpack.c.b16 %v945, %v941
        %v950 = vpack.c.b16 %v946, %v942
        %955 = vmatprep.subr.bf16.mxu0 %v948
        %956 = vmatpush1.bf16.msra.mxu0 %v947
        %957 = vmatprep.subr.bf16.mxu0 0
        %958 = vmatpush1.bf16.msra.mxu0 0
        %959 = vmatprep.subr.bf16.mxu0 0
        %960 = vmatpush1.bf16.msra.mxu0 0
        %961 = vmatprep.subr.bf16.mxu0 0
        %962 = vmatpush1.bf16.msra.mxu0 0
        %963 = vmatprep.subr.bf16.mxu0 0
        %964 = vmatpush1.bf16.msra.mxu0 0
        %965 = vmatprep.subr.bf16.mxu0 0
        %966 = vmatpush1.bf16.msra.mxu0 0
        %967 = vmatprep.subr.bf16.mxu0 0
        %968 = vmatpush1.bf16.msra.mxu0 0
        %969 = vmatprep.subr.bf16.mxu0 0
        %970 = vmatpush1.bf16.msra.mxu0 0
        %971 = vmatprep.subr.bf16.mxu0 0
        %972 = vmatpush1.bf16.msra.mxu0 0
        %973 = vmatprep.subr.bf16.mxu0 0
        %974 = vmatpush1.bf16.msra.mxu0 0
        %975 = vmatprep.subr.bf16.mxu0 0
        %976 = vmatpush1.bf16.msra.mxu0 0
        %977 = vmatprep.subr.bf16.mxu0 0
        %978 = vmatpush1.bf16.msra.mxu0 0
        %979 = vmatprep.subr.bf16.mxu0 0
        %980 = vmatpush1.bf16.msra.mxu0 0
        %981 = vmatprep.subr.bf16.mxu0 0
        %982 = vmatpush1.bf16.msra.mxu0 0
        %983 = vmatprep.subr.bf16.mxu0 0
        %984 = vmatpush1.bf16.msra.mxu0 0
        %985 = vmatprep.subr.bf16.mxu0 0
        %986 = vmatpush1.bf16.msra.mxu0 0
        %987 = vmatprep.mubr.bf16.mxu0 0
        %988 = vmatmul.mubr.bf16.gmra.mrb[0].mxu0 %v291
        %v989 = vpop.f32.mrb[0].mxu0
        %v990 = vadd.f32 0.0, %v989
        %v991 = vpop.f32.mrb[0].mxu0
        %v992 = vadd.f32 0.0, %v991
        %v993 = vpop.f32.mrb[0].mxu0
        %v994 = vpop.f32.mrb[0].mxu0
        %995 = vdwg.mxu0
        %996 = vmatprep.subr.bf16.mxu0 %v950
        %997 = vmatpush1.bf16.msra.mxu0 %v949
        %998 = vmatprep.subr.bf16.mxu0 0
        %999 = vmatpush1.bf16.msra.mxu0 0
        %1000 = vmatprep.subr.bf16.mxu0 0
        %1001 = vmatpush1.bf16.msra.mxu0 0
        %1002 = vmatprep.subr.bf16.mxu0 0
        %1003 = vmatpush1.bf16.msra.mxu0 0
        %1004 = vmatprep.subr.bf16.mxu0 0
        %1005 = vmatpush1.bf16.msra.mxu0 0
        %1006 = vmatprep.subr.bf16.mxu0 0
        %1007 = vmatpush1.bf16.msra.mxu0 0
        %1008 = vmatprep.subr.bf16.mxu0 0
        %1009 = vmatpush1.bf16.msra.mxu0 0
        %1010 = vmatprep.subr.bf16.mxu0 0
        %1011 = vmatpush1.bf16.msra.mxu0 0
        %1012 = vmatprep.subr.bf16.mxu0 0
        %1013 = vmatpush1.bf16.msra.mxu0 0
        %1014 = vmatprep.subr.bf16.mxu0 0
        %1015 = vmatpush1.bf16.msra.mxu0 0
        %1016 = vmatprep.subr.bf16.mxu0 0
        %1017 = vmatpush1.bf16.msra.mxu0 0
        %1018 = vmatprep.subr.bf16.mxu0 0
        %1019 = vmatpush1.bf16.msra.mxu0 0
        %1020 = vmatprep.subr.bf16.mxu0 0
        %1021 = vmatpush1.bf16.msra.mxu0 0
        %1022 = vmatprep.subr.bf16.mxu0 0
        %1023 = vmatpush1.bf16.msra.mxu0 0
        %1024 = vmatprep.subr.bf16.mxu0 0
        %1025 = vmatpush1.bf16.msra.mxu0 0
        %1026 = vmatprep.subr.bf16.mxu0 0
        %1027 = vmatpush1.bf16.msra.mxu0 0
        %1028 = vmatprep.mubr.bf16.mxu0 0
        %1029 = vmatmul.mubr.bf16.gmra.mrb[0].mxu0 %v291
        %v1030 = vpop.f32.mrb[0].mxu0
        %v1031 = vadd.f32 0.0, %v1030
        %v1032 = vpop.f32.mrb[0].mxu0
        %v1033 = vadd.f32 0.0, %v1032
        %v1034 = vpop.f32.mrb[0].mxu0
        %v1035 = vpop.f32.mrb[0].mxu0
        %1036 = vdwg.mxu0
        %v1037 = vmax.f32 %v926, %v990
        %v1038 = vmax.f32 %v927, %v992
        %v1039 = vmax.f32 %v928, %v1031
        %v1040 = vmax.f32 %v929, %v1033
        %s1041 = scalar_lea.vmem %s235, 224 [#allocation2]
        %v1042 = vld [vmem:[%s1041] sm:$0xff]
        %v1043 = vld [vmem:[%s1041 + $0x8] sm:$0xff]
        %v1044 = vld [vmem:[%s1041 + $0x10] sm:$0xff]
        %v1045 = vld [vmem:[%s1041 + $0x18] sm:$0xff]
        %v1050 = vunpack.c.l.b16 %v1042
        %v1051 = vunpack.c.h.b16 %v1042
        %v1052 = vunpack.c.l.b16 %v1043
        %v1053 = vunpack.c.h.b16 %v1043
        %v1054 = vunpack.c.l.b16 %v1044
        %v1055 = vunpack.c.h.b16 %v1044
        %v1056 = vunpack.c.l.b16 %v1045
        %v1057 = vunpack.c.h.b16 %v1045
        %v1058 = vpack.c.b16 %v1054, %v1050
        %v1059 = vpack.c.b16 %v1055, %v1051
        %v1060 = vpack.c.b16 %v1056, %v1052
        %v1061 = vpack.c.b16 %v1057, %v1053
        %1066 = vmatprep.subr.bf16.mxu0 %v1059
        %1067 = vmatpush1.bf16.msra.mxu0 %v1058
        %1068 = vmatprep.subr.bf16.mxu0 0
        %1069 = vmatpush1.bf16.msra.mxu0 0
        %1070 = vmatprep.subr.bf16.mxu0 0
        %1071 = vmatpush1.bf16.msra.mxu0 0
        %1072 = vmatprep.subr.bf16.mxu0 0
        %1073 = vmatpush1.bf16.msra.mxu0 0
        %1074 = vmatprep.subr.bf16.mxu0 0
        %1075 = vmatpush1.bf16.msra.mxu0 0
        %1076 = vmatprep.subr.bf16.mxu0 0
        %1077 = vmatpush1.bf16.msra.mxu0 0
        %1078 = vmatprep.subr.bf16.mxu0 0
        %1079 = vmatpush1.bf16.msra.mxu0 0
        %1080 = vmatprep.subr.bf16.mxu0 0
        %1081 = vmatpush1.bf16.msra.mxu0 0
        %1082 = vmatprep.subr.bf16.mxu0 0
        %1083 = vmatpush1.bf16.msra.mxu0 0
        %1084 = vmatprep.subr.bf16.mxu0 0
        %1085 = vmatpush1.bf16.msra.mxu0 0
        %1086 = vmatprep.subr.bf16.mxu0 0
        %1087 = vmatpush1.bf16.msra.mxu0 0
        %1088 = vmatprep.subr.bf16.mxu0 0
        %1089 = vmatpush1.bf16.msra.mxu0 0
        %1090 = vmatprep.subr.bf16.mxu0 0
        %1091 = vmatpush1.bf16.msra.mxu0 0
        %1092 = vmatprep.subr.bf16.mxu0 0
        %1093 = vmatpush1.bf16.msra.mxu0 0
        %1094 = vmatprep.subr.bf16.mxu0 0
        %1095 = vmatpush1.bf16.msra.mxu0 0
        %1096 = vmatprep.subr.bf16.mxu0 0
        %1097 = vmatpush1.bf16.msra.mxu0 0
        %1098 = vmatprep.mubr.bf16.mxu0 0
        %1099 = vmatmul.mubr.bf16.gmra.mrb[0].mxu0 %v291
        %v1100 = vpop.f32.mrb[0].mxu0
        %v1101 = vadd.f32 0.0, %v1100
        %v1102 = vpop.f32.mrb[0].mxu0
        %v1103 = vadd.f32 0.0, %v1102
        %v1104 = vpop.f32.mrb[0].mxu0
        %v1105 = vpop.f32.mrb[0].mxu0
        %1106 = vdwg.mxu0
        %1107 = vmatprep.subr.bf16.mxu0 %v1061
        %1108 = vmatpush1.bf16.msra.mxu0 %v1060
        %1109 = vmatprep.subr.bf16.mxu0 0
        %1110 = vmatpush1.bf16.msra.mxu0 0
        %1111 = vmatprep.subr.bf16.mxu0 0
        %1112 = vmatpush1.bf16.msra.mxu0 0
        %1113 = vmatprep.subr.bf16.mxu0 0
        %1114 = vmatpush1.bf16.msra.mxu0 0
        %1115 = vmatprep.subr.bf16.mxu0 0
        %1116 = vmatpush1.bf16.msra.mxu0 0
        %1117 = vmatprep.subr.bf16.mxu0 0
        %1118 = vmatpush1.bf16.msra.mxu0 0
        %1119 = vmatprep.subr.bf16.mxu0 0
        %1120 = vmatpush1.bf16.msra.mxu0 0
        %1121 = vmatprep.subr.bf16.mxu0 0
        %1122 = vmatpush1.bf16.msra.mxu0 0
        %1123 = vmatprep.subr.bf16.mxu0 0
        %1124 = vmatpush1.bf16.msra.mxu0 0
        %1125 = vmatprep.subr.bf16.mxu0 0
        %1126 = vmatpush1.bf16.msra.mxu0 0
        %1127 = vmatprep.subr.bf16.mxu0 0
        %1128 = vmatpush1.bf16.msra.mxu0 0
        %1129 = vmatprep.subr.bf16.mxu0 0
        %1130 = vmatpush1.bf16.msra.mxu0 0
        %1131 = vmatprep.subr.bf16.mxu0 0
        %1132 = vmatpush1.bf16.msra.mxu0 0
        %1133 = vmatprep.subr.bf16.mxu0 0
        %1134 = vmatpush1.bf16.msra.mxu0 0
        %1135 = vmatprep.subr.bf16.mxu0 0
        %1136 = vmatpush1.bf16.msra.mxu0 0
        %1137 = vmatprep.subr.bf16.mxu0 0
        %1138 = vmatpush1.bf16.msra.mxu0 0
        %1139 = vmatprep.mubr.bf16.mxu0 0
        %1140 = vmatmul.mubr.bf16.gmra.mrb[0].mxu0 %v291
        %v1141 = vpop.f32.mrb[0].mxu0
        %v1142 = vadd.f32 0.0, %v1141
        %v1143 = vpop.f32.mrb[0].mxu0
        %v1144 = vadd.f32 0.0, %v1143
        %v1145 = vpop.f32.mrb[0].mxu0
        %v1146 = vpop.f32.mrb[0].mxu0
        %1147 = vdwg.mxu0
        %v1148 = vmax.f32 %v1037, %v1101
        %v1149 = vmax.f32 %v1038, %v1103
        %v1150 = vmax.f32 %v1039, %v1142
        %v1151 = vmax.f32 %v1040, %v1144
        %s1152 = scalar_lea.vmem %s235, 256 [#allocation2]
        %v1153 = vld [vmem:[%s1152] sm:$0xff]
        %v1154 = vld [vmem:[%s1152 + $0x8] sm:$0xff]
        %v1155 = vld [vmem:[%s1152 + $0x10] sm:$0xff]
        %v1156 = vld [vmem:[%s1152 + $0x18] sm:$0xff]
        %v1161 = vunpack.c.l.b16 %v1153
        %v1162 = vunpack.c.h.b16 %v1153
        %v1163 = vunpack.c.l.b16 %v1154
        %v1164 = vunpack.c.h.b16 %v1154
        %v1165 = vunpack.c.l.b16 %v1155
        %v1166 = vunpack.c.h.b16 %v1155
        %v1167 = vunpack.c.l.b16 %v1156
        %v1168 = vunpack.c.h.b16 %v1156
        %v1169 = vpack.c.b16 %v1165, %v1161
        %v1170 = vpack.c.b16 %v1166, %v1162
        %v1171 = vpack.c.b16 %v1167, %v1163
        %v1172 = vpack.c.b16 %v1168, %v1164
        %1177 = vmatprep.subr.bf16.mxu0 %v1170
        %1178 = vmatpush1.bf16.msra.mxu0 %v1169
        %1179 = vmatprep.subr.bf16.mxu0 0
        %1180 = vmatpush1.bf16.msra.mxu0 0
        %1181 = vmatprep.subr.bf16.mxu0 0
        %1182 = vmatpush1.bf16.msra.mxu0 0
        %1183 = vmatprep.subr.bf16.mxu0 0
        %1184 = vmatpush1.bf16.msra.mxu0 0
        %1185 = vmatprep.subr.bf16.mxu0 0
        %1186 = vmatpush1.bf16.msra.mxu0 0
        %1187 = vmatprep.subr.bf16.mxu0 0
        %1188 = vmatpush1.bf16.msra.mxu0 0
        %1189 = vmatprep.subr.bf16.mxu0 0
        %1190 = vmatpush1.bf16.msra.mxu0 0
        %1191 = vmatprep.subr.bf16.mxu0 0
        %1192 = vmatpush1.bf16.msra.mxu0 0
        %1193 = vmatprep.subr.bf16.mxu0 0
        %1194 = vmatpush1.bf16.msra.mxu0 0
        %1195 = vmatprep.subr.bf16.mxu0 0
        %1196 = vmatpush1.bf16.msra.mxu0 0
        %1197 = vmatprep.subr.bf16.mxu0 0
        %1198 = vmatpush1.bf16.msra.mxu0 0
        %1199 = vmatprep.subr.bf16.mxu0 0
        %1200 = vmatpush1.bf16.msra.mxu0 0
        %1201 = vmatprep.subr.bf16.mxu0 0
        %1202 = vmatpush1.bf16.msra.mxu0 0
        %1203 = vmatprep.subr.bf16.mxu0 0
        %1204 = vmatpush1.bf16.msra.mxu0 0
        %1205 = vmatprep.subr.bf16.mxu0 0
        %1206 = vmatpush1.bf16.msra.mxu0 0
        %1207 = vmatprep.subr.bf16.mxu0 0
        %1208 = vmatpush1.bf16.msra.mxu0 0
        %1209 = vmatprep.mubr.bf16.mxu0 0
        %1210 = vmatmul.mubr.bf16.gmra.mrb[0].mxu0 %v291
        %v1211 = vpop.f32.mrb[0].mxu0
        %v1212 = vadd.f32 0.0, %v1211
        %v1213 = vpop.f32.mrb[0].mxu0
        %v1214 = vadd.f32 0.0, %v1213
        %v1215 = vpop.f32.mrb[0].mxu0
        %v1216 = vpop.f32.mrb[0].mxu0
        %1217 = vdwg.mxu0
        %1218 = vmatprep.subr.bf16.mxu0 %v1172
        %1219 = vmatpush1.bf16.msra.mxu0 %v1171
        %1220 = vmatprep.subr.bf16.mxu0 0
        %1221 = vmatpush1.bf16.msra.mxu0 0
        %1222 = vmatprep.subr.bf16.mxu0 0
        %1223 = vmatpush1.bf16.msra.mxu0 0
        %1224 = vmatprep.subr.bf16.mxu0 0
        %1225 = vmatpush1.bf16.msra.mxu0 0
        %1226 = vmatprep.subr.bf16.mxu0 0
        %1227 = vmatpush1.bf16.msra.mxu0 0
        %1228 = vmatprep.subr.bf16.mxu0 0
        %1229 = vmatpush1.bf16.msra.mxu0 0
        %1230 = vmatprep.subr.bf16.mxu0 0
        %1231 = vmatpush1.bf16.msra.mxu0 0
        %1232 = vmatprep.subr.bf16.mxu0 0
        %1233 = vmatpush1.bf16.msra.mxu0 0
        %1234 = vmatprep.subr.bf16.mxu0 0
        %1235 = vmatpush1.bf16.msra.mxu0 0
        %1236 = vmatprep.subr.bf16.mxu0 0
        %1237 = vmatpush1.bf16.msra.mxu0 0
        %1238 = vmatprep.subr.bf16.mxu0 0
        %1239 = vmatpush1.bf16.msra.mxu0 0
        %1240 = vmatprep.subr.bf16.mxu0 0
        %1241 = vmatpush1.bf16.msra.mxu0 0
        %1242 = vmatprep.subr.bf16.mxu0 0
        %1243 = vmatpush1.bf16.msra.mxu0 0
        %1244 = vmatprep.subr.bf16.mxu0 0
        %1245 = vmatpush1.bf16.msra.mxu0 0
        %1246 = vmatprep.subr.bf16.mxu0 0
        %1247 = vmatpush1.bf16.msra.mxu0 0
        %1248 = vmatprep.subr.bf16.mxu0 0
        %1249 = vmatpush1.bf16.msra.mxu0 0
        %1250 = vmatprep.mubr.bf16.mxu0 0
        %1251 = vmatmul.mubr.bf16.gmra.mrb[0].mxu0 %v291
        %v1252 = vpop.f32.mrb[0].mxu0
        %v1253 = vadd.f32 0.0, %v1252
        %v1254 = vpop.f32.mrb[0].mxu0
        %v1255 = vadd.f32 0.0, %v1254
        %v1256 = vpop.f32.mrb[0].mxu0
        %v1257 = vpop.f32.mrb[0].mxu0
        %1258 = vdwg.mxu0
        %v1259 = vmax.f32 %v1148, %v1212
        %v1260 = vmax.f32 %v1149, %v1214
        %v1261 = vmax.f32 %v1150, %v1253
        %v1262 = vmax.f32 %v1151, %v1255
        %v1263 = vld [vmem:[%s2] sm:$0xf]
        %1265 = vset.pattern.permute.xlu0 0
        %1266 = vperm.xlu0 %1265, %v1263
        %v1267 = vpop.permute.xlu0 %1266
        %v1269 = vadd.f32 %v1259, %v1267
        %v1270 = vadd.f32 %v1260, %v1267
        %v1271 = vadd.f32 %v1261, %v1267
        %v1272 = vadd.f32 %v1262, %v1267
        %v1273 = vmax.f32 %v1269, 0.0
        %v1274 = vmax.f32 %v1270, 0.0
        %v1275 = vmax.f32 %v1271, 0.0
        %v1276 = vmax.f32 %v1272, 0.0
        %v1281 = vcombine.low %v1273, %v1274
        %v1282 = vcombine.low %v1275, %v1276
        %1285 = vst [vmem:[%s261] sm:$0xff] %v1281
        %1286 = vst [vmem:[%s261 + $0x8] sm:$0xff] %v1282
        %s1287 = smul.u32 4, %s14
        %p1288 = scmp.lt.s32.totalorder %s1287, 7
        %s1289 = scalar_select %p1288, %s1287, 7
        %s1290 = smul.addr %s1289, 4
        %s1291 = scalar_lea.vmem %s3, %s1290
        // Predicated region
        $region56: #{autoencoder_mlp_forward.4} parent=50 // pred_check
          %p1292 = pneg %p100
        $region57: #{autoencoder_mlp_forward.4} parent=50 // pred_check_branch
          %1294 = sbr.rel (%p1292) target = $region59
        $region58: #{autoencoder_mlp_forward.4} parent=50 // pred_region
          %s1295 = smul.u32 4, %s14
        $region59: #{autoencoder_mlp_forward.4} parent=50 // pred_fallthru
          _
      $region51: #{autoencoder_mlp_forward.4} parent=5 // pred_fallthru
        _
      %p1296 = scmp.le.s32.totalorder 2, %s9
      // Predicated region
      $region60: #{autoencoder_mlp_forward.4} parent=5 // pred_check
        %p1297 = pneg %p1296
      $region61: #{autoencoder_mlp_forward.4} parent=5 // pred_check_branch
        %1299 = sbr.rel (%p1297) target = $region63
      $region62: #{autoencoder_mlp_forward.4} parent=5 // pred_region
        %s1300 = ssub.s32 %s9, 2
        // Predicated region
        $region64: #{autoencoder_mlp_forward.4} parent=62 // pred_check
          %p1301 = pneg %p106
        $region65: #{autoencoder_mlp_forward.4} parent=62 // pred_check_branch
          %1303 = sbr.rel (%p1301) target = $region67
        $region66: #{autoencoder_mlp_forward.4} parent=62 // pred_region
          %s1304 = smul.u32 4, %s15
          %p1305 = scmp.lt.s32.totalorder %s1304, 7
          %s1306 = scalar_select %p1305, %s1304, 7
          %s1307 = smul.addr %s1306, 4
          %s1308 = scalar_lea.vmem %s3, %s1307
        $region67: #{autoencoder_mlp_forward.4} parent=62 // pred_fallthru
          _
      $region63: #{autoencoder_mlp_forward.4} parent=5 // pred_fallthru
        _
    $region6: #{autoencoder_mlp_forward.4} parent=1 // loop_footer
      %s13 = sadd.s32 1, %s9
    $region7: #{autoencoder_mlp_forward.4} parent=1 // loop_footer_branch
      %8 = sbr.rel target = $region3
    $region8: #{autoencoder_mlp_forward.4} parent=1 // loop_exit
      _

// kernel: autoencoder_mlp_forward.5
$region0: #{autoencoder_mlp_forward.5}
  #allocation0 [shape = 'u32[]', space=smem, size = 0x4, offset = 0x4, fixed_abs, tag = 'smem constant byte address 0x4 - core index']
  #allocation1 [shape = 'u32[144,128]{1,0:T(1,128)}', space=vmem, size = 0x12000, scoped, tag = 'internal scratch']
  %s0 = inlined_call_operand.vmem [shape: bf16[16,64], index: 0, kind: input, shape index: {}]
  %s1 = inlined_call_operand.vmem [shape: bf16[9,64,128], index: 1, kind: input, shape index: {}]
  %s2 = inlined_call_operand.vmem [shape: f32[16,1], index: 2, kind: input, shape index: {}]
  %s3 = inlined_call_operand.vmem [shape: f32[16,128], index: 3, kind: output, shape index: {}]
  %s4 = sld [smem:[#allocation0]]
  $region22: #{autoencoder_mlp_forward.5} parent=0
    _
  %s6 = ssub.s32 1, %s4
  %s7 = scalar_select 0, %s6, %s4
  // Predicated region
  $region2: #{autoencoder_mlp_forward.5} parent=0 // pred_check
    _
  $region3: #{autoencoder_mlp_forward.5} parent=0 // pred_check_branch
    %9 = sbr.rel (0) target = $region5
  $region4: #{autoencoder_mlp_forward.5} parent=0 // pred_region
    _
  $region5: #{autoencoder_mlp_forward.5} parent=0 // pred_fallthru
    _
  // Predicated region
  $region6: #{autoencoder_mlp_forward.5} parent=0 // pred_check
    _
  $region7: #{autoencoder_mlp_forward.5} parent=0 // pred_check_branch
    %11 = sbr.rel (0) target = $region9
  $region8: #{autoencoder_mlp_forward.5} parent=0 // pred_region
    _
  $region9: #{autoencoder_mlp_forward.5} parent=0 // pred_fallthru
    _
  // Predicated region
  $region10: #{autoencoder_mlp_forward.5} parent=0 // pred_check
    _
  $region11: #{autoencoder_mlp_forward.5} parent=0 // pred_check_branch
    %13 = sbr.rel (0) target = $region13
  $region12: #{autoencoder_mlp_forward.5} parent=0 // pred_region
    _
  $region13: #{autoencoder_mlp_forward.5} parent=0 // pred_fallthru
    _
  %v15 = vld [vmem:[%s0] sm:$0xf]
  %v16 = vld [vmem:[%s0 + $0x4] sm:$0xf]
  %v17 = vld [vmem:[%s1] sm:$0xf]
  %v18 = vld [vmem:[%s1 + $0x4] sm:$0xf]
  %v19 = vld [vmem:[%s1 + $0x8] sm:$0xf]
  %v20 = vld [vmem:[%s1 + $0xc] sm:$0xf]
  %v21 = vld [vmem:[%s1 + $0x10] sm:$0xf]
  %v22 = vld [vmem:[%s1 + $0x14] sm:$0xf]
  %v23 = vld [vmem:[%s1 + $0x18] sm:$0xf]
  %v24 = vld [vmem:[%s1 + $0x1c] sm:$0xf]
  %v27 = vunpack.c.l.b16 %v15
  %v28 = vunpack.c.l.b16 %v16
  %v29 = vpack.c.b16 %v28, %v27
  %v38 = vunpack.c.l.b16 %v17
  %v39 = vunpack.c.l.b16 %v18
  %v40 = vunpack.c.l.b16 %v19
  %v41 = vunpack.c.l.b16 %v20
  %v42 = vunpack.c.l.b16 %v21
  %v43 = vunpack.c.l.b16 %v22
  %v44 = vunpack.c.l.b16 %v23
  %v45 = vunpack.c.l.b16 %v24
  %v46 = vpack.c.b16 %v39, %v38
  %v47 = vpack.c.b16 %v41, %v40
  %v48 = vpack.c.b16 %v43, %v42
  %v49 = vpack.c.b16 %v45, %v44
  %vm54 = vcmask 523264
  %v56 = vsel %vm54, %v29, 0
  %58 = vmatprep.subr.bf16.mxu0 0
  %59 = vmatpush1.bf16.msra.mxu0 %v46
  %60 = vmatprep.subr.bf16.mxu0 0
  %61 = vmatpush1.bf16.msra.mxu0 %v47
  %62 = vmatprep.subr.bf16.mxu0 0
  %63 = vmatpush1.bf16.msra.mxu0 %v48
  %64 = vmatprep.subr.bf16.mxu0 0
  %65 = vmatpush1.bf16.msra.mxu0 %v49
  %66 = vmatprep.subr.bf16.mxu0 0
  %67 = vmatpush1.bf16.msra.mxu0 0
  %68 = vmatprep.subr.bf16.mxu0 0
  %69 = vmatpush1.bf16.msra.mxu0 0
  %70 = vmatprep.subr.bf16.mxu0 0
  %71 = vmatpush1.bf16.msra.mxu0 0
  %72 = vmatprep.subr.bf16.mxu0 0
  %73 = vmatpush1.bf16.msra.mxu0 0
  %74 = vmatprep.subr.bf16.mxu0 0
  %75 = vmatpush1.bf16.msra.mxu0 0
  %76 = vmatprep.subr.bf16.mxu0 0
  %77 = vmatpush1.bf16.msra.mxu0 0
  %78 = vmatprep.subr.bf16.mxu0 0
  %79 = vmatpush1.bf16.msra.mxu0 0
  %80 = vmatprep.subr.bf16.mxu0 0
  %81 = vmatpush1.bf16.msra.mxu0 0
  %82 = vmatprep.subr.bf16.mxu0 0
  %83 = vmatpush1.bf16.msra.mxu0 0
  %84 = vmatprep.subr.bf16.mxu0 0
  %85 = vmatpush1.bf16.msra.mxu0 0
  %86 = vmatprep.subr.bf16.mxu0 0
  %87 = vmatpush1.bf16.msra.mxu0 0
  %88 = vmatprep.subr.bf16.mxu0 0
  %89 = vmatpush1.bf16.msra.mxu0 0
  %90 = vmatprep.mubr.bf16.mxu0 0
  %91 = vmatmul.mubr.bf16.gmra.mrb[0].mxu0 %v56
  %v92 = vpop.f32.mrb[0].mxu0
  %v93 = vadd.f32 0.0, %v92
  %v94 = vpop.f32.mrb[0].mxu0
  %v95 = vpop.f32.mrb[0].mxu0
  %v96 = vadd.f32 0.0, %v95
  %v97 = vpop.f32.mrb[0].mxu0
  %98 = vdwg.mxu0
  %s99 = scalar_lea.vmem %s1, 32
  %v100 = vld [vmem:[%s99] sm:$0xf]
  %v101 = vld [vmem:[%s99 + $0x4] sm:$0xf]
  %v102 = vld [vmem:[%s99 + $0x8] sm:$0xf]
  %v103 = vld [vmem:[%s99 + $0xc] sm:$0xf]
  %v104 = vld [vmem:[%s99 + $0x10] sm:$0xf]
  %v105 = vld [vmem:[%s99 + $0x14] sm:$0xf]
  %v106 = vld [vmem:[%s99 + $0x18] sm:$0xf]
  %v107 = vld [vmem:[%s99 + $0x1c] sm:$0xf]
  %v116 = vunpack.c.l.b16 %v100
  %v117 = vunpack.c.l.b16 %v101
  %v118 = vunpack.c.l.b16 %v102
  %v119 = vunpack.c.l.b16 %v103
  %v120 = vunpack.c.l.b16 %v104
  %v121 = vunpack.c.l.b16 %v105
  %v122 = vunpack.c.l.b16 %v106
  %v123 = vunpack.c.l.b16 %v107
  %v124 = vpack.c.b16 %v117, %v116
  %v125 = vpack.c.b16 %v119, %v118
  %v126 = vpack.c.b16 %v121, %v120
  %v127 = vpack.c.b16 %v123, %v122
  %132 = vmatprep.subr.bf16.mxu0 0
  %133 = vmatpush1.bf16.msra.mxu0 %v124
  %134 = vmatprep.subr.bf16.mxu0 0
  %135 = vmatpush1.bf16.msra.mxu0 %v125
  %136 = vmatprep.subr.bf16.mxu0 0
  %137 = vmatpush1.bf16.msra.mxu0 %v126
  %138 = vmatprep.subr.bf16.mxu0 0
  %139 = vmatpush1.bf16.msra.mxu0 %v127
  %140 = vmatprep.subr.bf16.mxu0 0
  %141 = vmatpush1.bf16.msra.mxu0 0
  %142 = vmatprep.subr.bf16.mxu0 0
  %143 = vmatpush1.bf16.msra.mxu0 0
  %144 = vmatprep.subr.bf16.mxu0 0
  %145 = vmatpush1.bf16.msra.mxu0 0
  %146 = vmatprep.subr.bf16.mxu0 0
  %147 = vmatpush1.bf16.msra.mxu0 0
  %148 = vmatprep.subr.bf16.mxu0 0
  %149 = vmatpush1.bf16.msra.mxu0 0
  %150 = vmatprep.subr.bf16.mxu0 0
  %151 = vmatpush1.bf16.msra.mxu0 0
  %152 = vmatprep.subr.bf16.mxu0 0
  %153 = vmatpush1.bf16.msra.mxu0 0
  %154 = vmatprep.subr.bf16.mxu0 0
  %155 = vmatpush1.bf16.msra.mxu0 0
  %156 = vmatprep.subr.bf16.mxu0 0
  %157 = vmatpush1.bf16.msra.mxu0 0
  %158 = vmatprep.subr.bf16.mxu0 0
  %159 = vmatpush1.bf16.msra.mxu0 0
  %160 = vmatprep.subr.bf16.mxu0 0
  %161 = vmatpush1.bf16.msra.mxu0 0
  %162 = vmatprep.subr.bf16.mxu0 0
  %163 = vmatpush1.bf16.msra.mxu0 0
  %164 = vmatprep.mubr.bf16.mxu0 0
  %165 = vmatmul.mubr.bf16.gmra.mrb[0].mxu0 %v56
  %v166 = vpop.f32.mrb[0].mxu0
  %v167 = vadd.f32 0.0, %v166
  %v168 = vpop.f32.mrb[0].mxu0
  %v169 = vpop.f32.mrb[0].mxu0
  %v170 = vadd.f32 0.0, %v169
  %v171 = vpop.f32.mrb[0].mxu0
  %172 = vdwg.mxu0
  %v173 = vmax.f32 %v93, %v167
  %v174 = vmax.f32 %v96, %v170
  %s175 = scalar_lea.vmem %s1, 64
  %v176 = vld [vmem:[%s175] sm:$0xf]
  %v177 = vld [vmem:[%s175 + $0x4] sm:$0xf]
  %v178 = vld [vmem:[%s175 + $0x8] sm:$0xf]
  %v179 = vld [vmem:[%s175 + $0xc] sm:$0xf]
  %v180 = vld [vmem:[%s175 + $0x10] sm:$0xf]
  %v181 = vld [vmem:[%s175 + $0x14] sm:$0xf]
  %v182 = vld [vmem:[%s175 + $0x18] sm:$0xf]
  %v183 = vld [vmem:[%s175 + $0x1c] sm:$0xf]
  %v192 = vunpack.c.l.b16 %v176
  %v193 = vunpack.c.l.b16 %v177
  %v194 = vunpack.c.l.b16 %v178
  %v195 = vunpack.c.l.b16 %v179
  %v196 = vunpack.c.l.b16 %v180
  %v197 = vunpack.c.l.b16 %v181
  %v198 = vunpack.c.l.b16 %v182
  %v199 = vunpack.c.l.b16 %v183
  %v200 = vpack.c.b16 %v193, %v192
  %v201 = vpack.c.b16 %v195, %v194
  %v202 = vpack.c.b16 %v197, %v196
  %v203 = vpack.c.b16 %v199, %v198
  %208 = vmatprep.subr.bf16.mxu0 0
  %209 = vmatpush1.bf16.msra.mxu0 %v200
  %210 = vmatprep.subr.bf16.mxu0 0
  %211 = vmatpush1.bf16.msra.mxu0 %v201
  %212 = vmatprep.subr.bf16.mxu0 0
  %213 = vmatpush1.bf16.msra.mxu0 %v202
  %214 = vmatprep.subr.bf16.mxu0 0
  %215 = vmatpush1.bf16.msra.mxu0 %v203
  %216 = vmatprep.subr.bf16.mxu0 0
  %217 = vmatpush1.bf16.msra.mxu0 0
  %218 = vmatprep.subr.bf16.mxu0 0
  %219 = vmatpush1.bf16.msra.mxu0 0
  %220 = vmatprep.subr.bf16.mxu0 0
  %221 = vmatpush1.bf16.msra.mxu0 0
  %222 = vmatprep.subr.bf16.mxu0 0
  %223 = vmatpush1.bf16.msra.mxu0 0
  %224 = vmatprep.subr.bf16.mxu0 0
  %225 = vmatpush1.bf16.msra.mxu0 0
  %226 = vmatprep.subr.bf16.mxu0 0
  %227 = vmatpush1.bf16.msra.mxu0 0
  %228 = vmatprep.subr.bf16.mxu0 0
  %229 = vmatpush1.bf16.msra.mxu0 0
  %230 = vmatprep.subr.bf16.mxu0 0
  %231 = vmatpush1.bf16.msra.mxu0 0
  %232 = vmatprep.subr.bf16.mxu0 0
  %233 = vmatpush1.bf16.msra.mxu0 0
  %234 = vmatprep.subr.bf16.mxu0 0
  %235 = vmatpush1.bf16.msra.mxu0 0
  %236 = vmatprep.subr.bf16.mxu0 0
  %237 = vmatpush1.bf16.msra.mxu0 0
  %238 = vmatprep.subr.bf16.mxu0 0
  %239 = vmatpush1.bf16.msra.mxu0 0
  %240 = vmatprep.mubr.bf16.mxu0 0
  %241 = vmatmul.mubr.bf16.gmra.mrb[0].mxu0 %v56
  %v242 = vpop.f32.mrb[0].mxu0
  %v243 = vadd.f32 0.0, %v242
  %v244 = vpop.f32.mrb[0].mxu0
  %v245 = vpop.f32.mrb[0].mxu0
  %v246 = vadd.f32 0.0, %v245
  %v247 = vpop.f32.mrb[0].mxu0
  %248 = vdwg.mxu0
  %v249 = vmax.f32 %v173, %v243
  %v250 = vmax.f32 %v174, %v246
  %s251 = scalar_lea.vmem %s1, 96
  %v252 = vld [vmem:[%s251] sm:$0xf]
  %v253 = vld [vmem:[%s251 + $0x4] sm:$0xf]
  %v254 = vld [vmem:[%s251 + $0x8] sm:$0xf]
  %v255 = vld [vmem:[%s251 + $0xc] sm:$0xf]
  %v256 = vld [vmem:[%s251 + $0x10] sm:$0xf]
  %v257 = vld [vmem:[%s251 + $0x14] sm:$0xf]
  %v258 = vld [vmem:[%s251 + $0x18] sm:$0xf]
  %v259 = vld [vmem:[%s251 + $0x1c] sm:$0xf]
  %v268 = vunpack.c.l.b16 %v252
  %v269 = vunpack.c.l.b16 %v253
  %v270 = vunpack.c.l.b16 %v254
  %v271 = vunpack.c.l.b16 %v255
  %v272 = vunpack.c.l.b16 %v256
  %v273 = vunpack.c.l.b16 %v257
  %v274 = vunpack.c.l.b16 %v258
  %v275 = vunpack.c.l.b16 %v259
  %v276 = vpack.c.b16 %v269, %v268
  %v277 = vpack.c.b16 %v271, %v270
  %v278 = vpack.c.b16 %v273, %v272
  %v279 = vpack.c.b16 %v275, %v274
  %284 = vmatprep.subr.bf16.mxu0 0
  %285 = vmatpush1.bf16.msra.mxu0 %v276
  %286 = vmatprep.subr.bf16.mxu0 0
  %287 = vmatpush1.bf16.msra.mxu0 %v277
  %288 = vmatprep.subr.bf16.mxu0 0
  %289 = vmatpush1.bf16.msra.mxu0 %v278
  %290 = vmatprep.subr.bf16.mxu0 0
  %291 = vmatpush1.bf16.msra.mxu0 %v279
  %292 = vmatprep.subr.bf16.mxu0 0
  %293 = vmatpush1.bf16.msra.mxu0 0
  %294 = vmatprep.subr.bf16.mxu0 0
  %295 = vmatpush1.bf16.msra.mxu0 0
  %296 = vmatprep.subr.bf16.mxu0 0
  %297 = vmatpush1.bf16.msra.mxu0 0
  %298 = vmatprep.subr.bf16.mxu0 0
  %299 = vmatpush1.bf16.msra.mxu0 0
  %300 = vmatprep.subr.bf16.mxu0 0
  %301 = vmatpush1.bf16.msra.mxu0 0
  %302 = vmatprep.subr.bf16.mxu0 0
  %303 = vmatpush1.bf16.msra.mxu0 0
  %304 = vmatprep.subr.bf16.mxu0 0
  %305 = vmatpush1.bf16.msra.mxu0 0
  %306 = vmatprep.subr.bf16.mxu0 0
  %307 = vmatpush1.bf16.msra.mxu0 0
  %308 = vmatprep.subr.bf16.mxu0 0
  %309 = vmatpush1.bf16.msra.mxu0 0
  %310 = vmatprep.subr.bf16.mxu0 0
  %311 = vmatpush1.bf16.msra.mxu0 0
  %312 = vmatprep.subr.bf16.mxu0 0
  %313 = vmatpush1.bf16.msra.mxu0 0
  %314 = vmatprep.subr.bf16.mxu0 0
  %315 = vmatpush1.bf16.msra.mxu0 0
  %316 = vmatprep.mubr.bf16.mxu0 0
  %317 = vmatmul.mubr.bf16.gmra.mrb[0].mxu0 %v56
  %v318 = vpop.f32.mrb[0].mxu0
  %v319 = vadd.f32 0.0, %v318
  %v320 = vpop.f32.mrb[0].mxu0
  %v321 = vpop.f32.mrb[0].mxu0
  %v322 = vadd.f32 0.0, %v321
  %v323 = vpop.f32.mrb[0].mxu0
  %324 = vdwg.mxu0
  %v325 = vmax.f32 %v249, %v319
  %v326 = vmax.f32 %v250, %v322
  %s327 = scalar_lea.vmem %s1, 128
  %v328 = vld [vmem:[%s327] sm:$0xf]
  %v329 = vld [vmem:[%s327 + $0x4] sm:$0xf]
  %v330 = vld [vmem:[%s327 + $0x8] sm:$0xf]
  %v331 = vld [vmem:[%s327 + $0xc] sm:$0xf]
  %v332 = vld [vmem:[%s327 + $0x10] sm:$0xf]
  %v333 = vld [vmem:[%s327 + $0x14] sm:$0xf]
  %v334 = vld [vmem:[%s327 + $0x18] sm:$0xf]
  %v335 = vld [vmem:[%s327 + $0x1c] sm:$0xf]
  %v344 = vunpack.c.l.b16 %v328
  %v345 = vunpack.c.l.b16 %v329
  %v346 = vunpack.c.l.b16 %v330
  %v347 = vunpack.c.l.b16 %v331
  %v348 = vunpack.c.l.b16 %v332
  %v349 = vunpack.c.l.b16 %v333
  %v350 = vunpack.c.l.b16 %v334
  %v351 = vunpack.c.l.b16 %v335
  %v352 = vpack.c.b16 %v345, %v344
  %v353 = vpack.c.b16 %v347, %v346
  %v354 = vpack.c.b16 %v349, %v348
  %v355 = vpack.c.b16 %v351, %v350
  %360 = vmatprep.subr.bf16.mxu0 0
  %361 = vmatpush1.bf16.msra.mxu0 %v352
  %362 = vmatprep.subr.bf16.mxu0 0
  %363 = vmatpush1.bf16.msra.mxu0 %v353
  %364 = vmatprep.subr.bf16.mxu0 0
  %365 = vmatpush1.bf16.msra.mxu0 %v354
  %366 = vmatprep.subr.bf16.mxu0 0
  %367 = vmatpush1.bf16.msra.mxu0 %v355
  %368 = vmatprep.subr.bf16.mxu0 0
  %369 = vmatpush1.bf16.msra.mxu0 0
  %370 = vmatprep.subr.bf16.mxu0 0
  %371 = vmatpush1.bf16.msra.mxu0 0
  %372 = vmatprep.subr.bf16.mxu0 0
  %373 = vmatpush1.bf16.msra.mxu0 0
  %374 = vmatprep.subr.bf16.mxu0 0
  %375 = vmatpush1.bf16.msra.mxu0 0
  %376 = vmatprep.subr.bf16.mxu0 0
  %377 = vmatpush1.bf16.msra.mxu0 0
  %378 = vmatprep.subr.bf16.mxu0 0
  %379 = vmatpush1.bf16.msra.mxu0 0
  %380 = vmatprep.subr.bf16.mxu0 0
  %381 = vmatpush1.bf16.msra.mxu0 0
  %382 = vmatprep.subr.bf16.mxu0 0
  %383 = vmatpush1.bf16.msra.mxu0 0
  %384 = vmatprep.subr.bf16.mxu0 0
  %385 = vmatpush1.bf16.msra.mxu0 0
  %386 = vmatprep.subr.bf16.mxu0 0
  %387 = vmatpush1.bf16.msra.mxu0 0
  %388 = vmatprep.subr.bf16.mxu0 0
  %389 = vmatpush1.bf16.msra.mxu0 0
  %390 = vmatprep.subr.bf16.mxu0 0
  %391 = vmatpush1.bf16.msra.mxu0 0
  %392 = vmatprep.mubr.bf16.mxu0 0
  %393 = vmatmul.mubr.bf16.gmra.mrb[0].mxu0 %v56
  %v394 = vpop.f32.mrb[0].mxu0
  %v395 = vadd.f32 0.0, %v394
  %v396 = vpop.f32.mrb[0].mxu0
  %v397 = vpop.f32.mrb[0].mxu0
  %v398 = vadd.f32 0.0, %v397
  %v399 = vpop.f32.mrb[0].mxu0
  %400 = vdwg.mxu0
  %v401 = vmax.f32 %v325, %v395
  %v402 = vmax.f32 %v326, %v398
  %s403 = scalar_lea.vmem %s1, 160
  %v404 = vld [vmem:[%s403] sm:$0xf]
  %v405 = vld [vmem:[%s403 + $0x4] sm:$0xf]
  %v406 = vld [vmem:[%s403 + $0x8] sm:$0xf]
  %v407 = vld [vmem:[%s403 + $0xc] sm:$0xf]
  %v408 = vld [vmem:[%s403 + $0x10] sm:$0xf]
  %v409 = vld [vmem:[%s403 + $0x14] sm:$0xf]
  %v410 = vld [vmem:[%s403 + $0x18] sm:$0xf]
  %v411 = vld [vmem:[%s403 + $0x1c] sm:$0xf]
  %v420 = vunpack.c.l.b16 %v404
  %v421 = vunpack.c.l.b16 %v405
  %v422 = vunpack.c.l.b16 %v406
  %v423 = vunpack.c.l.b16 %v407
  %v424 = vunpack.c.l.b16 %v408
  %v425 = vunpack.c.l.b16 %v409
  %v426 = vunpack.c.l.b16 %v410
  %v427 = vunpack.c.l.b16 %v411
  %v428 = vpack.c.b16 %v421, %v420
  %v429 = vpack.c.b16 %v423, %v422
  %v430 = vpack.c.b16 %v425, %v424
  %v431 = vpack.c.b16 %v427, %v426
  %436 = vmatprep.subr.bf16.mxu0 0
  %437 = vmatpush1.bf16.msra.mxu0 %v428
  %438 = vmatprep.subr.bf16.mxu0 0
  %439 = vmatpush1.bf16.msra.mxu0 %v429
  %440 = vmatprep.subr.bf16.mxu0 0
  %441 = vmatpush1.bf16.msra.mxu0 %v430
  %442 = vmatprep.subr.bf16.mxu0 0
  %443 = vmatpush1.bf16.msra.mxu0 %v431
  %444 = vmatprep.subr.bf16.mxu0 0
  %445 = vmatpush1.bf16.msra.mxu0 0
  %446 = vmatprep.subr.bf16.mxu0 0
  %447 = vmatpush1.bf16.msra.mxu0 0
  %448 = vmatprep.subr.bf16.mxu0 0
  %449 = vmatpush1.bf16.msra.mxu0 0
  %450 = vmatprep.subr.bf16.mxu0 0
  %451 = vmatpush1.bf16.msra.mxu0 0
  %452 = vmatprep.subr.bf16.mxu0 0
  %453 = vmatpush1.bf16.msra.mxu0 0
  %454 = vmatprep.subr.bf16.mxu0 0
  %455 = vmatpush1.bf16.msra.mxu0 0
  %456 = vmatprep.subr.bf16.mxu0 0
  %457 = vmatpush1.bf16.msra.mxu0 0
  %458 = vmatprep.subr.bf16.mxu0 0
  %459 = vmatpush1.bf16.msra.mxu0 0
  %460 = vmatprep.subr.bf16.mxu0 0
  %461 = vmatpush1.bf16.msra.mxu0 0
  %462 = vmatprep.subr.bf16.mxu0 0
  %463 = vmatpush1.bf16.msra.mxu0 0
  %464 = vmatprep.subr.bf16.mxu0 0
  %465 = vmatpush1.bf16.msra.mxu0 0
  %466 = vmatprep.subr.bf16.mxu0 0
  %467 = vmatpush1.bf16.msra.mxu0 0
  %468 = vmatprep.mubr.bf16.mxu0 0
  %469 = vmatmul.mubr.bf16.gmra.mrb[0].mxu0 %v56
  %v470 = vpop.f32.mrb[0].mxu0
  %v471 = vadd.f32 0.0, %v470
  %v472 = vpop.f32.mrb[0].mxu0
  %v473 = vpop.f32.mrb[0].mxu0
  %v474 = vadd.f32 0.0, %v473
  %v475 = vpop.f32.mrb[0].mxu0
  %476 = vdwg.mxu0
  %v477 = vmax.f32 %v401, %v471
  %v478 = vmax.f32 %v402, %v474
  %s479 = scalar_lea.vmem %s1, 192
  %v480 = vld [vmem:[%s479] sm:$0xf]
  %v481 = vld [vmem:[%s479 + $0x4] sm:$0xf]
  %v482 = vld [vmem:[%s479 + $0x8] sm:$0xf]
  %v483 = vld [vmem:[%s479 + $0xc] sm:$0xf]
  %v484 = vld [vmem:[%s479 + $0x10] sm:$0xf]
  %v485 = vld [vmem:[%s479 + $0x14] sm:$0xf]
  %v486 = vld [vmem:[%s479 + $0x18] sm:$0xf]
  %v487 = vld [vmem:[%s479 + $0x1c] sm:$0xf]
  %v496 = vunpack.c.l.b16 %v480
  %v497 = vunpack.c.l.b16 %v481
  %v498 = vunpack.c.l.b16 %v482
  %v499 = vunpack.c.l.b16 %v483
  %v500 = vunpack.c.l.b16 %v484
  %v501 = vunpack.c.l.b16 %v485
  %v502 = vunpack.c.l.b16 %v486
  %v503 = vunpack.c.l.b16 %v487
  %v504 = vpack.c.b16 %v497, %v496
  %v505 = vpack.c.b16 %v499, %v498
  %v506 = vpack.c.b16 %v501, %v500
  %v507 = vpack.c.b16 %v503, %v502
  %512 = vmatprep.subr.bf16.mxu0 0
  %513 = vmatpush1.bf16.msra.mxu0 %v504
  %514 = vmatprep.subr.bf16.mxu0 0
  %515 = vmatpush1.bf16.msra.mxu0 %v505
  %516 = vmatprep.subr.bf16.mxu0 0
  %517 = vmatpush1.bf16.msra.mxu0 %v506
  %518 = vmatprep.subr.bf16.mxu0 0
  %519 = vmatpush1.bf16.msra.mxu0 %v507
  %520 = vmatprep.subr.bf16.mxu0 0
  %521 = vmatpush1.bf16.msra.mxu0 0
  %522 = vmatprep.subr.bf16.mxu0 0
  %523 = vmatpush1.bf16.msra.mxu0 0
  %524 = vmatprep.subr.bf16.mxu0 0
  %525 = vmatpush1.bf16.msra.mxu0 0
  %526 = vmatprep.subr.bf16.mxu0 0
  %527 = vmatpush1.bf16.msra.mxu0 0
  %528 = vmatprep.subr.bf16.mxu0 0
  %529 = vmatpush1.bf16.msra.mxu0 0
  %530 = vmatprep.subr.bf16.mxu0 0
  %531 = vmatpush1.bf16.msra.mxu0 0
  %532 = vmatprep.subr.bf16.mxu0 0
  %533 = vmatpush1.bf16.msra.mxu0 0
  %534 = vmatprep.subr.bf16.mxu0 0
  %535 = vmatpush1.bf16.msra.mxu0 0
  %536 = vmatprep.subr.bf16.mxu0 0
  %537 = vmatpush1.bf16.msra.mxu0 0
  %538 = vmatprep.subr.bf16.mxu0 0
  %539 = vmatpush1.bf16.msra.mxu0 0
  %540 = vmatprep.subr.bf16.mxu0 0
  %541 = vmatpush1.bf16.msra.mxu0 0
  %542 = vmatprep.subr.bf16.mxu0 0
  %543 = vmatpush1.bf16.msra.mxu0 0
  %544 = vmatprep.mubr.bf16.mxu0 0
  %545 = vmatmul.mubr.bf16.gmra.mrb[0].mxu0 %v56
  %v546 = vpop.f32.mrb[0].mxu0
  %v547 = vadd.f32 0.0, %v546
  %v548 = vpop.f32.mrb[0].mxu0
  %v549 = vpop.f32.mrb[0].mxu0
  %v550 = vadd.f32 0.0, %v549
  %v551 = vpop.f32.mrb[0].mxu0
  %552 = vdwg.mxu0
  %v553 = vmax.f32 %v477, %v547
  %v554 = vmax.f32 %v478, %v550
  %s555 = scalar_lea.vmem %s1, 224
  %v556 = vld [vmem:[%s555] sm:$0xf]
  %v557 = vld [vmem:[%s555 + $0x4] sm:$0xf]
  %v558 = vld [vmem:[%s555 + $0x8] sm:$0xf]
  %v559 = vld [vmem:[%s555 + $0xc] sm:$0xf]
  %v560 = vld [vmem:[%s555 + $0x10] sm:$0xf]
  %v561 = vld [vmem:[%s555 + $0x14] sm:$0xf]
  %v562 = vld [vmem:[%s555 + $0x18] sm:$0xf]
  %v563 = vld [vmem:[%s555 + $0x1c] sm:$0xf]
  %v572 = vunpack.c.l.b16 %v556
  %v573 = vunpack.c.l.b16 %v557
  %v574 = vunpack.c.l.b16 %v558
  %v575 = vunpack.c.l.b16 %v559
  %v576 = vunpack.c.l.b16 %v560
  %v577 = vunpack.c.l.b16 %v561
  %v578 = vunpack.c.l.b16 %v562
  %v579 = vunpack.c.l.b16 %v563
  %v580 = vpack.c.b16 %v573, %v572
  %v581 = vpack.c.b16 %v575, %v574
  %v582 = vpack.c.b16 %v577, %v576
  %v583 = vpack.c.b16 %v579, %v578
  %588 = vmatprep.subr.bf16.mxu0 0
  %589 = vmatpush1.bf16.msra.mxu0 %v580
  %590 = vmatprep.subr.bf16.mxu0 0
  %591 = vmatpush1.bf16.msra.mxu0 %v581
  %592 = vmatprep.subr.bf16.mxu0 0
  %593 = vmatpush1.bf16.msra.mxu0 %v582
  %594 = vmatprep.subr.bf16.mxu0 0
  %595 = vmatpush1.bf16.msra.mxu0 %v583
  %596 = vmatprep.subr.bf16.mxu0 0
  %597 = vmatpush1.bf16.msra.mxu0 0
  %598 = vmatprep.subr.bf16.mxu0 0
  %599 = vmatpush1.bf16.msra.mxu0 0
  %600 = vmatprep.subr.bf16.mxu0 0
  %601 = vmatpush1.bf16.msra.mxu0 0
  %602 = vmatprep.subr.bf16.mxu0 0
  %603 = vmatpush1.bf16.msra.mxu0 0
  %604 = vmatprep.subr.bf16.mxu0 0
  %605 = vmatpush1.bf16.msra.mxu0 0
  %606 = vmatprep.subr.bf16.mxu0 0
  %607 = vmatpush1.bf16.msra.mxu0 0
  %608 = vmatprep.subr.bf16.mxu0 0
  %609 = vmatpush1.bf16.msra.mxu0 0
  %610 = vmatprep.subr.bf16.mxu0 0
  %611 = vmatpush1.bf16.msra.mxu0 0
  %612 = vmatprep.subr.bf16.mxu0 0
  %613 = vmatpush1.bf16.msra.mxu0 0
  %614 = vmatprep.subr.bf16.mxu0 0
  %615 = vmatpush1.bf16.msra.mxu0 0
  %616 = vmatprep.subr.bf16.mxu0 0
  %617 = vmatpush1.bf16.msra.mxu0 0
  %618 = vmatprep.subr.bf16.mxu0 0
  %619 = vmatpush1.bf16.msra.mxu0 0
  %620 = vmatprep.mubr.bf16.mxu0 0
  %621 = vmatmul.mubr.bf16.gmra.mrb[0].mxu0 %v56
  %v622 = vpop.f32.mrb[0].mxu0
  %v623 = vadd.f32 0.0, %v622
  %v624 = vpop.f32.mrb[0].mxu0
  %v625 = vpop.f32.mrb[0].mxu0
  %v626 = vadd.f32 0.0, %v625
  %v627 = vpop.f32.mrb[0].mxu0
  %628 = vdwg.mxu0
  %v629 = vmax.f32 %v553, %v623
  %v630 = vmax.f32 %v554, %v626
  %s631 = scalar_lea.vmem %s1, 256
  %v632 = vld [vmem:[%s631] sm:$0xf]
  %v633 = vld [vmem:[%s631 + $0x4] sm:$0xf]
  %v634 = vld [vmem:[%s631 + $0x8] sm:$0xf]
  %v635 = vld [vmem:[%s631 + $0xc] sm:$0xf]
  %v636 = vld [vmem:[%s631 + $0x10] sm:$0xf]
  %v637 = vld [vmem:[%s631 + $0x14] sm:$0xf]
  %v638 = vld [vmem:[%s631 + $0x18] sm:$0xf]
  %v639 = vld [vmem:[%s631 + $0x1c] sm:$0xf]
  %v648 = vunpack.c.l.b16 %v632
  %v649 = vunpack.c.l.b16 %v633
  %v650 = vunpack.c.l.b16 %v634
  %v651 = vunpack.c.l.b16 %v635
  %v652 = vunpack.c.l.b16 %v636
  %v653 = vunpack.c.l.b16 %v637
  %v654 = vunpack.c.l.b16 %v638
  %v655 = vunpack.c.l.b16 %v639
  %v656 = vpack.c.b16 %v649, %v648
  %v657 = vpack.c.b16 %v651, %v650
  %v658 = vpack.c.b16 %v653, %v652
  %v659 = vpack.c.b16 %v655, %v654
  %664 = vmatprep.subr.bf16.mxu0 0
  %665 = vmatpush1.bf16.msra.mxu0 %v656
  %666 = vmatprep.subr.bf16.mxu0 0
  %667 = vmatpush1.bf16.msra.mxu0 %v657
  %668 = vmatprep.subr.bf16.mxu0 0
  %669 = vmatpush1.bf16.msra.mxu0 %v658
  %670 = vmatprep.subr.bf16.mxu0 0
  %671 = vmatpush1.bf16.msra.mxu0 %v659
  %672 = vmatprep.subr.bf16.mxu0 0
  %673 = vmatpush1.bf16.msra.mxu0 0
  %674 = vmatprep.subr.bf16.mxu0 0
  %675 = vmatpush1.bf16.msra.mxu0 0
  %676 = vmatprep.subr.bf16.mxu0 0
  %677 = vmatpush1.bf16.msra.mxu0 0
  %678 = vmatprep.subr.bf16.mxu0 0
  %679 = vmatpush1.bf16.msra.mxu0 0
  %680 = vmatprep.subr.bf16.mxu0 0
  %681 = vmatpush1.bf16.msra.mxu0 0
  %682 = vmatprep.subr.bf16.mxu0 0
  %683 = vmatpush1.bf16.msra.mxu0 0
  %684 = vmatprep.subr.bf16.mxu0 0
  %685 = vmatpush1.bf16.msra.mxu0 0
  %686 = vmatprep.subr.bf16.mxu0 0
  %687 = vmatpush1.bf16.msra.mxu0 0
  %688 = vmatprep.subr.bf16.mxu0 0
  %689 = vmatpush1.bf16.msra.mxu0 0
  %690 = vmatprep.subr.bf16.mxu0 0
  %691 = vmatpush1.bf16.msra.mxu0 0
  %692 = vmatprep.subr.bf16.mxu0 0
  %693 = vmatpush1.bf16.msra.mxu0 0
  %694 = vmatprep.subr.bf16.mxu0 0
  %695 = vmatpush1.bf16.msra.mxu0 0
  %696 = vmatprep.mubr.bf16.mxu0 0
  %697 = vmatmul.mubr.bf16.gmra.mrb[0].mxu0 %v56
  %v698 = vpop.f32.mrb[0].mxu0
  %v699 = vadd.f32 0.0, %v698
  %v700 = vpop.f32.mrb[0].mxu0
  %v701 = vpop.f32.mrb[0].mxu0
  %v702 = vadd.f32 0.0, %v701
  %v703 = vpop.f32.mrb[0].mxu0
  %704 = vdwg.mxu0
  %v705 = vmax.f32 %v629, %v699
  %v706 = vmax.f32 %v630, %v702
  %v707 = vld [vmem:[%s2] sm:$0xff]
  %v708 = vld [vmem:[%s2 + $0x8] sm:$0xff]
  %710 = vset.pattern.permute.xlu0 0
  %711 = vperm.xlu0 %710, %v707
  %v712 = vpop.permute.xlu0 %711
  %715 = vset.pattern.permute.xlu0 0
  %716 = vperm.xlu0 %715, %v708
  %v717 = vpop.permute.xlu0 %716
  %v719 = vadd.f32 %v705, %v712
  %v720 = vadd.f32 %v706, %v717
  %v721 = vmax.f32 %v719, 0.0
  %v722 = vmax.f32 %v720, 0.0
  %723 = vst [vmem:[%s3] sm:$0xff] %v721
  %724 = vst [vmem:[%s3 + $0x8] sm:$0xff] %v722
  // Predicated region
  $region14: #{autoencoder_mlp_forward.5} parent=0 // pred_check
    _
  $region15: #{autoencoder_mlp_forward.5} parent=0 // pred_check_branch
    %726 = sbr.rel (0) target = $region17
  $region16: #{autoencoder_mlp_forward.5} parent=0 // pred_region
    _
  $region17: #{autoencoder_mlp_forward.5} parent=0 // pred_fallthru
    _
  // Predicated region
  $region18: #{autoencoder_mlp_forward.5} parent=0 // pred_check
    _
  $region19: #{autoencoder_mlp_forward.5} parent=0 // pred_check_branch
    %728 = sbr.rel (0) target = $region21
  $region20: #{autoencoder_mlp_forward.5} parent=0 // pred_region
    _
  $region21: #{autoencoder_mlp_forward.5} parent=0 // pred_fallthru
    _

// kernel: autoencoder_mlp_forward.6
$region0: #{autoencoder_mlp_forward.6}
  #allocation0 [shape = 'u32[]', space=smem, size = 0x4, offset = 0x4, fixed_abs, tag = 'smem constant byte address 0x4 - core index']
  #allocation1 [shape = 'u32[144,128]{1,0:T(1,128)}', space=vmem, size = 0x12000, scoped, tag = 'internal scratch']
  %s0 = inlined_call_operand.vmem [shape: bf16[64,256], index: 0, kind: input, shape index: {}]
  %s1 = inlined_call_operand.vmem [shape: bf16[9,256,128], index: 1, kind: input, shape index: {}]
  %s2 = inlined_call_operand.vmem [shape: f32[64,1], index: 2, kind: input, shape index: {}]
  %s3 = inlined_call_operand.vmem [shape: f32[64,128], index: 3, kind: output, shape index: {}]
  %s4 = sld [smem:[#allocation0]]
  $region22: #{autoencoder_mlp_forward.6} parent=0
    _
  %s6 = ssub.s32 1, %s4
  %s7 = scalar_select 0, %s6, %s4
  // Predicated region
  $region2: #{autoencoder_mlp_forward.6} parent=0 // pred_check
    _
  $region3: #{autoencoder_mlp_forward.6} parent=0 // pred_check_branch
    %9 = sbr.rel (0) target = $region5
  $region4: #{autoencoder_mlp_forward.6} parent=0 // pred_region
    _
  $region5: #{autoencoder_mlp_forward.6} parent=0 // pred_fallthru
    _
  // Predicated region
  $region6: #{autoencoder_mlp_forward.6} parent=0 // pred_check
    _
  $region7: #{autoencoder_mlp_forward.6} parent=0 // pred_check_branch
    %11 = sbr.rel (0) target = $region9
  $region8: #{autoencoder_mlp_forward.6} parent=0 // pred_region
    _
  $region9: #{autoencoder_mlp_forward.6} parent=0 // pred_fallthru
    _
  // Predicated region
  $region10: #{autoencoder_mlp_forward.6} parent=0 // pred_check
    _
  $region11: #{autoencoder_mlp_forward.6} parent=0 // pred_check_branch
    %13 = sbr.rel (0) target = $region13
  $region12: #{autoencoder_mlp_forward.6} parent=0 // pred_region
    _
  $region13: #{autoencoder_mlp_forward.6} parent=0 // pred_fallthru
    _
  %v15 = vld [vmem:[%s0] sm:$0xff]
  %v16 = vld [vmem:[%s0 + $0x8] sm:$0xff]
  %v17 = vld [vmem:[%s0 + $0x10] sm:$0xff]
  %v18 = vld [vmem:[%s0 + $0x18] sm:$0xff]
  %v19 = vld [vmem:[%s0 + $0x20] sm:$0xff]
  %v20 = vld [vmem:[%s0 + $0x28] sm:$0xff]
  %v21 = vld [vmem:[%s0 + $0x30] sm:$0xff]
  %v22 = vld [vmem:[%s0 + $0x38] sm:$0xff]
  %v23 = vld [vmem:[%s1] sm:$0xf]
  %v24 = vld [vmem:[%s1 + $0x4] sm:$0xf]
  %v25 = vld [vmem:[%s1 + $0x8] sm:$0xf]
  %v26 = vld [vmem:[%s1 + $0xc] sm:$0xf]
  %v27 = vld [vmem:[%s1 + $0x10] sm:$0xf]
  %v28 = vld [vmem:[%s1 + $0x14] sm:$0xf]
  %v29 = vld [vmem:[%s1 + $0x18] sm:$0xf]
  %v30 = vld [vmem:[%s1 + $0x1c] sm:$0xf]
  %v31 = vld [vmem:[%s1 + $0x20] sm:$0xf]
  %v32 = vld [vmem:[%s1 + $0x24] sm:$0xf]
  %v33 = vld [vmem:[%s1 + $0x28] sm:$0xf]
  %v34 = vld [vmem:[%s1 + $0x2c] sm:$0xf]
  %v35 = vld [vmem:[%s1 + $0x30] sm:$0xf]
  %v36 = vld [vmem:[%s1 + $0x34] sm:$0xf]
  %v37 = vld [vmem:[%s1 + $0x38] sm:$0xf]
  %v38 = vld [vmem:[%s1 + $0x3c] sm:$0xf]
  %v39 = vld [vmem:[%s1 + $0x40] sm:$0xf]
  %v40 = vld [vmem:[%s1 + $0x44] sm:$0xf]
  %v41 = vld [vmem:[%s1 + $0x48] sm:$0xf]
  %v42 = vld [vmem:[%s1 + $0x4c] sm:$0xf]
  %v43 = vld [vmem:[%s1 + $0x50] sm:$0xf]
  %v44 = vld [vmem:[%s1 + $0x54] sm:$0xf]
  %v45 = vld [vmem:[%s1 + $0x58] sm:$0xf]
  %v46 = vld [vmem:[%s1 + $0x5c] sm:$0xf]
  %v47 = vld [vmem:[%s1 + $0x60] sm:$0xf]
  %v48 = vld [vmem:[%s1 + $0x64] sm:$0xf]
  %v49 = vld [vmem:[%s1 + $0x68] sm:$0xf]
  %v50 = vld [vmem:[%s1 + $0x6c] sm:$0xf]
  %v51 = vld [vmem:[%s1 + $0x70] sm:$0xf]
  %v52 = vld [vmem:[%s1 + $0x74] sm:$0xf]
  %v53 = vld [vmem:[%s1 + $0x78] sm:$0xf]
  %v54 = vld [vmem:[%s1 + $0x7c] sm:$0xf]
  %v63 = vunpack.c.l.b16 %v15
  %v64 = vunpack.c.h.b16 %v15
  %v65 = vunpack.c.l.b16 %v16
  %v66 = vunpack.c.h.b16 %v16
  %v67 = vunpack.c.l.b16 %v17
  %v68 = vunpack.c.h.b16 %v17
  %v69 = vunpack.c.l.b16 %v18
  %v70 = vunpack.c.h.b16 %v18
  %v71 = vunpack.c.l.b16 %v19
  %v72 = vunpack.c.h.b16 %v19
  %v73 = vunpack.c.l.b16 %v20
  %v74 = vunpack.c.h.b16 %v20
  %v75 = vunpack.c.l.b16 %v21
  %v76 = vunpack.c.h.b16 %v21
  %v77 = vunpack.c.l.b16 %v22
  %v78 = vunpack.c.h.b16 %v22
  %v79 = vpack.c.b16 %v65, %v63
  %v80 = vpack.c.b16 %v66, %v64
  %v81 = vpack.c.b16 %v69, %v67
  %v82 = vpack.c.b16 %v70, %v68
  %v83 = vpack.c.b16 %v73, %v71
  %v84 = vpack.c.b16 %v74, %v72
  %v85 = vpack.c.b16 %v77, %v75
  %v86 = vpack.c.b16 %v78, %v76
  %v127 = vunpack.c.l.b16 %v23
  %v128 = vunpack.c.l.b16 %v24
  %v129 = vunpack.c.l.b16 %v25
  %v130 = vunpack.c.l.b16 %v26
  %v131 = vunpack.c.l.b16 %v27
  %v132 = vunpack.c.l.b16 %v28
  %v133 = vunpack.c.l.b16 %v29
  %v134 = vunpack.c.l.b16 %v30
  %v135 = vunpack.c.l.b16 %v31
  %v136 = vunpack.c.l.b16 %v32
  %v137 = vunpack.c.l.b16 %v33
  %v138 = vunpack.c.l.b16 %v34
  %v139 = vunpack.c.l.b16 %v35
  %v140 = vunpack.c.l.b16 %v36
  %v141 = vunpack.c.l.b16 %v37
  %v142 = vunpack.c.l.b16 %v38
  %v143 = vunpack.c.l.b16 %v39
  %v144 = vunpack.c.l.b16 %v40
  %v145 = vunpack.c.l.b16 %v41
  %v146 = vunpack.c.l.b16 %v42
  %v147 = vunpack.c.l.b16 %v43
  %v148 = vunpack.c.l.b16 %v44
  %v149 = vunpack.c.l.b16 %v45
  %v150 = vunpack.c.l.b16 %v46
  %v151 = vunpack.c.l.b16 %v47
  %v152 = vunpack.c.l.b16 %v48
  %v153 = vunpack.c.l.b16 %v49
  %v154 = vunpack.c.l.b16 %v50
  %v155 = vunpack.c.l.b16 %v51
  %v156 = vunpack.c.l.b16 %v52
  %v157 = vunpack.c.l.b16 %v53
  %v158 = vunpack.c.l.b16 %v54
  %v159 = vpack.c.b16 %v128, %v127
  %v160 = vpack.c.b16 %v130, %v129
  %v161 = vpack.c.b16 %v132, %v131
  %v162 = vpack.c.b16 %v134, %v133
  %v163 = vpack.c.b16 %v136, %v135
  %v164 = vpack.c.b16 %v138, %v137
  %v165 = vpack.c.b16 %v140, %v139
  %v166 = vpack.c.b16 %v142, %v141
  %v167 = vpack.c.b16 %v144, %v143
  %v168 = vpack.c.b16 %v146, %v145
  %v169 = vpack.c.b16 %v148, %v147
  %v170 = vpack.c.b16 %v150, %v149
  %v171 = vpack.c.b16 %v152, %v151
  %v172 = vpack.c.b16 %v154, %v153
  %v173 = vpack.c.b16 %v156, %v155
  %v174 = vpack.c.b16 %v158, %v157
  %191 = vmatprep.subr.bf16.mxu0 0
  %192 = vmatpush1.bf16.msra.mxu0 %v159
  %193 = vmatprep.subr.bf16.mxu0 0
  %194 = vmatpush1.bf16.msra.mxu0 %v160
  %195 = vmatprep.subr.bf16.mxu0 0
  %196 = vmatpush1.bf16.msra.mxu0 %v161
  %197 = vmatprep.subr.bf16.mxu0 0
  %198 = vmatpush1.bf16.msra.mxu0 %v162
  %199 = vmatprep.subr.bf16.mxu0 0
  %200 = vmatpush1.bf16.msra.mxu0 %v163
  %201 = vmatprep.subr.bf16.mxu0 0
  %202 = vmatpush1.bf16.msra.mxu0 %v164
  %203 = vmatprep.subr.bf16.mxu0 0
  %204 = vmatpush1.bf16.msra.mxu0 %v165
  %205 = vmatprep.subr.bf16.mxu0 0
  %206 = vmatpush1.bf16.msra.mxu0 %v166
  %207 = vmatprep.subr.bf16.mxu0 0
  %208 = vmatpush1.bf16.msra.mxu0 %v167
  %209 = vmatprep.subr.bf16.mxu0 0
  %210 = vmatpush1.bf16.msra.mxu0 %v168
  %211 = vmatprep.subr.bf16.mxu0 0
  %212 = vmatpush1.bf16.msra.mxu0 %v169
  %213 = vmatprep.subr.bf16.mxu0 0
  %214 = vmatpush1.bf16.msra.mxu0 %v170
  %215 = vmatprep.subr.bf16.mxu0 0
  %216 = vmatpush1.bf16.msra.mxu0 %v171
  %217 = vmatprep.subr.bf16.mxu0 0
  %218 = vmatpush1.bf16.msra.mxu0 %v172
  %219 = vmatprep.subr.bf16.mxu0 0
  %220 = vmatpush1.bf16.msra.mxu0 %v173
  %221 = vmatprep.subr.bf16.mxu0 0
  %222 = vmatpush1.bf16.msra.mxu0 %v174
  %223 = vmatprep.mubr.bf16.mxu0 %v80
  %224 = vmatmul.mubr.bf16.gmra.mrb[0].mxu0 %v79
  %v225 = vpop.f32.mrb[0].mxu0
  %v226 = vadd.f32 0.0, %v225
  %v227 = vpop.f32.mrb[0].mxu0
  %v228 = vpop.f32.mrb[0].mxu0
  %v229 = vadd.f32 0.0, %v228
  %v230 = vpop.f32.mrb[0].mxu0
  %231 = vmatprep.mubr.bf16.mxu0 %v82
  %232 = vmatmul.mubr.bf16.gmra.mrb[0].mxu0 %v81
  %v233 = vpop.f32.mrb[0].mxu0
  %v234 = vadd.f32 0.0, %v233
  %v235 = vpop.f32.mrb[0].mxu0
  %v236 = vpop.f32.mrb[0].mxu0
  %v237 = vadd.f32 0.0, %v236
  %v238 = vpop.f32.mrb[0].mxu0
  %239 = vmatprep.mubr.bf16.mxu0 %v84
  %240 = vmatmul.mubr.bf16.gmra.mrb[0].mxu0 %v83
  %v241 = vpop.f32.mrb[0].mxu0
  %v242 = vadd.f32 0.0, %v241
  %v243 = vpop.f32.mrb[0].mxu0
  %v244 = vpop.f32.mrb[0].mxu0
  %v245 = vadd.f32 0.0, %v244
  %v246 = vpop.f32.mrb[0].mxu0
  %247 = vmatprep.mubr.bf16.mxu0 %v86
  %248 = vmatmul.mubr.bf16.gmra.mrb[0].mxu0 %v85
  %v249 = vpop.f32.mrb[0].mxu0
  %v250 = vadd.f32 0.0, %v249
  %v251 = vpop.f32.mrb[0].mxu0
  %v252 = vpop.f32.mrb[0].mxu0
  %v253 = vadd.f32 0.0, %v252
  %v254 = vpop.f32.mrb[0].mxu0
  %255 = vdwg.mxu0
  %s256 = scalar_lea.vmem %s1, 128
  %v257 = vld [vmem:[%s256] sm:$0xf]
  %v258 = vld [vmem:[%s256 + $0x4] sm:$0xf]
  %v259 = vld [vmem:[%s256 + $0x8] sm:$0xf]
  %v260 = vld [vmem:[%s256 + $0xc] sm:$0xf]
  %v261 = vld [vmem:[%s256 + $0x10] sm:$0xf]
  %v262 = vld [vmem:[%s256 + $0x14] sm:$0xf]
  %v263 = vld [vmem:[%s256 + $0x18] sm:$0xf]
  %v264 = vld [vmem:[%s256 + $0x1c] sm:$0xf]
  %v265 = vld [vmem:[%s256 + $0x20] sm:$0xf]
  %v266 = vld [vmem:[%s256 + $0x24] sm:$0xf]
  %v267 = vld [vmem:[%s256 + $0x28] sm:$0xf]
  %v268 = vld [vmem:[%s256 + $0x2c] sm:$0xf]
  %v269 = vld [vmem:[%s256 + $0x30] sm:$0xf]
  %v270 = vld [vmem:[%s256 + $0x34] sm:$0xf]
  %v271 = vld [vmem:[%s256 + $0x38] sm:$0xf]
  %v272 = vld [vmem:[%s256 + $0x3c] sm:$0xf]
  %v273 = vld [vmem:[%s256 + $0x40] sm:$0xf]
  %v274 = vld [vmem:[%s256 + $0x44] sm:$0xf]
  %v275 = vld [vmem:[%s256 + $0x48] sm:$0xf]
  %v276 = vld [vmem:[%s256 + $0x4c] sm:$0xf]
  %v277 = vld [vmem:[%s256 + $0x50] sm:$0xf]
  %v278 = vld [vmem:[%s256 + $0x54] sm:$0xf]
  %v279 = vld [vmem:[%s256 + $0x58] sm:$0xf]
  %v280 = vld [vmem:[%s256 + $0x5c] sm:$0xf]
  %v281 = vld [vmem:[%s256 + $0x60] sm:$0xf]
  %v282 = vld [vmem:[%s256 + $0x64] sm:$0xf]
  %v283 = vld [vmem:[%s256 + $0x68] sm:$0xf]
  %v284 = vld [vmem:[%s256 + $0x6c] sm:$0xf]
  %v285 = vld [vmem:[%s256 + $0x70] sm:$0xf]
  %v286 = vld [vmem:[%s256 + $0x74] sm:$0xf]
  %v287 = vld [vmem:[%s256 + $0x78] sm:$0xf]
  %v288 = vld [vmem:[%s256 + $0x7c] sm:$0xf]
  %v321 = vunpack.c.l.b16 %v257
  %v322 = vunpack.c.l.b16 %v258
  %v323 = vunpack.c.l.b16 %v259
  %v324 = vunpack.c.l.b16 %v260
  %v325 = vunpack.c.l.b16 %v261
  %v326 = vunpack.c.l.b16 %v262
  %v327 = vunpack.c.l.b16 %v263
  %v328 = vunpack.c.l.b16 %v264
  %v329 = vunpack.c.l.b16 %v265
  %v330 = vunpack.c.l.b16 %v266
  %v331 = vunpack.c.l.b16 %v267
  %v332 = vunpack.c.l.b16 %v268
  %v333 = vunpack.c.l.b16 %v269
  %v334 = vunpack.c.l.b16 %v270
  %v335 = vunpack.c.l.b16 %v271
  %v336 = vunpack.c.l.b16 %v272
  %v337 = vunpack.c.l.b16 %v273
  %v338 = vunpack.c.l.b16 %v274
  %v339 = vunpack.c.l.b16 %v275
  %v340 = vunpack.c.l.b16 %v276
  %v341 = vunpack.c.l.b16 %v277
  %v342 = vunpack.c.l.b16 %v278
  %v343 = vunpack.c.l.b16 %v279
  %v344 = vunpack.c.l.b16 %v280
  %v345 = vunpack.c.l.b16 %v281
  %v346 = vunpack.c.l.b16 %v282
  %v347 = vunpack.c.l.b16 %v283
  %v348 = vunpack.c.l.b16 %v284
  %v349 = vunpack.c.l.b16 %v285
  %v350 = vunpack.c.l.b16 %v286
  %v351 = vunpack.c.l.b16 %v287
  %v352 = vunpack.c.l.b16 %v288
  %v353 = vpack.c.b16 %v322, %v321
  %v354 = vpack.c.b16 %v324, %v323
  %v355 = vpack.c.b16 %v326, %v325
  %v356 = vpack.c.b16 %v328, %v327
  %v357 = vpack.c.b16 %v330, %v329
  %v358 = vpack.c.b16 %v332, %v331
  %v359 = vpack.c.b16 %v334, %v333
  %v360 = vpack.c.b16 %v336, %v335
  %v361 = vpack.c.b16 %v338, %v337
  %v362 = vpack.c.b16 %v340, %v339
  %v363 = vpack.c.b16 %v342, %v341
  %v364 = vpack.c.b16 %v344, %v343
  %v365 = vpack.c.b16 %v346, %v345
  %v366 = vpack.c.b16 %v348, %v347
  %v367 = vpack.c.b16 %v350, %v349
  %v368 = vpack.c.b16 %v352, %v351
  %385 = vmatprep.subr.bf16.mxu0 0
  %386 = vmatpush1.bf16.msra.mxu0 %v353
  %387 = vmatprep.subr.bf16.mxu0 0
  %388 = vmatpush1.bf16.msra.mxu0 %v354
  %389 = vmatprep.subr.bf16.mxu0 0
  %390 = vmatpush1.bf16.msra.mxu0 %v355
  %391 = vmatprep.subr.bf16.mxu0 0
  %392 = vmatpush1.bf16.msra.mxu0 %v356
  %393 = vmatprep.subr.bf16.mxu0 0
  %394 = vmatpush1.bf16.msra.mxu0 %v357
  %395 = vmatprep.subr.bf16.mxu0 0
  %396 = vmatpush1.bf16.msra.mxu0 %v358
  %397 = vmatprep.subr.bf16.mxu0 0
  %398 = vmatpush1.bf16.msra.mxu0 %v359
  %399 = vmatprep.subr.bf16.mxu0 0
  %400 = vmatpush1.bf16.msra.mxu0 %v360
  %401 = vmatprep.subr.bf16.mxu0 0
  %402 = vmatpush1.bf16.msra.mxu0 %v361
  %403 = vmatprep.subr.bf16.mxu0 0
  %404 = vmatpush1.bf16.msra.mxu0 %v362
  %405 = vmatprep.subr.bf16.mxu0 0
  %406 = vmatpush1.bf16.msra.mxu0 %v363
  %407 = vmatprep.subr.bf16.mxu0 0
  %408 = vmatpush1.bf16.msra.mxu0 %v364
  %409 = vmatprep.subr.bf16.mxu0 0
  %410 = vmatpush1.bf16.msra.mxu0 %v365
  %411 = vmatprep.subr.bf16.mxu0 0
  %412 = vmatpush1.bf16.msra.mxu0 %v366
  %413 = vmatprep.subr.bf16.mxu0 0
  %414 = vmatpush1.bf16.msra.mxu0 %v367
  %415 = vmatprep.subr.bf16.mxu0 0
  %416 = vmatpush1.bf16.msra.mxu0 %v368
  %417 = vmatprep.mubr.bf16.mxu0 %v80
  %418 = vmatmul.mubr.bf16.gmra.mrb[0].mxu0 %v79
  %v419 = vpop.f32.mrb[0].mxu0
  %v420 = vadd.f32 0.0, %v419
  %v421 = vpop.f32.mrb[0].mxu0
  %v422 = vpop.f32.mrb[0].mxu0
  %v423 = vadd.f32 0.0, %v422
  %v424 = vpop.f32.mrb[0].mxu0
  %425 = vmatprep.mubr.bf16.mxu0 %v82
  %426 = vmatmul.mubr.bf16.gmra.mrb[0].mxu0 %v81
  %v427 = vpop.f32.mrb[0].mxu0
  %v428 = vadd.f32 0.0, %v427
  %v429 = vpop.f32.mrb[0].mxu0
  %v430 = vpop.f32.mrb[0].mxu0
  %v431 = vadd.f32 0.0, %v430
  %v432 = vpop.f32.mrb[0].mxu0
  %433 = vmatprep.mubr.bf16.mxu0 %v84
  %434 = vmatmul.mubr.bf16.gmra.mrb[0].mxu0 %v83
  %v435 = vpop.f32.mrb[0].mxu0
  %v436 = vadd.f32 0.0, %v435
  %v437 = vpop.f32.mrb[0].mxu0
  %v438 = vpop.f32.mrb[0].mxu0
  %v439 = vadd.f32 0.0, %v438
  %v440 = vpop.f32.mrb[0].mxu0
  %441 = vmatprep.mubr.bf16.mxu0 %v86
  %442 = vmatmul.mubr.bf16.gmra.mrb[0].mxu0 %v85
  %v443 = vpop.f32.mrb[0].mxu0
  %v444 = vadd.f32 0.0, %v443
  %v445 = vpop.f32.mrb[0].mxu0
  %v446 = vpop.f32.mrb[0].mxu0
  %v447 = vadd.f32 0.0, %v446
  %v448 = vpop.f32.mrb[0].mxu0
  %449 = vdwg.mxu0
  %v450 = vmax.f32 %v226, %v420
  %v451 = vmax.f32 %v229, %v423
  %v452 = vmax.f32 %v234, %v428
  %v453 = vmax.f32 %v237, %v431
  %v454 = vmax.f32 %v242, %v436
  %v455 = vmax.f32 %v245, %v439
  %v456 = vmax.f32 %v250, %v444
  %v457 = vmax.f32 %v253, %v447
  %s458 = scalar_lea.vmem %s1, 256
  %v459 = vld [vmem:[%s458] sm:$0xf]
  %v460 = vld [vmem:[%s458 + $0x4] sm:$0xf]
  %v461 = vld [vmem:[%s458 + $0x8] sm:$0xf]
  %v462 = vld [vmem:[%s458 + $0xc] sm:$0xf]
  %v463 = vld [vmem:[%s458 + $0x10] sm:$0xf]
  %v464 = vld [vmem:[%s458 + $0x14] sm:$0xf]
  %v465 = vld [vmem:[%s458 + $0x18] sm:$0xf]
  %v466 = vld [vmem:[%s458 + $0x1c] sm:$0xf]
  %v467 = vld [vmem:[%s458 + $0x20] sm:$0xf]
  %v468 = vld [vmem:[%s458 + $0x24] sm:$0xf]
  %v469 = vld [vmem:[%s458 + $0x28] sm:$0xf]
  %v470 = vld [vmem:[%s458 + $0x2c] sm:$0xf]
  %v471 = vld [vmem:[%s458 + $0x30] sm:$0xf]
  %v472 = vld [vmem:[%s458 + $0x34] sm:$0xf]
  %v473 = vld [vmem:[%s458 + $0x38] sm:$0xf]
  %v474 = vld [vmem:[%s458 + $0x3c] sm:$0xf]
  %v475 = vld [vmem:[%s458 + $0x40] sm:$0xf]
  %v476 = vld [vmem:[%s458 + $0x44] sm:$0xf]
  %v477 = vld [vmem:[%s458 + $0x48] sm:$0xf]
  %v478 = vld [vmem:[%s458 + $0x4c] sm:$0xf]
  %v479 = vld [vmem:[%s458 + $0x50] sm:$0xf]
  %v480 = vld [vmem:[%s458 + $0x54] sm:$0xf]
  %v481 = vld [vmem:[%s458 + $0x58] sm:$0xf]
  %v482 = vld [vmem:[%s458 + $0x5c] sm:$0xf]
  %v483 = vld [vmem:[%s458 + $0x60] sm:$0xf]
  %v484 = vld [vmem:[%s458 + $0x64] sm:$0xf]
  %v485 = vld [vmem:[%s458 + $0x68] sm:$0xf]
  %v486 = vld [vmem:[%s458 + $0x6c] sm:$0xf]
  %v487 = vld [vmem:[%s458 + $0x70] sm:$0xf]
  %v488 = vld [vmem:[%s458 + $0x74] sm:$0xf]
  %v489 = vld [vmem:[%s458 + $0x78] sm:$0xf]
  %v490 = vld [vmem:[%s458 + $0x7c] sm:$0xf]
  %v523 = vunpack.c.l.b16 %v459
  %v524 = vunpack.c.l.b16 %v460
  %v525 = vunpack.c.l.b16 %v461
  %v526 = vunpack.c.l.b16 %v462
  %v527 = vunpack.c.l.b16 %v463
  %v528 = vunpack.c.l.b16 %v464
  %v529 = vunpack.c.l.b16 %v465
  %v530 = vunpack.c.l.b16 %v466
  %v531 = vunpack.c.l.b16 %v467
  %v532 = vunpack.c.l.b16 %v468
  %v533 = vunpack.c.l.b16 %v469
  %v534 = vunpack.c.l.b16 %v470
  %v535 = vunpack.c.l.b16 %v471
  %v536 = vunpack.c.l.b16 %v472
  %v537 = vunpack.c.l.b16 %v473
  %v538 = vunpack.c.l.b16 %v474
  %v539 = vunpack.c.l.b16 %v475
  %v540 = vunpack.c.l.b16 %v476
  %v541 = vunpack.c.l.b16 %v477
  %v542 = vunpack.c.l.b16 %v478
  %v543 = vunpack.c.l.b16 %v479
  %v544 = vunpack.c.l.b16 %v480
  %v545 = vunpack.c.l.b16 %v481
  %v546 = vunpack.c.l.b16 %v482
  %v547 = vunpack.c.l.b16 %v483
  %v548 = vunpack.c.l.b16 %v484
  %v549 = vunpack.c.l.b16 %v485
  %v550 = vunpack.c.l.b16 %v486
  %v551 = vunpack.c.l.b16 %v487
  %v552 = vunpack.c.l.b16 %v488
  %v553 = vunpack.c.l.b16 %v489
  %v554 = vunpack.c.l.b16 %v490
  %v555 = vpack.c.b16 %v524, %v523
  %v556 = vpack.c.b16 %v526, %v525
  %v557 = vpack.c.b16 %v528, %v527
  %v558 = vpack.c.b16 %v530, %v529
  %v559 = vpack.c.b16 %v532, %v531
  %v560 = vpack.c.b16 %v534, %v533
  %v561 = vpack.c.b16 %v536, %v535
  %v562 = vpack.c.b16 %v538, %v537
  %v563 = vpack.c.b16 %v540, %v539
  %v564 = vpack.c.b16 %v542, %v541
  %v565 = vpack.c.b16 %v544, %v543
  %v566 = vpack.c.b16 %v546, %v545
  %v567 = vpack.c.b16 %v548, %v547
  %v568 = vpack.c.b16 %v550, %v549
  %v569 = vpack.c.b16 %v552, %v551
  %v570 = vpack.c.b16 %v554, %v553
  %587 = vmatprep.subr.bf16.mxu0 0
  %588 = vmatpush1.bf16.msra.mxu0 %v555
  %589 = vmatprep.subr.bf16.mxu0 0
  %590 = vmatpush1.bf16.msra.mxu0 %v556
  %591 = vmatprep.subr.bf16.mxu0 0
  %592 = vmatpush1.bf16.msra.mxu0 %v557
  %593 = vmatprep.subr.bf16.mxu0 0
  %594 = vmatpush1.bf16.msra.mxu0 %v558
  %595 = vmatprep.subr.bf16.mxu0 0
  %596 = vmatpush1.bf16.msra.mxu0 %v559
  %597 = vmatprep.subr.bf16.mxu0 0
  %598 = vmatpush1.bf16.msra.mxu0 %v560
  %599 = vmatprep.subr.bf16.mxu0 0
  %600 = vmatpush1.bf16.msra.mxu0 %v561
  %601 = vmatprep.subr.bf16.mxu0 0
  %602 = vmatpush1.bf16.msra.mxu0 %v562
  %603 = vmatprep.subr.bf16.mxu0 0
  %604 = vmatpush1.bf16.msra.mxu0 %v563
  %605 = vmatprep.subr.bf16.mxu0 0
  %606 = vmatpush1.bf16.msra.mxu0 %v564
  %607 = vmatprep.subr.bf16.mxu0 0
  %608 = vmatpush1.bf16.msra.mxu0 %v565
  %609 = vmatprep.subr.bf16.mxu0 0
  %610 = vmatpush1.bf16.msra.mxu0 %v566
  %611 = vmatprep.subr.bf16.mxu0 0
  %612 = vmatpush1.bf16.msra.mxu0 %v567
  %613 = vmatprep.subr.bf16.mxu0 0
  %614 = vmatpush1.bf16.msra.mxu0 %v568
  %615 = vmatprep.subr.bf16.mxu0 0
  %616 = vmatpush1.bf16.msra.mxu0 %v569
  %617 = vmatprep.subr.bf16.mxu0 0
  %618 = vmatpush1.bf16.msra.mxu0 %v570
  %619 = vmatprep.mubr.bf16.mxu0 %v80
  %620 = vmatmul.mubr.bf16.gmra.mrb[0].mxu0 %v79
  %v621 = vpop.f32.mrb[0].mxu0
  %v622 = vadd.f32 0.0, %v621
  %v623 = vpop.f32.mrb[0].mxu0
  %v624 = vpop.f32.mrb[0].mxu0
  %v625 = vadd.f32 0.0, %v624
  %v626 = vpop.f32.mrb[0].mxu0
  %627 = vmatprep.mubr.bf16.mxu0 %v82
  %628 = vmatmul.mubr.bf16.gmra.mrb[0].mxu0 %v81
  %v629 = vpop.f32.mrb[0].mxu0
  %v630 = vadd.f32 0.0, %v629
  %v631 = vpop.f32.mrb[0].mxu0
  %v632 = vpop.f32.mrb[0].mxu0
  %v633 = vadd.f32 0.0, %v632
  %v634 = vpop.f32.mrb[0].mxu0
  %635 = vmatprep.mubr.bf16.mxu0 %v84
  %636 = vmatmul.mubr.bf16.gmra.mrb[0].mxu0 %v83
  %v637 = vpop.f32.mrb[0].mxu0
  %v638 = vadd.f32 0.0, %v637
  %v639 = vpop.f32.mrb[0].mxu0
  %v640 = vpop.f32.mrb[0].mxu0
  %v641 = vadd.f32 0.0, %v640
  %v642 = vpop.f32.mrb[0].mxu0
  %643 = vmatprep.mubr.bf16.mxu0 %v86
  %644 = vmatmul.mubr.bf16.gmra.mrb[0].mxu0 %v85
  %v645 = vpop.f32.mrb[0].mxu0
  %v646 = vadd.f32 0.0, %v645
  %v647 = vpop.f32.mrb[0].mxu0
  %v648 = vpop.f32.mrb[0].mxu0
  %v649 = vadd.f32 0.0, %v648
  %v650 = vpop.f32.mrb[0].mxu0
  %651 = vdwg.mxu0
  %v652 = vmax.f32 %v450, %v622
  %v653 = vmax.f32 %v451, %v625
  %v654 = vmax.f32 %v452, %v630
  %v655 = vmax.f32 %v453, %v633
  %v656 = vmax.f32 %v454, %v638
  %v657 = vmax.f32 %v455, %v641
  %v658 = vmax.f32 %v456, %v646
  %v659 = vmax.f32 %v457, %v649
  %s660 = scalar_lea.vmem %s1, 384
  %v661 = vld [vmem:[%s660] sm:$0xf]
  %v662 = vld [vmem:[%s660 + $0x4] sm:$0xf]
  %v663 = vld [vmem:[%s660 + $0x8] sm:$0xf]
  %v664 = vld [vmem:[%s660 + $0xc] sm:$0xf]
  %v665 = vld [vmem:[%s660 + $0x10] sm:$0xf]
  %v666 = vld [vmem:[%s660 + $0x14] sm:$0xf]
  %v667 = vld [vmem:[%s660 + $0x18] sm:$0xf]
  %v668 = vld [vmem:[%s660 + $0x1c] sm:$0xf]
  %v669 = vld [vmem:[%s660 + $0x20] sm:$0xf]
  %v670 = vld [vmem:[%s660 + $0x24] sm:$0xf]
  %v671 = vld [vmem:[%s660 + $0x28] sm:$0xf]
  %v672 = vld [vmem:[%s660 + $0x2c] sm:$0xf]
  %v673 = vld [vmem:[%s660 + $0x30] sm:$0xf]
  %v674 = vld [vmem:[%s660 + $0x34] sm:$0xf]
  %v675 = vld [vmem:[%s660 + $0x38] sm:$0xf]
  %v676 = vld [vmem:[%s660 + $0x3c] sm:$0xf]
  %v677 = vld [vmem:[%s660 + $0x40] sm:$0xf]
  %v678 = vld [vmem:[%s660 + $0x44] sm:$0xf]
  %v679 = vld [vmem:[%s660 + $0x48] sm:$0xf]
  %v680 = vld [vmem:[%s660 + $0x4c] sm:$0xf]
  %v681 = vld [vmem:[%s660 + $0x50] sm:$0xf]
  %v682 = vld [vmem:[%s660 + $0x54] sm:$0xf]
  %v683 = vld [vmem:[%s660 + $0x58] sm:$0xf]
  %v684 = vld [vmem:[%s660 + $0x5c] sm:$0xf]
  %v685 = vld [vmem:[%s660 + $0x60] sm:$0xf]
  %v686 = vld [vmem:[%s660 + $0x64] sm:$0xf]
  %v687 = vld [vmem:[%s660 + $0x68] sm:$0xf]
  %v688 = vld [vmem:[%s660 + $0x6c] sm:$0xf]
  %v689 = vld [vmem:[%s660 + $0x70] sm:$0xf]
  %v690 = vld [vmem:[%s660 + $0x74] sm:$0xf]
  %v691 = vld [vmem:[%s660 + $0x78] sm:$0xf]
  %v692 = vld [vmem:[%s660 + $0x7c] sm:$0xf]
  %v725 = vunpack.c.l.b16 %v661
  %v726 = vunpack.c.l.b16 %v662
  %v727 = vunpack.c.l.b16 %v663
  %v728 = vunpack.c.l.b16 %v664
  %v729 = vunpack.c.l.b16 %v665
  %v730 = vunpack.c.l.b16 %v666
  %v731 = vunpack.c.l.b16 %v667
  %v732 = vunpack.c.l.b16 %v668
  %v733 = vunpack.c.l.b16 %v669
  %v734 = vunpack.c.l.b16 %v670
  %v735 = vunpack.c.l.b16 %v671
  %v736 = vunpack.c.l.b16 %v672
  %v737 = vunpack.c.l.b16 %v673
  %v738 = vunpack.c.l.b16 %v674
  %v739 = vunpack.c.l.b16 %v675
  %v740 = vunpack.c.l.b16 %v676
  %v741 = vunpack.c.l.b16 %v677
  %v742 = vunpack.c.l.b16 %v678
  %v743 = vunpack.c.l.b16 %v679
  %v744 = vunpack.c.l.b16 %v680
  %v745 = vunpack.c.l.b16 %v681
  %v746 = vunpack.c.l.b16 %v682
  %v747 = vunpack.c.l.b16 %v683
  %v748 = vunpack.c.l.b16 %v684
  %v749 = vunpack.c.l.b16 %v685
  %v750 = vunpack.c.l.b16 %v686
  %v751 = vunpack.c.l.b16 %v687
  %v752 = vunpack.c.l.b16 %v688
  %v753 = vunpack.c.l.b16 %v689
  %v754 = vunpack.c.l.b16 %v690
  %v755 = vunpack.c.l.b16 %v691
  %v756 = vunpack.c.l.b16 %v692
  %v757 = vpack.c.b16 %v726, %v725
  %v758 = vpack.c.b16 %v728, %v727
  %v759 = vpack.c.b16 %v730, %v729
  %v760 = vpack.c.b16 %v732, %v731
  %v761 = vpack.c.b16 %v734, %v733
  %v762 = vpack.c.b16 %v736, %v735
  %v763 = vpack.c.b16 %v738, %v737
  %v764 = vpack.c.b16 %v740, %v739
  %v765 = vpack.c.b16 %v742, %v741
  %v766 = vpack.c.b16 %v744, %v743
  %v767 = vpack.c.b16 %v746, %v745
  %v768 = vpack.c.b16 %v748, %v747
  %v769 = vpack.c.b16 %v750, %v749
  %v770 = vpack.c.b16 %v752, %v751
  %v771 = vpack.c.b16 %v754, %v753
  %v772 = vpack.c.b16 %v756, %v755
  %789 = vmatprep.subr.bf16.mxu0 0
  %790 = vmatpush1.bf16.msra.mxu0 %v757
  %791 = vmatprep.subr.bf16.mxu0 0
  %792 = vmatpush1.bf16.msra.mxu0 %v758
  %793 = vmatprep.subr.bf16.mxu0 0
  %794 = vmatpush1.bf16.msra.mxu0 %v759
  %795 = vmatprep.subr.bf16.mxu0 0
  %796 = vmatpush1.bf16.msra.mxu0 %v760
  %797 = vmatprep.subr.bf16.mxu0 0
  %798 = vmatpush1.bf16.msra.mxu0 %v761
  %799 = vmatprep.subr.bf16.mxu0 0
  %800 = vmatpush1.bf16.msra.mxu0 %v762
  %801 = vmatprep.subr.bf16.mxu0 0
  %802 = vmatpush1.bf16.msra.mxu0 %v763
  %803 = vmatprep.subr.bf16.mxu0 0
  %804 = vmatpush1.bf16.msra.mxu0 %v764
  %805 = vmatprep.subr.bf16.mxu0 0
  %806 = vmatpush1.bf16.msra.mxu0 %v765
  %807 = vmatprep.subr.bf16.mxu0 0
  %808 = vmatpush1.bf16.msra.mxu0 %v766
  %809 = vmatprep.subr.bf16.mxu0 0
  %810 = vmatpush1.bf16.msra.mxu0 %v767
  %811 = vmatprep.subr.bf16.mxu0 0
  %812 = vmatpush1.bf16.msra.mxu0 %v768
  %813 = vmatprep.subr.bf16.mxu0 0
  %814 = vmatpush1.bf16.msra.mxu0 %v769
  %815 = vmatprep.subr.bf16.mxu0 0
  %816 = vmatpush1.bf16.msra.mxu0 %v770
  %817 = vmatprep.subr.bf16.mxu0 0
  %818 = vmatpush1.bf16.msra.mxu0 %v771
  %819 = vmatprep.subr.bf16.mxu0 0
  %820 = vmatpush1.bf16.msra.mxu0 %v772
  %821 = vmatprep.mubr.bf16.mxu0 %v80
  %822 = vmatmul.mubr.bf16.gmra.mrb[0].mxu0 %v79
  %v823 = vpop.f32.mrb[0].mxu0
  %v824 = vadd.f32 0.0, %v823
  %v825 = vpop.f32.mrb[0].mxu0
  %v826 = vpop.f32.mrb[0].mxu0
  %v827 = vadd.f32 0.0, %v826
  %v828 = vpop.f32.mrb[0].mxu0
  %829 = vmatprep.mubr.bf16.mxu0 %v82
  %830 = vmatmul.mubr.bf16.gmra.mrb[0].mxu0 %v81
  %v831 = vpop.f32.mrb[0].mxu0
  %v832 = vadd.f32 0.0, %v831
  %v833 = vpop.f32.mrb[0].mxu0
  %v834 = vpop.f32.mrb[0].mxu0
  %v835 = vadd.f32 0.0, %v834
  %v836 = vpop.f32.mrb[0].mxu0
  %837 = vmatprep.mubr.bf16.mxu0 %v84
  %838 = vmatmul.mubr.bf16.gmra.mrb[0].mxu0 %v83
  %v839 = vpop.f32.mrb[0].mxu0
  %v840 = vadd.f32 0.0, %v839
  %v841 = vpop.f32.mrb[0].mxu0
  %v842 = vpop.f32.mrb[0].mxu0
  %v843 = vadd.f32 0.0, %v842
  %v844 = vpop.f32.mrb[0].mxu0
  %845 = vmatprep.mubr.bf16.mxu0 %v86
  %846 = vmatmul.mubr.bf16.gmra.mrb[0].mxu0 %v85
  %v847 = vpop.f32.mrb[0].mxu0
  %v848 = vadd.f32 0.0, %v847
  %v849 = vpop.f32.mrb[0].mxu0
  %v850 = vpop.f32.mrb[0].mxu0
  %v851 = vadd.f32 0.0, %v850
  %v852 = vpop.f32.mrb[0].mxu0
  %853 = vdwg.mxu0
  %v854 = vmax.f32 %v652, %v824
  %v855 = vmax.f32 %v653, %v827
  %v856 = vmax.f32 %v654, %v832
  %v857 = vmax.f32 %v655, %v835
  %v858 = vmax.f32 %v656, %v840
  %v859 = vmax.f32 %v657, %v843
  %v860 = vmax.f32 %v658, %v848
  %v861 = vmax.f32 %v659, %v851
  %s862 = scalar_lea.vmem %s1, 512
  %v863 = vld [vmem:[%s862] sm:$0xf]
  %v864 = vld [vmem:[%s862 + $0x4] sm:$0xf]
  %v865 = vld [vmem:[%s862 + $0x8] sm:$0xf]
  %v866 = vld [vmem:[%s862 + $0xc] sm:$0xf]
  %v867 = vld [vmem:[%s862 + $0x10] sm:$0xf]
  %v868 = vld [vmem:[%s862 + $0x14] sm:$0xf]
  %v869 = vld [vmem:[%s862 + $0x18] sm:$0xf]
  %v870 = vld [vmem:[%s862 + $0x1c] sm:$0xf]
  %v871 = vld [vmem:[%s862 + $0x20] sm:$0xf]
  %v872 = vld [vmem:[%s862 + $0x24] sm:$0xf]
  %v873 = vld [vmem:[%s862 + $0x28] sm:$0xf]
  %v874 = vld [vmem:[%s862 + $0x2c] sm:$0xf]
  %v875 = vld [vmem:[%s862 + $0x30] sm:$0xf]
  %v876 = vld [vmem:[%s862 + $0x34] sm:$0xf]
  %v877 = vld [vmem:[%s862 + $0x38] sm:$0xf]
  %v878 = vld [vmem:[%s862 + $0x3c] sm:$0xf]
  %v879 = vld [vmem:[%s862 + $0x40] sm:$0xf]
  %v880 = vld [vmem:[%s862 + $0x44] sm:$0xf]
  %v881 = vld [vmem:[%s862 + $0x48] sm:$0xf]
  %v882 = vld [vmem:[%s862 + $0x4c] sm:$0xf]
  %v883 = vld [vmem:[%s862 + $0x50] sm:$0xf]
  %v884 = vld [vmem:[%s862 + $0x54] sm:$0xf]
  %v885 = vld [vmem:[%s862 + $0x58] sm:$0xf]
  %v886 = vld [vmem:[%s862 + $0x5c] sm:$0xf]
  %v887 = vld [vmem:[%s862 + $0x60] sm:$0xf]
  %v888 = vld [vmem:[%s862 + $0x64] sm:$0xf]
  %v889 = vld [vmem:[%s862 + $0x68] sm:$0xf]
  %v890 = vld [vmem:[%s862 + $0x6c] sm:$0xf]
  %v891 = vld [vmem:[%s862 + $0x70] sm:$0xf]
  %v892 = vld [vmem:[%s862 + $0x74] sm:$0xf]
  %v893 = vld [vmem:[%s862 + $0x78] sm:$0xf]
  %v894 = vld [vmem:[%s862 + $0x7c] sm:$0xf]
  %v927 = vunpack.c.l.b16 %v863
  %v928 = vunpack.c.l.b16 %v864
  %v929 = vunpack.c.l.b16 %v865
  %v930 = vunpack.c.l.b16 %v866
  %v931 = vunpack.c.l.b16 %v867
  %v932 = vunpack.c.l.b16 %v868
  %v933 = vunpack.c.l.b16 %v869
  %v934 = vunpack.c.l.b16 %v870
  %v935 = vunpack.c.l.b16 %v871
  %v936 = vunpack.c.l.b16 %v872
  %v937 = vunpack.c.l.b16 %v873
  %v938 = vunpack.c.l.b16 %v874
  %v939 = vunpack.c.l.b16 %v875
  %v940 = vunpack.c.l.b16 %v876
  %v941 = vunpack.c.l.b16 %v877
  %v942 = vunpack.c.l.b16 %v878
  %v943 = vunpack.c.l.b16 %v879
  %v944 = vunpack.c.l.b16 %v880
  %v945 = vunpack.c.l.b16 %v881
  %v946 = vunpack.c.l.b16 %v882
  %v947 = vunpack.c.l.b16 %v883
  %v948 = vunpack.c.l.b16 %v884
  %v949 = vunpack.c.l.b16 %v885
  %v950 = vunpack.c.l.b16 %v886
  %v951 = vunpack.c.l.b16 %v887
  %v952 = vunpack.c.l.b16 %v888
  %v953 = vunpack.c.l.b16 %v889
  %v954 = vunpack.c.l.b16 %v890
  %v955 = vunpack.c.l.b16 %v891
  %v956 = vunpack.c.l.b16 %v892
  %v957 = vunpack.c.l.b16 %v893
  %v958 = vunpack.c.l.b16 %v894
  %v959 = vpack.c.b16 %v928, %v927
  %v960 = vpack.c.b16 %v930, %v929
  %v961 = vpack.c.b16 %v932, %v931
  %v962 = vpack.c.b16 %v934, %v933
  %v963 = vpack.c.b16 %v936, %v935
  %v964 = vpack.c.b16 %v938, %v937
  %v965 = vpack.c.b16 %v940, %v939
  %v966 = vpack.c.b16 %v942, %v941
  %v967 = vpack.c.b16 %v944, %v943
  %v968 = vpack.c.b16 %v946, %v945
  %v969 = vpack.c.b16 %v948, %v947
  %v970 = vpack.c.b16 %v950, %v949
  %v971 = vpack.c.b16 %v952, %v951
  %v972 = vpack.c.b16 %v954, %v953
  %v973 = vpack.c.b16 %v956, %v955
  %v974 = vpack.c.b16 %v958, %v957
  %991 = vmatprep.subr.bf16.mxu0 0
  %992 = vmatpush1.bf16.msra.mxu0 %v959
  %993 = vmatprep.subr.bf16.mxu0 0
  %994 = vmatpush1.bf16.msra.mxu0 %v960
  %995 = vmatprep.subr.bf16.mxu0 0
  %996 = vmatpush1.bf16.msra.mxu0 %v961
  %997 = vmatprep.subr.bf16.mxu0 0
  %998 = vmatpush1.bf16.msra.mxu0 %v962
  %999 = vmatprep.subr.bf16.mxu0 0
  %1000 = vmatpush1.bf16.msra.mxu0 %v963
  %1001 = vmatprep.subr.bf16.mxu0 0
  %1002 = vmatpush1.bf16.msra.mxu0 %v964
  %1003 = vmatprep.subr.bf16.mxu0 0
  %1004 = vmatpush1.bf16.msra.mxu0 %v965
  %1005 = vmatprep.subr.bf16.mxu0 0
  %1006 = vmatpush1.bf16.msra.mxu0 %v966
  %1007 = vmatprep.subr.bf16.mxu0 0
  %1008 = vmatpush1.bf16.msra.mxu0 %v967
  %1009 = vmatprep.subr.bf16.mxu0 0
  %1010 = vmatpush1.bf16.msra.mxu0 %v968
  %1011 = vmatprep.subr.bf16.mxu0 0
  %1012 = vmatpush1.bf16.msra.mxu0 %v969
  %1013 = vmatprep.subr.bf16.mxu0 0
  %1014 = vmatpush1.bf16.msra.mxu0 %v970
  %1015 = vmatprep.subr.bf16.mxu0 0
  %1016 = vmatpush1.bf16.msra.mxu0 %v971
  %1017 = vmatprep.subr.bf16.mxu0 0
  %1018 = vmatpush1.bf16.msra.mxu0 %v972
  %1019 = vmatprep.subr.bf16.mxu0 0
  %1020 = vmatpush1.bf16.msra.mxu0 %v973
  %1021 = vmatprep.subr.bf16.mxu0 0
  %1022 = vmatpush1.bf16.msra.mxu0 %v974
  %1023 = vmatprep.mubr.bf16.mxu0 %v80
  %1024 = vmatmul.mubr.bf16.gmra.mrb[0].mxu0 %v79
  %v1025 = vpop.f32.mrb[0].mxu0
  %v1026 = vadd.f32 0.0, %v1025
  %v1027 = vpop.f32.mrb[0].mxu0
  %v1028 = vpop.f32.mrb[0].mxu0
  %v1029 = vadd.f32 0.0, %v1028
  %v1030 = vpop.f32.mrb[0].mxu0
  %1031 = vmatprep.mubr.bf16.mxu0 %v82
  %1032 = vmatmul.mubr.bf16.gmra.mrb[0].mxu0 %v81
  %v1033 = vpop.f32.mrb[0].mxu0
  %v1034 = vadd.f32 0.0, %v1033
  %v1035 = vpop.f32.mrb[0].mxu0
  %v1036 = vpop.f32.mrb[0].mxu0
  %v1037 = vadd.f32 0.0, %v1036
  %v1038 = vpop.f32.mrb[0].mxu0
  %1039 = vmatprep.mubr.bf16.mxu0 %v84
  %1040 = vmatmul.mubr.bf16.gmra.mrb[0].mxu0 %v83
  %v1041 = vpop.f32.mrb[0].mxu0
  %v1042 = vadd.f32 0.0, %v1041
  %v1043 = vpop.f32.mrb[0].mxu0
  %v1044 = vpop.f32.mrb[0].mxu0
  %v1045 = vadd.f32 0.0, %v1044
  %v1046 = vpop.f32.mrb[0].mxu0
  %1047 = vmatprep.mubr.bf16.mxu0 %v86
  %1048 = vmatmul.mubr.bf16.gmra.mrb[0].mxu0 %v85
  %v1049 = vpop.f32.mrb[0].mxu0
  %v1050 = vadd.f32 0.0, %v1049
  %v1051 = vpop.f32.mrb[0].mxu0
  %v1052 = vpop.f32.mrb[0].mxu0
  %v1053 = vadd.f32 0.0, %v1052
  %v1054 = vpop.f32.mrb[0].mxu0
  %1055 = vdwg.mxu0
  %v1056 = vmax.f32 %v854, %v1026
  %v1057 = vmax.f32 %v855, %v1029
  %v1058 = vmax.f32 %v856, %v1034
  %v1059 = vmax.f32 %v857, %v1037
  %v1060 = vmax.f32 %v858, %v1042
  %v1061 = vmax.f32 %v859, %v1045
  %v1062 = vmax.f32 %v860, %v1050
  %v1063 = vmax.f32 %v861, %v1053
  %s1064 = scalar_lea.vmem %s1, 640
  %v1065 = vld [vmem:[%s1064] sm:$0xf]
  %v1066 = vld [vmem:[%s1064 + $0x4] sm:$0xf]
  %v1067 = vld [vmem:[%s1064 + $0x8] sm:$0xf]
  %v1068 = vld [vmem:[%s1064 + $0xc] sm:$0xf]
  %v1069 = vld [vmem:[%s1064 + $0x10] sm:$0xf]
  %v1070 = vld [vmem:[%s1064 + $0x14] sm:$0xf]
  %v1071 = vld [vmem:[%s1064 + $0x18] sm:$0xf]
  %v1072 = vld [vmem:[%s1064 + $0x1c] sm:$0xf]
  %v1073 = vld [vmem:[%s1064 + $0x20] sm:$0xf]
  %v1074 = vld [vmem:[%s1064 + $0x24] sm:$0xf]
  %v1075 = vld [vmem:[%s1064 + $0x28] sm:$0xf]
  %v1076 = vld [vmem:[%s1064 + $0x2c] sm:$0xf]
  %v1077 = vld [vmem:[%s1064 + $0x30] sm:$0xf]
  %v1078 = vld [vmem:[%s1064 + $0x34] sm:$0xf]
  %v1079 = vld [vmem:[%s1064 + $0x38] sm:$0xf]
  %v1080 = vld [vmem:[%s1064 + $0x3c] sm:$0xf]
  %v1081 = vld [vmem:[%s1064 + $0x40] sm:$0xf]
  %v1082 = vld [vmem:[%s1064 + $0x44] sm:$0xf]
  %v1083 = vld [vmem:[%s1064 + $0x48] sm:$0xf]
  %v1084 = vld [vmem:[%s1064 + $0x4c] sm:$0xf]
  %v1085 = vld [vmem:[%s1064 + $0x50] sm:$0xf]
  %v1086 = vld [vmem:[%s1064 + $0x54] sm:$0xf]
  %v1087 = vld [vmem:[%s1064 + $0x58] sm:$0xf]
  %v1088 = vld [vmem:[%s1064 + $0x5c] sm:$0xf]
  %v1089 = vld [vmem:[%s1064 + $0x60] sm:$0xf]
  %v1090 = vld [vmem:[%s1064 + $0x64] sm:$0xf]
  %v1091 = vld [vmem:[%s1064 + $0x68] sm:$0xf]
  %v1092 = vld [vmem:[%s1064 + $0x6c] sm:$0xf]
  %v1093 = vld [vmem:[%s1064 + $0x70] sm:$0xf]
  %v1094 = vld [vmem:[%s1064 + $0x74] sm:$0xf]
  %v1095 = vld [vmem:[%s1064 + $0x78] sm:$0xf]
  %v1096 = vld [vmem:[%s1064 + $0x7c] sm:$0xf]
  %v1129 = vunpack.c.l.b16 %v1065
  %v1130 = vunpack.c.l.b16 %v1066
  %v1131 = vunpack.c.l.b16 %v1067
  %v1132 = vunpack.c.l.b16 %v1068
  %v1133 = vunpack.c.l.b16 %v1069
  %v1134 = vunpack.c.l.b16 %v1070
  %v1135 = vunpack.c.l.b16 %v1071
  %v1136 = vunpack.c.l.b16 %v1072
  %v1137 = vunpack.c.l.b16 %v1073
  %v1138 = vunpack.c.l.b16 %v1074
  %v1139 = vunpack.c.l.b16 %v1075
  %v1140 = vunpack.c.l.b16 %v1076
  %v1141 = vunpack.c.l.b16 %v1077
  %v1142 = vunpack.c.l.b16 %v1078
  %v1143 = vunpack.c.l.b16 %v1079
  %v1144 = vunpack.c.l.b16 %v1080
  %v1145 = vunpack.c.l.b16 %v1081
  %v1146 = vunpack.c.l.b16 %v1082
  %v1147 = vunpack.c.l.b16 %v1083
  %v1148 = vunpack.c.l.b16 %v1084
  %v1149 = vunpack.c.l.b16 %v1085
  %v1150 = vunpack.c.l.b16 %v1086
  %v1151 = vunpack.c.l.b16 %v1087
  %v1152 = vunpack.c.l.b16 %v1088
  %v1153 = vunpack.c.l.b16 %v1089
  %v1154 = vunpack.c.l.b16 %v1090
  %v1155 = vunpack.c.l.b16 %v1091
  %v1156 = vunpack.c.l.b16 %v1092
  %v1157 = vunpack.c.l.b16 %v1093
  %v1158 = vunpack.c.l.b16 %v1094
  %v1159 = vunpack.c.l.b16 %v1095
  %v1160 = vunpack.c.l.b16 %v1096
  %v1161 = vpack.c.b16 %v1130, %v1129
  %v1162 = vpack.c.b16 %v1132, %v1131
  %v1163 = vpack.c.b16 %v1134, %v1133
  %v1164 = vpack.c.b16 %v1136, %v1135
  %v1165 = vpack.c.b16 %v1138, %v1137
  %v1166 = vpack.c.b16 %v1140, %v1139
  %v1167 = vpack.c.b16 %v1142, %v1141
  %v1168 = vpack.c.b16 %v1144, %v1143
  %v1169 = vpack.c.b16 %v1146, %v1145
  %v1170 = vpack.c.b16 %v1148, %v1147
  %v1171 = vpack.c.b16 %v1150, %v1149
  %v1172 = vpack.c.b16 %v1152, %v1151
  %v1173 = vpack.c.b16 %v1154, %v1153
  %v1174 = vpack.c.b16 %v1156, %v1155
  %v1175 = vpack.c.b16 %v1158, %v1157
  %v1176 = vpack.c.b16 %v1160, %v1159
  %1193 = vmatprep.subr.bf16.mxu0 0
  %1194 = vmatpush1.bf16.msra.mxu0 %v1161
  %1195 = vmatprep.subr.bf16.mxu0 0
  %1196 = vmatpush1.bf16.msra.mxu0 %v1162
  %1197 = vmatprep.subr.bf16.mxu0 0
  %1198 = vmatpush1.bf16.msra.mxu0 %v1163
  %1199 = vmatprep.subr.bf16.mxu0 0
  %1200 = vmatpush1.bf16.msra.mxu0 %v1164
  %1201 = vmatprep.subr.bf16.mxu0 0
  %1202 = vmatpush1.bf16.msra.mxu0 %v1165
  %1203 = vmatprep.subr.bf16.mxu0 0
  %1204 = vmatpush1.bf16.msra.mxu0 %v1166
  %1205 = vmatprep.subr.bf16.mxu0 0
  %1206 = vmatpush1.bf16.msra.mxu0 %v1167
  %1207 = vmatprep.subr.bf16.mxu0 0
  %1208 = vmatpush1.bf16.msra.mxu0 %v1168
  %1209 = vmatprep.subr.bf16.mxu0 0
  %1210 = vmatpush1.bf16.msra.mxu0 %v1169
  %1211 = vmatprep.subr.bf16.mxu0 0
  %1212 = vmatpush1.bf16.msra.mxu0 %v1170
  %1213 = vmatprep.subr.bf16.mxu0 0
  %1214 = vmatpush1.bf16.msra.mxu0 %v1171
  %1215 = vmatprep.subr.bf16.mxu0 0
  %1216 = vmatpush1.bf16.msra.mxu0 %v1172
  %1217 = vmatprep.subr.bf16.mxu0 0
  %1218 = vmatpush1.bf16.msra.mxu0 %v1173
  %1219 = vmatprep.subr.bf16.mxu0 0
  %1220 = vmatpush1.bf16.msra.mxu0 %v1174
  %1221 = vmatprep.subr.bf16.mxu0 0
  %1222 = vmatpush1.bf16.msra.mxu0 %v1175
  %1223 = vmatprep.subr.bf16.mxu0 0
  %1224 = vmatpush1.bf16.msra.mxu0 %v1176
  %1225 = vmatprep.mubr.bf16.mxu0 %v80
  %1226 = vmatmul.mubr.bf16.gmra.mrb[0].mxu0 %v79
  %v1227 = vpop.f32.mrb[0].mxu0
  %v1228 = vadd.f32 0.0, %v1227
  %v1229 = vpop.f32.mrb[0].mxu0
  %v1230 = vpop.f32.mrb[0].mxu0
  %v1231 = vadd.f32 0.0, %v1230
  %v1232 = vpop.f32.mrb[0].mxu0
  %1233 = vmatprep.mubr.bf16.mxu0 %v82
  %1234 = vmatmul.mubr.bf16.gmra.mrb[0].mxu0 %v81
  %v1235 = vpop.f32.mrb[0].mxu0
  %v1236 = vadd.f32 0.0, %v1235
  %v1237 = vpop.f32.mrb[0].mxu0
  %v1238 = vpop.f32.mrb[0].mxu0
  %v1239 = vadd.f32 0.0, %v1238
  %v1240 = vpop.f32.mrb[0].mxu0
  %1241 = vmatprep.mubr.bf16.mxu0 %v84
  %1242 = vmatmul.mubr.bf16.gmra.mrb[0].mxu0 %v83
  %v1243 = vpop.f32.mrb[0].mxu0
  %v1244 = vadd.f32 0.0, %v1243
  %v1245 = vpop.f32.mrb[0].mxu0
  %v1246 = vpop.f32.mrb[0].mxu0
  %v1247 = vadd.f32 0.0, %v1246
  %v1248 = vpop.f32.mrb[0].mxu0
  %1249 = vmatprep.mubr.bf16.mxu0 %v86
  %1250 = vmatmul.mubr.bf16.gmra.mrb[0].mxu0 %v85
  %v1251 = vpop.f32.mrb[0].mxu0
  %v1252 = vadd.f32 0.0, %v1251
  %v1253 = vpop.f32.mrb[0].mxu0
  %v1254 = vpop.f32.mrb[0].mxu0
  %v1255 = vadd.f32 0.0, %v1254
  %v1256 = vpop.f32.mrb[0].mxu0
  %1257 = vdwg.mxu0
  %v1258 = vmax.f32 %v1056, %v1228
  %v1259 = vmax.f32 %v1057, %v1231
  %v1260 = vmax.f32 %v1058, %v1236
  %v1261 = vmax.f32 %v1059, %v1239
  %v1262 = vmax.f32 %v1060, %v1244
  %v1263 = vmax.f32 %v1061, %v1247
  %v1264 = vmax.f32 %v1062, %v1252
  %v1265 = vmax.f32 %v1063, %v1255
  %s1266 = scalar_lea.vmem %s1, 768
  %v1267 = vld [vmem:[%s1266] sm:$0xf]
  %v1268 = vld [vmem:[%s1266 + $0x4] sm:$0xf]
  %v1269 = vld [vmem:[%s1266 + $0x8] sm:$0xf]
  %v1270 = vld [vmem:[%s1266 + $0xc] sm:$0xf]
  %v1271 = vld [vmem:[%s1266 + $0x10] sm:$0xf]
  %v1272 = vld [vmem:[%s1266 + $0x14] sm:$0xf]
  %v1273 = vld [vmem:[%s1266 + $0x18] sm:$0xf]
  %v1274 = vld [vmem:[%s1266 + $0x1c] sm:$0xf]
  %v1275 = vld [vmem:[%s1266 + $0x20] sm:$0xf]
  %v1276 = vld [vmem:[%s1266 + $0x24] sm:$0xf]
  %v1277 = vld [vmem:[%s1266 + $0x28] sm:$0xf]
  %v1278 = vld [vmem:[%s1266 + $0x2c] sm:$0xf]
  %v1279 = vld [vmem:[%s1266 + $0x30] sm:$0xf]
  %v1280 = vld [vmem:[%s1266 + $0x34] sm:$0xf]
  %v1281 = vld [vmem:[%s1266 + $0x38] sm:$0xf]
  %v1282 = vld [vmem:[%s1266 + $0x3c] sm:$0xf]
  %v1283 = vld [vmem:[%s1266 + $0x40] sm:$0xf]
  %v1284 = vld [vmem:[%s1266 + $0x44] sm:$0xf]
  %v1285 = vld [vmem:[%s1266 + $0x48] sm:$0xf]
  %v1286 = vld [vmem:[%s1266 + $0x4c] sm:$0xf]
  %v1287 = vld [vmem:[%s1266 + $0x50] sm:$0xf]
  %v1288 = vld [vmem:[%s1266 + $0x54] sm:$0xf]
  %v1289 = vld [vmem:[%s1266 + $0x58] sm:$0xf]
  %v1290 = vld [vmem:[%s1266 + $0x5c] sm:$0xf]
  %v1291 = vld [vmem:[%s1266 + $0x60] sm:$0xf]
  %v1292 = vld [vmem:[%s1266 + $0x64] sm:$0xf]
  %v1293 = vld [vmem:[%s1266 + $0x68] sm:$0xf]
  %v1294 = vld [vmem:[%s1266 + $0x6c] sm:$0xf]
  %v1295 = vld [vmem:[%s1266 + $0x70] sm:$0xf]
  %v1296 = vld [vmem:[%s1266 + $0x74] sm:$0xf]
  %v1297 = vld [vmem:[%s1266 + $0x78] sm:$0xf]
  %v1298 = vld [vmem:[%s1266 + $0x7c] sm:$0xf]
  %v1331 = vunpack.c.l.b16 %v1267
  %v1332 = vunpack.c.l.b16 %v1268
  %v1333 = vunpack.c.l.b16 %v1269
  %v1334 = vunpack.c.l.b16 %v1270
  %v1335 = vunpack.c.l.b16 %v1271
  %v1336 = vunpack.c.l.b16 %v1272
  %v1337 = vunpack.c.l.b16 %v1273
  %v1338 = vunpack.c.l.b16 %v1274
  %v1339 = vunpack.c.l.b16 %v1275
  %v1340 = vunpack.c.l.b16 %v1276
  %v1341 = vunpack.c.l.b16 %v1277
  %v1342 = vunpack.c.l.b16 %v1278
  %v1343 = vunpack.c.l.b16 %v1279
  %v1344 = vunpack.c.l.b16 %v1280
  %v1345 = vunpack.c.l.b16 %v1281
  %v1346 = vunpack.c.l.b16 %v1282
  %v1347 = vunpack.c.l.b16 %v1283
  %v1348 = vunpack.c.l.b16 %v1284
  %v1349 = vunpack.c.l.b16 %v1285
  %v1350 = vunpack.c.l.b16 %v1286
  %v1351 = vunpack.c.l.b16 %v1287
  %v1352 = vunpack.c.l.b16 %v1288
  %v1353 = vunpack.c.l.b16 %v1289
  %v1354 = vunpack.c.l.b16 %v1290
  %v1355 = vunpack.c.l.b16 %v1291
  %v1356 = vunpack.c.l.b16 %v1292
  %v1357 = vunpack.c.l.b16 %v1293
  %v1358 = vunpack.c.l.b16 %v1294
  %v1359 = vunpack.c.l.b16 %v1295
  %v1360 = vunpack.c.l.b16 %v1296
  %v1361 = vunpack.c.l.b16 %v1297
  %v1362 = vunpack.c.l.b16 %v1298
  %v1363 = vpack.c.b16 %v1332, %v1331
  %v1364 = vpack.c.b16 %v1334, %v1333
  %v1365 = vpack.c.b16 %v1336, %v1335
  %v1366 = vpack.c.b16 %v1338, %v1337
  %v1367 = vpack.c.b16 %v1340, %v1339
  %v1368 = vpack.c.b16 %v1342, %v1341
  %v1369 = vpack.c.b16 %v1344, %v1343
  %v1370 = vpack.c.b16 %v1346, %v1345
  %v1371 = vpack.c.b16 %v1348, %v1347
  %v1372 = vpack.c.b16 %v1350, %v1349
  %v1373 = vpack.c.b16 %v1352, %v1351
  %v1374 = vpack.c.b16 %v1354, %v1353
  %v1375 = vpack.c.b16 %v1356, %v1355
  %v1376 = vpack.c.b16 %v1358, %v1357
  %v1377 = vpack.c.b16 %v1360, %v1359
  %v1378 = vpack.c.b16 %v1362, %v1361
  %1395 = vmatprep.subr.bf16.mxu0 0
  %1396 = vmatpush1.bf16.msra.mxu0 %v1363
  %1397 = vmatprep.subr.bf16.mxu0 0
  %1398 = vmatpush1.bf16.msra.mxu0 %v1364
  %1399 = vmatprep.subr.bf16.mxu0 0
  %1400 = vmatpush1.bf16.msra.mxu0 %v1365
  %1401 = vmatprep.subr.bf16.mxu0 0
  %1402 = vmatpush1.bf16.msra.mxu0 %v1366
  %1403 = vmatprep.subr.bf16.mxu0 0
  %1404 = vmatpush1.bf16.msra.mxu0 %v1367
  %1405 = vmatprep.subr.bf16.mxu0 0
  %1406 = vmatpush1.bf16.msra.mxu0 %v1368
  %1407 = vmatprep.subr.bf16.mxu0 0
  %1408 = vmatpush1.bf16.msra.mxu0 %v1369
  %1409 = vmatprep.subr.bf16.mxu0 0
  %1410 = vmatpush1.bf16.msra.mxu0 %v1370
  %1411 = vmatprep.subr.bf16.mxu0 0
  %1412 = vmatpush1.bf16.msra.mxu0 %v1371
  %1413 = vmatprep.subr.bf16.mxu0 0
  %1414 = vmatpush1.bf16.msra.mxu0 %v1372
  %1415 = vmatprep.subr.bf16.mxu0 0
  %1416 = vmatpush1.bf16.msra.mxu0 %v1373
  %1417 = vmatprep.subr.bf16.mxu0 0
  %1418 = vmatpush1.bf16.msra.mxu0 %v1374
  %1419 = vmatprep.subr.bf16.mxu0 0
  %1420 = vmatpush1.bf16.msra.mxu0 %v1375
  %1421 = vmatprep.subr.bf16.mxu0 0
  %1422 = vmatpush1.bf16.msra.mxu0 %v1376
  %1423 = vmatprep.subr.bf16.mxu0 0
  %1424 = vmatpush1.bf16.msra.mxu0 %v1377
  %1425 = vmatprep.subr.bf16.mxu0 0
  %1426 = vmatpush1.bf16.msra.mxu0 %v1378
  %1427 = vmatprep.mubr.bf16.mxu0 %v80
  %1428 = vmatmul.mubr.bf16.gmra.mrb[0].mxu0 %v79
  %v1429 = vpop.f32.mrb[0].mxu0
  %v1430 = vadd.f32 0.0, %v1429
  %v1431 = vpop.f32.mrb[0].mxu0
  %v1432 = vpop.f32.mrb[0].mxu0
  %v1433 = vadd.f32 0.0, %v1432
  %v1434 = vpop.f32.mrb[0].mxu0
  %1435 = vmatprep.mubr.bf16.mxu0 %v82
  %1436 = vmatmul.mubr.bf16.gmra.mrb[0].mxu0 %v81
  %v1437 = vpop.f32.mrb[0].mxu0
  %v1438 = vadd.f32 0.0, %v1437
  %v1439 = vpop.f32.mrb[0].mxu0
  %v1440 = vpop.f32.mrb[0].mxu0
  %v1441 = vadd.f32 0.0, %v1440
  %v1442 = vpop.f32.mrb[0].mxu0
  %1443 = vmatprep.mubr.bf16.mxu0 %v84
  %1444 = vmatmul.mubr.bf16.gmra.mrb[0].mxu0 %v83
  %v1445 = vpop.f32.mrb[0].mxu0
  %v1446 = vadd.f32 0.0, %v1445
  %v1447 = vpop.f32.mrb[0].mxu0
  %v1448 = vpop.f32.mrb[0].mxu0
  %v1449 = vadd.f32 0.0, %v1448
  %v1450 = vpop.f32.mrb[0].mxu0
  %1451 = vmatprep.mubr.bf16.mxu0 %v86
  %1452 = vmatmul.mubr.bf16.gmra.mrb[0].mxu0 %v85
  %v1453 = vpop.f32.mrb[0].mxu0
  %v1454 = vadd.f32 0.0, %v1453
  %v1455 = vpop.f32.mrb[0].mxu0
  %v1456 = vpop.f32.mrb[0].mxu0
  %v1457 = vadd.f32 0.0, %v1456
  %v1458 = vpop.f32.mrb[0].mxu0
  %1459 = vdwg.mxu0
  %v1460 = vmax.f32 %v1258, %v1430
  %v1461 = vmax.f32 %v1259, %v1433
  %v1462 = vmax.f32 %v1260, %v1438
  %v1463 = vmax.f32 %v1261, %v1441
  %v1464 = vmax.f32 %v1262, %v1446
  %v1465 = vmax.f32 %v1263, %v1449
  %v1466 = vmax.f32 %v1264, %v1454
  %v1467 = vmax.f32 %v1265, %v1457
  %s1468 = scalar_lea.vmem %s1, 896
  %v1469 = vld [vmem:[%s1468] sm:$0xf]
  %v1470 = vld [vmem:[%s1468 + $0x4] sm:$0xf]
  %v1471 = vld [vmem:[%s1468 + $0x8] sm:$0xf]
  %v1472 = vld [vmem:[%s1468 + $0xc] sm:$0xf]
  %v1473 = vld [vmem:[%s1468 + $0x10] sm:$0xf]
  %v1474 = vld [vmem:[%s1468 + $0x14] sm:$0xf]
  %v1475 = vld [vmem:[%s1468 + $0x18] sm:$0xf]
  %v1476 = vld [vmem:[%s1468 + $0x1c] sm:$0xf]
  %v1477 = vld [vmem:[%s1468 + $0x20] sm:$0xf]
  %v1478 = vld [vmem:[%s1468 + $0x24] sm:$0xf]
  %v1479 = vld [vmem:[%s1468 + $0x28] sm:$0xf]
  %v1480 = vld [vmem:[%s1468 + $0x2c] sm:$0xf]
  %v1481 = vld [vmem:[%s1468 + $0x30] sm:$0xf]
  %v1482 = vld [vmem:[%s1468 + $0x34] sm:$0xf]
  %v1483 = vld [vmem:[%s1468 + $0x38] sm:$0xf]
  %v1484 = vld [vmem:[%s1468 + $0x3c] sm:$0xf]
  %v1485 = vld [vmem:[%s1468 + $0x40] sm:$0xf]
  %v1486 = vld [vmem:[%s1468 + $0x44] sm:$0xf]
  %v1487 = vld [vmem:[%s1468 + $0x48] sm:$0xf]
  %v1488 = vld [vmem:[%s1468 + $0x4c] sm:$0xf]
  %v1489 = vld [vmem:[%s1468 + $0x50] sm:$0xf]
  %v1490 = vld [vmem:[%s1468 + $0x54] sm:$0xf]
  %v1491 = vld [vmem:[%s1468 + $0x58] sm:$0xf]
  %v1492 = vld [vmem:[%s1468 + $0x5c] sm:$0xf]
  %v1493 = vld [vmem:[%s1468 + $0x60] sm:$0xf]
  %v1494 = vld [vmem:[%s1468 + $0x64] sm:$0xf]
  %v1495 = vld [vmem:[%s1468 + $0x68] sm:$0xf]
  %v1496 = vld [vmem:[%s1468 + $0x6c] sm:$0xf]
  %v1497 = vld [vmem:[%s1468 + $0x70] sm:$0xf]
  %v1498 = vld [vmem:[%s1468 + $0x74] sm:$0xf]
  %v1499 = vld [vmem:[%s1468 + $0x78] sm:$0xf]
  %v1500 = vld [vmem:[%s1468 + $0x7c] sm:$0xf]
  %v1533 = vunpack.c.l.b16 %v1469
  %v1534 = vunpack.c.l.b16 %v1470
  %v1535 = vunpack.c.l.b16 %v1471
  %v1536 = vunpack.c.l.b16 %v1472
  %v1537 = vunpack.c.l.b16 %v1473
  %v1538 = vunpack.c.l.b16 %v1474
  %v1539 = vunpack.c.l.b16 %v1475
  %v1540 = vunpack.c.l.b16 %v1476
  %v1541 = vunpack.c.l.b16 %v1477
  %v1542 = vunpack.c.l.b16 %v1478
  %v1543 = vunpack.c.l.b16 %v1479
  %v1544 = vunpack.c.l.b16 %v1480
  %v1545 = vunpack.c.l.b16 %v1481
  %v1546 = vunpack.c.l.b16 %v1482
  %v1547 = vunpack.c.l.b16 %v1483
  %v1548 = vunpack.c.l.b16 %v1484
  %v1549 = vunpack.c.l.b16 %v1485
  %v1550 = vunpack.c.l.b16 %v1486
  %v1551 = vunpack.c.l.b16 %v1487
  %v1552 = vunpack.c.l.b16 %v1488
  %v1553 = vunpack.c.l.b16 %v1489
  %v1554 = vunpack.c.l.b16 %v1490
  %v1555 = vunpack.c.l.b16 %v1491
  %v1556 = vunpack.c.l.b16 %v1492
  %v1557 = vunpack.c.l.b16 %v1493
  %v1558 = vunpack.c.l.b16 %v1494
  %v1559 = vunpack.c.l.b16 %v1495
  %v1560 = vunpack.c.l.b16 %v1496
  %v1561 = vunpack.c.l.b16 %v1497
  %v1562 = vunpack.c.l.b16 %v1498
  %v1563 = vunpack.c.l.b16 %v1499
  %v1564 = vunpack.c.l.b16 %v1500
  %v1565 = vpack.c.b16 %v1534, %v1533
  %v1566 = vpack.c.b16 %v1536, %v1535
  %v1567 = vpack.c.b16 %v1538, %v1537
  %v1568 = vpack.c.b16 %v1540, %v1539
  %v1569 = vpack.c.b16 %v1542, %v1541
  %v1570 = vpack.c.b16 %v1544, %v1543
  %v1571 = vpack.c.b16 %v1546, %v1545
  %v1572 = vpack.c.b16 %v1548, %v1547
  %v1573 = vpack.c.b16 %v1550, %v1549
  %v1574 = vpack.c.b16 %v1552, %v1551
  %v1575 = vpack.c.b16 %v1554, %v1553
  %v1576 = vpack.c.b16 %v1556, %v1555
  %v1577 = vpack.c.b16 %v1558, %v1557
  %v1578 = vpack.c.b16 %v1560, %v1559
  %v1579 = vpack.c.b16 %v1562, %v1561
  %v1580 = vpack.c.b16 %v1564, %v1563
  %1597 = vmatprep.subr.bf16.mxu0 0
  %1598 = vmatpush1.bf16.msra.mxu0 %v1565
  %1599 = vmatprep.subr.bf16.mxu0 0
  %1600 = vmatpush1.bf16.msra.mxu0 %v1566
  %1601 = vmatprep.subr.bf16.mxu0 0
  %1602 = vmatpush1.bf16.msra.mxu0 %v1567
  %1603 = vmatprep.subr.bf16.mxu0 0
  %1604 = vmatpush1.bf16.msra.mxu0 %v1568
  %1605 = vmatprep.subr.bf16.mxu0 0
  %1606 = vmatpush1.bf16.msra.mxu0 %v1569
  %1607 = vmatprep.subr.bf16.mxu0 0
  %1608 = vmatpush1.bf16.msra.mxu0 %v1570
  %1609 = vmatprep.subr.bf16.mxu0 0
  %1610 = vmatpush1.bf16.msra.mxu0 %v1571
  %1611 = vmatprep.subr.bf16.mxu0 0
  %1612 = vmatpush1.bf16.msra.mxu0 %v1572
  %1613 = vmatprep.subr.bf16.mxu0 0
  %1614 = vmatpush1.bf16.msra.mxu0 %v1573
  %1615 = vmatprep.subr.bf16.mxu0 0
  %1616 = vmatpush1.bf16.msra.mxu0 %v1574
  %1617 = vmatprep.subr.bf16.mxu0 0
  %1618 = vmatpush1.bf16.msra.mxu0 %v1575
  %1619 = vmatprep.subr.bf16.mxu0 0
  %1620 = vmatpush1.bf16.msra.mxu0 %v1576
  %1621 = vmatprep.subr.bf16.mxu0 0
  %1622 = vmatpush1.bf16.msra.mxu0 %v1577
  %1623 = vmatprep.subr.bf16.mxu0 0
  %1624 = vmatpush1.bf16.msra.mxu0 %v1578
  %1625 = vmatprep.subr.bf16.mxu0 0
  %1626 = vmatpush1.bf16.msra.mxu0 %v1579
  %1627 = vmatprep.subr.bf16.mxu0 0
  %1628 = vmatpush1.bf16.msra.mxu0 %v1580
  %1629 = vmatprep.mubr.bf16.mxu0 %v80
  %1630 = vmatmul.mubr.bf16.gmra.mrb[0].mxu0 %v79
  %v1631 = vpop.f32.mrb[0].mxu0
  %v1632 = vadd.f32 0.0, %v1631
  %v1633 = vpop.f32.mrb[0].mxu0
  %v1634 = vpop.f32.mrb[0].mxu0
  %v1635 = vadd.f32 0.0, %v1634
  %v1636 = vpop.f32.mrb[0].mxu0
  %1637 = vmatprep.mubr.bf16.mxu0 %v82
  %1638 = vmatmul.mubr.bf16.gmra.mrb[0].mxu0 %v81
  %v1639 = vpop.f32.mrb[0].mxu0
  %v1640 = vadd.f32 0.0, %v1639
  %v1641 = vpop.f32.mrb[0].mxu0
  %v1642 = vpop.f32.mrb[0].mxu0
  %v1643 = vadd.f32 0.0, %v1642
  %v1644 = vpop.f32.mrb[0].mxu0
  %1645 = vmatprep.mubr.bf16.mxu0 %v84
  %1646 = vmatmul.mubr.bf16.gmra.mrb[0].mxu0 %v83
  %v1647 = vpop.f32.mrb[0].mxu0
  %v1648 = vadd.f32 0.0, %v1647
  %v1649 = vpop.f32.mrb[0].mxu0
  %v1650 = vpop.f32.mrb[0].mxu0
  %v1651 = vadd.f32 0.0, %v1650
  %v1652 = vpop.f32.mrb[0].mxu0
  %1653 = vmatprep.mubr.bf16.mxu0 %v86
  %1654 = vmatmul.mubr.bf16.gmra.mrb[0].mxu0 %v85
  %v1655 = vpop.f32.mrb[0].mxu0
  %v1656 = vadd.f32 0.0, %v1655
  %v1657 = vpop.f32.mrb[0].mxu0
  %v1658 = vpop.f32.mrb[0].mxu0
  %v1659 = vadd.f32 0.0, %v1658
  %v1660 = vpop.f32.mrb[0].mxu0
  %1661 = vdwg.mxu0
  %v1662 = vmax.f32 %v1460, %v1632
  %v1663 = vmax.f32 %v1461, %v1635
  %v1664 = vmax.f32 %v1462, %v1640
  %v1665 = vmax.f32 %v1463, %v1643
  %v1666 = vmax.f32 %v1464, %v1648
  %v1667 = vmax.f32 %v1465, %v1651
  %v1668 = vmax.f32 %v1466, %v1656
  %v1669 = vmax.f32 %v1467, %v1659
  %s1670 = scalar_lea.vmem %s1, 1024
  %v1671 = vld [vmem:[%s1670] sm:$0xf]
  %v1672 = vld [vmem:[%s1670 + $0x4] sm:$0xf]
  %v1673 = vld [vmem:[%s1670 + $0x8] sm:$0xf]
  %v1674 = vld [vmem:[%s1670 + $0xc] sm:$0xf]
  %v1675 = vld [vmem:[%s1670 + $0x10] sm:$0xf]
  %v1676 = vld [vmem:[%s1670 + $0x14] sm:$0xf]
  %v1677 = vld [vmem:[%s1670 + $0x18] sm:$0xf]
  %v1678 = vld [vmem:[%s1670 + $0x1c] sm:$0xf]
  %v1679 = vld [vmem:[%s1670 + $0x20] sm:$0xf]
  %v1680 = vld [vmem:[%s1670 + $0x24] sm:$0xf]
  %v1681 = vld [vmem:[%s1670 + $0x28] sm:$0xf]
  %v1682 = vld [vmem:[%s1670 + $0x2c] sm:$0xf]
  %v1683 = vld [vmem:[%s1670 + $0x30] sm:$0xf]
  %v1684 = vld [vmem:[%s1670 + $0x34] sm:$0xf]
  %v1685 = vld [vmem:[%s1670 + $0x38] sm:$0xf]
  %v1686 = vld [vmem:[%s1670 + $0x3c] sm:$0xf]
  %v1687 = vld [vmem:[%s1670 + $0x40] sm:$0xf]
  %v1688 = vld [vmem:[%s1670 + $0x44] sm:$0xf]
  %v1689 = vld [vmem:[%s1670 + $0x48] sm:$0xf]
  %v1690 = vld [vmem:[%s1670 + $0x4c] sm:$0xf]
  %v1691 = vld [vmem:[%s1670 + $0x50] sm:$0xf]
  %v1692 = vld [vmem:[%s1670 + $0x54] sm:$0xf]
  %v1693 = vld [vmem:[%s1670 + $0x58] sm:$0xf]
  %v1694 = vld [vmem:[%s1670 + $0x5c] sm:$0xf]
  %v1695 = vld [vmem:[%s1670 + $0x60] sm:$0xf]
  %v1696 = vld [vmem:[%s1670 + $0x64] sm:$0xf]
  %v1697 = vld [vmem:[%s1670 + $0x68] sm:$0xf]
  %v1698 = vld [vmem:[%s1670 + $0x6c] sm:$0xf]
  %v1699 = vld [vmem:[%s1670 + $0x70] sm:$0xf]
  %v1700 = vld [vmem:[%s1670 + $0x74] sm:$0xf]
  %v1701 = vld [vmem:[%s1670 + $0x78] sm:$0xf]
  %v1702 = vld [vmem:[%s1670 + $0x7c] sm:$0xf]
  %v1735 = vunpack.c.l.b16 %v1671
  %v1736 = vunpack.c.l.b16 %v1672
  %v1737 = vunpack.c.l.b16 %v1673
  %v1738 = vunpack.c.l.b16 %v1674
  %v1739 = vunpack.c.l.b16 %v1675
  %v1740 = vunpack.c.l.b16 %v1676
  %v1741 = vunpack.c.l.b16 %v1677
  %v1742 = vunpack.c.l.b16 %v1678
  %v1743 = vunpack.c.l.b16 %v1679
  %v1744 = vunpack.c.l.b16 %v1680
  %v1745 = vunpack.c.l.b16 %v1681
  %v1746 = vunpack.c.l.b16 %v1682
  %v1747 = vunpack.c.l.b16 %v1683
  %v1748 = vunpack.c.l.b16 %v1684
  %v1749 = vunpack.c.l.b16 %v1685
  %v1750 = vunpack.c.l.b16 %v1686
  %v1751 = vunpack.c.l.b16 %v1687
  %v1752 = vunpack.c.l.b16 %v1688
  %v1753 = vunpack.c.l.b16 %v1689
  %v1754 = vunpack.c.l.b16 %v1690
  %v1755 = vunpack.c.l.b16 %v1691
  %v1756 = vunpack.c.l.b16 %v1692
  %v1757 = vunpack.c.l.b16 %v1693
  %v1758 = vunpack.c.l.b16 %v1694
  %v1759 = vunpack.c.l.b16 %v1695
  %v1760 = vunpack.c.l.b16 %v1696
  %v1761 = vunpack.c.l.b16 %v1697
  %v1762 = vunpack.c.l.b16 %v1698
  %v1763 = vunpack.c.l.b16 %v1699
  %v1764 = vunpack.c.l.b16 %v1700
  %v1765 = vunpack.c.l.b16 %v1701
  %v1766 = vunpack.c.l.b16 %v1702
  %v1767 = vpack.c.b16 %v1736, %v1735
  %v1768 = vpack.c.b16 %v1738, %v1737
  %v1769 = vpack.c.b16 %v1740, %v1739
  %v1770 = vpack.c.b16 %v1742, %v1741
  %v1771 = vpack.c.b16 %v1744, %v1743
  %v1772 = vpack.c.b16 %v1746, %v1745
  %v1773 = vpack.c.b16 %v1748, %v1747
  %v1774 = vpack.c.b16 %v1750, %v1749
  %v1775 = vpack.c.b16 %v1752, %v1751
  %v1776 = vpack.c.b16 %v1754, %v1753
  %v1777 = vpack.c.b16 %v1756, %v1755
  %v1778 = vpack.c.b16 %v1758, %v1757
  %v1779 = vpack.c.b16 %v1760, %v1759
  %v1780 = vpack.c.b16 %v1762, %v1761
  %v1781 = vpack.c.b16 %v1764, %v1763
  %v1782 = vpack.c.b16 %v1766, %v1765
  %1799 = vmatprep.subr.bf16.mxu0 0
  %1800 = vmatpush1.bf16.msra.mxu0 %v1767
  %1801 = vmatprep.subr.bf16.mxu0 0
  %1802 = vmatpush1.bf16.msra.mxu0 %v1768
  %1803 = vmatprep.subr.bf16.mxu0 0
  %1804 = vmatpush1.bf16.msra.mxu0 %v1769
  %1805 = vmatprep.subr.bf16.mxu0 0
  %1806 = vmatpush1.bf16.msra.mxu0 %v1770
  %1807 = vmatprep.subr.bf16.mxu0 0
  %1808 = vmatpush1.bf16.msra.mxu0 %v1771
  %1809 = vmatprep.subr.bf16.mxu0 0
  %1810 = vmatpush1.bf16.msra.mxu0 %v1772
  %1811 = vmatprep.subr.bf16.mxu0 0
  %1812 = vmatpush1.bf16.msra.mxu0 %v1773
  %1813 = vmatprep.subr.bf16.mxu0 0
  %1814 = vmatpush1.bf16.msra.mxu0 %v1774
  %1815 = vmatprep.subr.bf16.mxu0 0
  %1816 = vmatpush1.bf16.msra.mxu0 %v1775
  %1817 = vmatprep.subr.bf16.mxu0 0
  %1818 = vmatpush1.bf16.msra.mxu0 %v1776
  %1819 = vmatprep.subr.bf16.mxu0 0
  %1820 = vmatpush1.bf16.msra.mxu0 %v1777
  %1821 = vmatprep.subr.bf16.mxu0 0
  %1822 = vmatpush1.bf16.msra.mxu0 %v1778
  %1823 = vmatprep.subr.bf16.mxu0 0
  %1824 = vmatpush1.bf16.msra.mxu0 %v1779
  %1825 = vmatprep.subr.bf16.mxu0 0
  %1826 = vmatpush1.bf16.msra.mxu0 %v1780
  %1827 = vmatprep.subr.bf16.mxu0 0
  %1828 = vmatpush1.bf16.msra.mxu0 %v1781
  %1829 = vmatprep.subr.bf16.mxu0 0
  %1830 = vmatpush1.bf16.msra.mxu0 %v1782
  %1831 = vmatprep.mubr.bf16.mxu0 %v80
  %1832 = vmatmul.mubr.bf16.gmra.mrb[0].mxu0 %v79
  %v1833 = vpop.f32.mrb[0].mxu0
  %v1834 = vadd.f32 0.0, %v1833
  %v1835 = vpop.f32.mrb[0].mxu0
  %v1836 = vpop.f32.mrb[0].mxu0
  %v1837 = vadd.f32 0.0, %v1836
  %v1838 = vpop.f32.mrb[0].mxu0
  %1839 = vmatprep.mubr.bf16.mxu0 %v82
  %1840 = vmatmul.mubr.bf16.gmra.mrb[0].mxu0 %v81
  %v1841 = vpop.f32.mrb[0].mxu0
  %v1842 = vadd.f32 0.0, %v1841
  %v1843 = vpop.f32.mrb[0].mxu0
  %v1844 = vpop.f32.mrb[0].mxu0
  %v1845 = vadd.f32 0.0, %v1844
  %v1846 = vpop.f32.mrb[0].mxu0
  %1847 = vmatprep.mubr.bf16.mxu0 %v84
  %1848 = vmatmul.mubr.bf16.gmra.mrb[0].mxu0 %v83
  %v1849 = vpop.f32.mrb[0].mxu0
  %v1850 = vadd.f32 0.0, %v1849
  %v1851 = vpop.f32.mrb[0].mxu0
  %v1852 = vpop.f32.mrb[0].mxu0
  %v1853 = vadd.f32 0.0, %v1852
  %v1854 = vpop.f32.mrb[0].mxu0
  %1855 = vmatprep.mubr.bf16.mxu0 %v86
  %1856 = vmatmul.mubr.bf16.gmra.mrb[0].mxu0 %v85
  %v1857 = vpop.f32.mrb[0].mxu0
  %v1858 = vadd.f32 0.0, %v1857
  %v1859 = vpop.f32.mrb[0].mxu0
  %v1860 = vpop.f32.mrb[0].mxu0
  %v1861 = vadd.f32 0.0, %v1860
  %v1862 = vpop.f32.mrb[0].mxu0
  %1863 = vdwg.mxu0
  %v1864 = vmax.f32 %v1662, %v1834
  %v1865 = vmax.f32 %v1663, %v1837
  %v1866 = vmax.f32 %v1664, %v1842
  %v1867 = vmax.f32 %v1665, %v1845
  %v1868 = vmax.f32 %v1666, %v1850
  %v1869 = vmax.f32 %v1667, %v1853
  %v1870 = vmax.f32 %v1668, %v1858
  %v1871 = vmax.f32 %v1669, %v1861
  %v1872 = vld [vmem:[%s2] sm:$0xff]
  %v1873 = vld [vmem:[%s2 + $0x8] sm:$0xff]
  %v1874 = vld [vmem:[%s2 + $0x10] sm:$0xff]
  %v1875 = vld [vmem:[%s2 + $0x18] sm:$0xff]
  %v1876 = vld [vmem:[%s2 + $0x20] sm:$0xff]
  %v1877 = vld [vmem:[%s2 + $0x28] sm:$0xff]
  %v1878 = vld [vmem:[%s2 + $0x30] sm:$0xff]
  %v1879 = vld [vmem:[%s2 + $0x38] sm:$0xff]
  %1881 = vset.pattern.permute.xlu0 0
  %1882 = vperm.xlu0 %1881, %v1872
  %v1883 = vpop.permute.xlu0 %1882
  %1886 = vset.pattern.permute.xlu0 0
  %1887 = vperm.xlu0 %1886, %v1873
  %v1888 = vpop.permute.xlu0 %1887
  %1891 = vset.pattern.permute.xlu0 0
  %1892 = vperm.xlu0 %1891, %v1874
  %v1893 = vpop.permute.xlu0 %1892
  %1896 = vset.pattern.permute.xlu0 0
  %1897 = vperm.xlu0 %1896, %v1875
  %v1898 = vpop.permute.xlu0 %1897
  %1901 = vset.pattern.permute.xlu0 0
  %1902 = vperm.xlu0 %1901, %v1876
  %v1903 = vpop.permute.xlu0 %1902
  %1906 = vset.pattern.permute.xlu0 0
  %1907 = vperm.xlu0 %1906, %v1877
  %v1908 = vpop.permute.xlu0 %1907
  %1911 = vset.pattern.permute.xlu0 0
  %1912 = vperm.xlu0 %1911, %v1878
  %v1913 = vpop.permute.xlu0 %1912
  %1916 = vset.pattern.permute.xlu0 0
  %1917 = vperm.xlu0 %1916, %v1879
  %v1918 = vpop.permute.xlu0 %1917
  %v1920 = vadd.f32 %v1864, %v1883
  %v1921 = vadd.f32 %v1865, %v1888
  %v1922 = vadd.f32 %v1866, %v1893
  %v1923 = vadd.f32 %v1867, %v1898
  %v1924 = vadd.f32 %v1868, %v1903
  %v1925 = vadd.f32 %v1869, %v1908
  %v1926 = vadd.f32 %v1870, %v1913
  %v1927 = vadd.f32 %v1871, %v1918
  %v1928 = vmax.f32 %v1920, 0.0
  %v1929 = vmax.f32 %v1921, 0.0
  %v1930 = vmax.f32 %v1922, 0.0
  %v1931 = vmax.f32 %v1923, 0.0
  %v1932 = vmax.f32 %v1924, 0.0
  %v1933 = vmax.f32 %v1925, 0.0
  %v1934 = vmax.f32 %v1926, 0.0
  %v1935 = vmax.f32 %v1927, 0.0
  %1936 = vst [vmem:[%s3] sm:$0xff] %v1928
  %1937 = vst [vmem:[%s3 + $0x8] sm:$0xff] %v1929
  %1938 = vst [vmem:[%s3 + $0x10] sm:$0xff] %v1930
  %1939 = vst [vmem:[%s3 + $0x18] sm:$0xff] %v1931
  %1940 = vst [vmem:[%s3 + $0x20] sm:$0xff] %v1932
  %1941 = vst [vmem:[%s3 + $0x28] sm:$0xff] %v1933
  %1942 = vst [vmem:[%s3 + $0x30] sm:$0xff] %v1934
  %1943 = vst [vmem:[%s3 + $0x38] sm:$0xff] %v1935
  // Predicated region
  $region14: #{autoencoder_mlp_forward.6} parent=0 // pred_check
    _
  $region15: #{autoencoder_mlp_forward.6} parent=0 // pred_check_branch
    %1945 = sbr.rel (0) target = $region17
  $region16: #{autoencoder_mlp_forward.6} parent=0 // pred_region
    _
  $region17: #{autoencoder_mlp_forward.6} parent=0 // pred_fallthru
    _
  // Predicated region
  $region18: #{autoencoder_mlp_forward.6} parent=0 // pred_check
    _
  $region19: #{autoencoder_mlp_forward.6} parent=0 // pred_check_branch
    %1947 = sbr.rel (0) target = $region21
  $region20: #{autoencoder_mlp_forward.6} parent=0 // pred_region
    _
  $region21: #{autoencoder_mlp_forward.6} parent=0 // pred_fallthru
    _

// kernel: autoencoder_mlp_forward.7
$region0: #{autoencoder_mlp_forward.7}
  #allocation0 [shape = 'u32[]', space=smem, size = 0x4, offset = 0x4, fixed_abs, tag = 'smem constant byte address 0x4 - core index']
  #allocation1 [shape = 'u32[144,128]{1,0:T(1,128)}', space=vmem, size = 0x12000, scoped, tag = 'internal scratch']
  %s0 = inlined_call_operand.vmem [shape: f32[8,256], index: 0, kind: input, shape index: {}]
  %s1 = inlined_call_operand.vmem [shape: f32[256,16], index: 1, kind: input, shape index: {}]
  %s2 = inlined_call_operand.vmem [shape: f32[1,16], index: 2, kind: input, shape index: {}]
  %s3 = inlined_call_operand.vmem [shape: f32[16,128], index: 3, kind: input, shape index: {}]
  %s4 = inlined_call_operand.vmem [shape: f32[1,128], index: 4, kind: input, shape index: {}]
  %s5 = inlined_call_operand.vmem [shape: f32[128,128], index: 5, kind: input, shape index: {}]
  %s6 = inlined_call_operand.vmem [shape: f32[1,128], index: 6, kind: input, shape index: {}]
  %s7 = inlined_call_operand.vmem [shape: f32[128,128], index: 7, kind: input, shape index: {}]
  %s8 = inlined_call_operand.vmem [shape: f32[1,128], index: 8, kind: input, shape index: {}]
  %s9 = inlined_call_operand.vmem [shape: f32[128,1024], index: 9, kind: input, shape index: {}]
  %s10 = inlined_call_operand.vmem [shape: f32[1,1024], index: 10, kind: input, shape index: {}]
  %s11 = inlined_call_operand.vmem [shape: f32[8,1024], index: 11, kind: output, shape index: {}]
  %s12 = sld [smem:[#allocation0]]
  $region100: #{autoencoder_mlp_forward.7} parent=0
    _
  %s14 = ssub.s32 1, %s12
  %s15 = scalar_select 0, %s14, %s12
  $region1: #{autoencoder_mlp_forward.7} parent=0
    #allocation2 [shape = 'u8[524288]{0}', space=vmem, size = 0x80000, scoped, tag = 'input window, operand 9']
    loop: start=0, step=1, limit=4
    $region2: #{autoencoder_mlp_forward.7} parent=1 // loop_pre_header
      _
    $region3: #{autoencoder_mlp_forward.7} parent=1 // loop_header
      %s17 = sphi 0, %s21
      %p18 = scmp.ge.s32.totalorder %s17, 4
      %s25 = sphi 0, %s25
      %s27 = sphi 0, %s25
      %s28 = sphi 0, %s27
      %s42 = sphi 0, %s28
      %s46 = sphi 0, %s46
      %s48 = sphi 0, %s46
      %s49 = sphi 0, %s48
      %s63 = sphi 0, %s49
      %s67 = sphi 0, %s67
      %s69 = sphi 0, %s67
      %s70 = sphi 0, %s69
      %s84 = sphi 0, %s70
      %s88 = sphi 0, %s88
      %s90 = sphi 0, %s88
      %s91 = sphi 0, %s90
      %s105 = sphi 0, %s91
      %s109 = sphi 0, %s109
      %s111 = sphi 0, %s109
      %s112 = sphi 0, %s111
      %s126 = sphi 0, %s112
      %s130 = sphi 0, %s130
      %s132 = sphi 0, %s130
      %s133 = sphi 0, %s132
      %s147 = sphi 0, %s133
      %s151 = sphi 0, %s151
      %s153 = sphi 0, %s151
      %s154 = sphi 0, %s153
      %s168 = sphi 0, %s154
      %s172 = sphi 0, %s172
      %s174 = sphi 0, %s172
      %s175 = sphi 0, %s174
      %s189 = sphi 0, %s175
      %s193 = sphi 0, %s193
      %s195 = sphi 0, %s193
      %s196 = sphi 0, %s195
      %s210 = sphi 0, %s196
      %s216 = sphi 0, %s218
      %s219 = sphi 0, %s216
      %s220 = sphi 0, %s219
      %s236 = sphi 0, %s220
      %s242 = sphi 0, %s244
      %s245 = sphi 0, %s242
      %s246 = sphi 0, %s245
      %s262 = sphi 0, %s246
      %s268 = sphi 0, %s270
      %s271 = sphi 0, %s268
      %s272 = sphi 0, %s271
      %s288 = sphi 0, %s272
    $region4: #{autoencoder_mlp_forward.7} parent=1 // loop_header_branch
      %20 = sbr.rel (%p18) target = $region8
    $region5: #{autoencoder_mlp_forward.7} parent=1 // loop_body
      %s22 = ssub.s32 %s17, 1
      %s23 = ssub.s32 %s17, 2
      %s24 = sadd.s32 %s17, 1
      %s26 = sadd.s32 %s25, 1
      %p29 = scmp.eq.s32.totalorder %s17, 1
      %p30 = scmp.ne.s32.totalorder %s25, %s27
      %p31 = scmp.eq.s32.totalorder %s17, 0
      %p32 = por %p30, %p31
      %p33 = scmp.ne.s32.totalorder %s25, %s27
      %p34 = scmp.eq.s32.totalorder %s22, 1
      %p35 = por %p33, %p34
      %p36 = scmp.ne.s32.totalorder %s27, %s28
      %p37 = scmp.eq.s32.totalorder %s22, 0
      %p38 = por %p36, %p37
      %p39 = scmp.ne.s32.totalorder %s27, %s28
      %p40 = scmp.eq.s32.totalorder %s23, 1
      %p41 = por %p39, %p40
      %p43 = scmp.ne.s32.totalorder %s28, %s42
      %p44 = scmp.eq.s32.totalorder %s23, 0
      %p45 = por %p43, %p44
      %s47 = sadd.s32 %s46, 1
      %p50 = scmp.eq.s32.totalorder %s17, 1
      %p51 = scmp.ne.s32.totalorder %s46, %s48
      %p52 = scmp.eq.s32.totalorder %s17, 0
      %p53 = por %p51, %p52
      %p54 = scmp.ne.s32.totalorder %s46, %s48
      %p55 = scmp.eq.s32.totalorder %s22, 1
      %p56 = por %p54, %p55
      %p57 = scmp.ne.s32.totalorder %s48, %s49
      %p58 = scmp.eq.s32.totalorder %s22, 0
      %p59 = por %p57, %p58
      %p60 = scmp.ne.s32.totalorder %s48, %s49
      %p61 = scmp.eq.s32.totalorder %s23, 1
      %p62 = por %p60, %p61
      %p64 = scmp.ne.s32.totalorder %s49, %s63
      %p65 = scmp.eq.s32.totalorder %s23, 0
      %p66 = por %p64, %p65
      %s68 = sadd.s32 %s67, 1
      %p71 = scmp.eq.s32.totalorder %s17, 1
      %p72 = scmp.ne.s32.totalorder %s67, %s69
      %p73 = scmp.eq.s32.totalorder %s17, 0
      %p74 = por %p72, %p73
      %p75 = scmp.ne.s32.totalorder %s67, %s69
      %p76 = scmp.eq.s32.totalorder %s22, 1
      %p77 = por %p75, %p76
      %p78 = scmp.ne.s32.totalorder %s69, %s70
      %p79 = scmp.eq.s32.totalorder %s22, 0
      %p80 = por %p78, %p79
      %p81 = scmp.ne.s32.totalorder %s69, %s70
      %p82 = scmp.eq.s32.totalorder %s23, 1
      %p83 = por %p81, %p82
      %p85 = scmp.ne.s32.totalorder %s70, %s84
      %p86 = scmp.eq.s32.totalorder %s23, 0
      %p87 = por %p85, %p86
      %s89 = sadd.s32 %s88, 1
      %p92 = scmp.eq.s32.totalorder %s17, 1
      %p93 = scmp.ne.s32.totalorder %s88, %s90
      %p94 = scmp.eq.s32.totalorder %s17, 0
      %p95 = por %p93, %p94
      %p96 = scmp.ne.s32.totalorder %s88, %s90
      %p97 = scmp.eq.s32.totalorder %s22, 1
      %p98 = por %p96, %p97
      %p99 = scmp.ne.s32.totalorder %s90, %s91
      %p100 = scmp.eq.s32.totalorder %s22, 0
      %p101 = por %p99, %p100
      %p102 = scmp.ne.s32.totalorder %s90, %s91
      %p103 = scmp.eq.s32.totalorder %s23, 1
      %p104 = por %p102, %p103
      %p106 = scmp.ne.s32.totalorder %s91, %s105
      %p107 = scmp.eq.s32.totalorder %s23, 0
      %p108 = por %p106, %p107
      %s110 = sadd.s32 %s109, 1
      %p113 = scmp.eq.s32.totalorder %s17, 1
      %p114 = scmp.ne.s32.totalorder %s109, %s111
      %p115 = scmp.eq.s32.totalorder %s17, 0
      %p116 = por %p114, %p115
      %p117 = scmp.ne.s32.totalorder %s109, %s111
      %p118 = scmp.eq.s32.totalorder %s22, 1
      %p119 = por %p117, %p118
      %p120 = scmp.ne.s32.totalorder %s111, %s112
      %p121 = scmp.eq.s32.totalorder %s22, 0
      %p122 = por %p120, %p121
      %p123 = scmp.ne.s32.totalorder %s111, %s112
      %p124 = scmp.eq.s32.totalorder %s23, 1
      %p125 = por %p123, %p124
      %p127 = scmp.ne.s32.totalorder %s112, %s126
      %p128 = scmp.eq.s32.totalorder %s23, 0
      %p129 = por %p127, %p128
      %s131 = sadd.s32 %s130, 1
      %p134 = scmp.eq.s32.totalorder %s17, 1
      %p135 = scmp.ne.s32.totalorder %s130, %s132
      %p136 = scmp.eq.s32.totalorder %s17, 0
      %p137 = por %p135, %p136
      %p138 = scmp.ne.s32.totalorder %s130, %s132
      %p139 = scmp.eq.s32.totalorder %s22, 1
      %p140 = por %p138, %p139
      %p141 = scmp.ne.s32.totalorder %s132, %s133
      %p142 = scmp.eq.s32.totalorder %s22, 0
      %p143 = por %p141, %p142
      %p144 = scmp.ne.s32.totalorder %s132, %s133
      %p145 = scmp.eq.s32.totalorder %s23, 1
      %p146 = por %p144, %p145
      %p148 = scmp.ne.s32.totalorder %s133, %s147
      %p149 = scmp.eq.s32.totalorder %s23, 0
      %p150 = por %p148, %p149
      %s152 = sadd.s32 %s151, 1
      %p155 = scmp.eq.s32.totalorder %s17, 1
      %p156 = scmp.ne.s32.totalorder %s151, %s153
      %p157 = scmp.eq.s32.totalorder %s17, 0
      %p158 = por %p156, %p157
      %p159 = scmp.ne.s32.totalorder %s151, %s153
      %p160 = scmp.eq.s32.totalorder %s22, 1
      %p161 = por %p159, %p160
      %p162 = scmp.ne.s32.totalorder %s153, %s154
      %p163 = scmp.eq.s32.totalorder %s22, 0
      %p164 = por %p162, %p163
      %p165 = scmp.ne.s32.totalorder %s153, %s154
      %p166 = scmp.eq.s32.totalorder %s23, 1
      %p167 = por %p165, %p166
      %p169 = scmp.ne.s32.totalorder %s154, %s168
      %p170 = scmp.eq.s32.totalorder %s23, 0
      %p171 = por %p169, %p170
      %s173 = sadd.s32 %s172, 1
      %p176 = scmp.eq.s32.totalorder %s17, 1
      %p177 = scmp.ne.s32.totalorder %s172, %s174
      %p178 = scmp.eq.s32.totalorder %s17, 0
      %p179 = por %p177, %p178
      %p180 = scmp.ne.s32.totalorder %s172, %s174
      %p181 = scmp.eq.s32.totalorder %s22, 1
      %p182 = por %p180, %p181
      %p183 = scmp.ne.s32.totalorder %s174, %s175
      %p184 = scmp.eq.s32.totalorder %s22, 0
      %p185 = por %p183, %p184
      %p186 = scmp.ne.s32.totalorder %s174, %s175
      %p187 = scmp.eq.s32.totalorder %s23, 1
      %p188 = por %p186, %p187
      %p190 = scmp.ne.s32.totalorder %s175, %s189
      %p191 = scmp.eq.s32.totalorder %s23, 0
      %p192 = por %p190, %p191
      %s194 = sadd.s32 %s193, 1
      %p197 = scmp.eq.s32.totalorder %s17, 1
      %p198 = scmp.ne.s32.totalorder %s193, %s195
      %p199 = scmp.eq.s32.totalorder %s17, 0
      %p200 = por %p198, %p199
      %p201 = scmp.ne.s32.totalorder %s193, %s195
      %p202 = scmp.eq.s32.totalorder %s22, 1
      %p203 = por %p201, %p202
      %p204 = scmp.ne.s32.totalorder %s195, %s196
      %p205 = scmp.eq.s32.totalorder %s22, 0
      %p206 = por %p204, %p205
      %p207 = scmp.ne.s32.totalorder %s195, %s196
      %p208 = scmp.eq.s32.totalorder %s23, 1
      %p209 = por %p207, %p208
      %p211 = scmp.ne.s32.totalorder %s196, %s210
      %p212 = scmp.eq.s32.totalorder %s23, 0
      %p213 = por %p211, %p212
      %s214 = ssub.s32 %s17, %s24
      %p215 = scmp.eq.s32.totalorder %s214, 0
      %s217 = sadd.s32 %s216, 1
      %s218 = scalar_select %p215, %s216, %s217
      %p221 = pneg %p215
      %p222 = scmp.eq.s32.totalorder %s17, 1
      %p223 = por %p221, %p222
      %p224 = scmp.ne.s32.totalorder %s216, %s219
      %p225 = scmp.eq.s32.totalorder %s17, 0
      %p226 = por %p224, %p225
      %p227 = scmp.ne.s32.totalorder %s216, %s219
      %p228 = scmp.eq.s32.totalorder %s22, 1
      %p229 = por %p227, %p228
      %p230 = scmp.ne.s32.totalorder %s219, %s220
      %p231 = scmp.eq.s32.totalorder %s22, 0
      %p232 = por %p230, %p231
      %p233 = scmp.ne.s32.totalorder %s219, %s220
      %p234 = scmp.eq.s32.totalorder %s23, 1
      %p235 = por %p233, %p234
      %p237 = scmp.ne.s32.totalorder %s220, %s236
      %p238 = scmp.eq.s32.totalorder %s23, 0
      %p239 = por %p237, %p238
      %s240 = ssub.s32 %s17, %s24
      %p241 = scmp.eq.s32.totalorder %s240, 0
      %s243 = sadd.s32 %s242, 1
      %s244 = scalar_select %p241, %s242, %s243
      %p247 = pneg %p241
      %p248 = scmp.eq.s32.totalorder %s17, 1
      %p249 = por %p247, %p248
      %p250 = scmp.ne.s32.totalorder %s242, %s245
      %p251 = scmp.eq.s32.totalorder %s17, 0
      %p252 = por %p250, %p251
      %p253 = scmp.ne.s32.totalorder %s242, %s245
      %p254 = scmp.eq.s32.totalorder %s22, 1
      %p255 = por %p253, %p254
      %p256 = scmp.ne.s32.totalorder %s245, %s246
      %p257 = scmp.eq.s32.totalorder %s22, 0
      %p258 = por %p256, %p257
      %p259 = scmp.ne.s32.totalorder %s245, %s246
      %p260 = scmp.eq.s32.totalorder %s23, 1
      %p261 = por %p259, %p260
      %p263 = scmp.ne.s32.totalorder %s246, %s262
      %p264 = scmp.eq.s32.totalorder %s23, 0
      %p265 = por %p263, %p264
      %s266 = ssub.s32 %s17, %s24
      %p267 = scmp.eq.s32.totalorder %s266, 0
      %s269 = sadd.s32 %s268, 1
      %s270 = scalar_select %p267, %s268, %s269
      %p273 = pneg %p267
      %p274 = scmp.eq.s32.totalorder %s17, 1
      %p275 = por %p273, %p274
      %p276 = scmp.ne.s32.totalorder %s268, %s271
      %p277 = scmp.eq.s32.totalorder %s17, 0
      %p278 = por %p276, %p277
      %p279 = scmp.ne.s32.totalorder %s268, %s271
      %p280 = scmp.eq.s32.totalorder %s22, 1
      %p281 = por %p279, %p280
      %p282 = scmp.ne.s32.totalorder %s271, %s272
      %p283 = scmp.eq.s32.totalorder %s22, 0
      %p284 = por %p282, %p283
      %p285 = scmp.ne.s32.totalorder %s271, %s272
      %p286 = scmp.eq.s32.totalorder %s23, 1
      %p287 = por %p285, %p286
      %p289 = scmp.ne.s32.totalorder %s272, %s288
      %p290 = scmp.eq.s32.totalorder %s23, 0
      %p291 = por %p289, %p290
      %p292 = scmp.le.s32.totalorder 1, %s17
      %p293 = scmp.lt.s32.totalorder %s17, 3
      %p294 = pnand %p292, %p293
      %p295 = pneg %p294
      // Predicated region
      $region9: #{autoencoder_mlp_forward.7} parent=5 // pred_check
        _
      $region10: #{autoencoder_mlp_forward.7} parent=5 // pred_check_branch
        %297 = sbr.rel (%p294) target = $region12
      $region11: #{autoencoder_mlp_forward.7} parent=5 // pred_region
        %s298 = ssub.s32 %s17, 1
        // Predicated region
        $region13: #{autoencoder_mlp_forward.7} parent=11 // pred_check
          %p299 = pneg %p38
        $region14: #{autoencoder_mlp_forward.7} parent=11 // pred_check_branch
          %301 = sbr.rel (%p299) target = $region16
        $region15: #{autoencoder_mlp_forward.7} parent=11 // pred_region
          _
        $region16: #{autoencoder_mlp_forward.7} parent=11 // pred_fallthru
          _
        // Predicated region
        $region17: #{autoencoder_mlp_forward.7} parent=11 // pred_check
          %p302 = pneg %p59
        $region18: #{autoencoder_mlp_forward.7} parent=11 // pred_check_branch
          %304 = sbr.rel (%p302) target = $region20
        $region19: #{autoencoder_mlp_forward.7} parent=11 // pred_region
          _
        $region20: #{autoencoder_mlp_forward.7} parent=11 // pred_fallthru
          _
        // Predicated region
        $region21: #{autoencoder_mlp_forward.7} parent=11 // pred_check
          %p305 = pneg %p80
        $region22: #{autoencoder_mlp_forward.7} parent=11 // pred_check_branch
          %307 = sbr.rel (%p305) target = $region24
        $region23: #{autoencoder_mlp_forward.7} parent=11 // pred_region
          _
        $region24: #{autoencoder_mlp_forward.7} parent=11 // pred_fallthru
          _
        // Predicated region
        $region25: #{autoencoder_mlp_forward.7} parent=11 // pred_check
          %p308 = pneg %p101
        $region26: #{autoencoder_mlp_forward.7} parent=11 // pred_check_branch
          %310 = sbr.rel (%p308) target = $region28
        $region27: #{autoencoder_mlp_forward.7} parent=11 // pred_region
          _
        $region28: #{autoencoder_mlp_forward.7} parent=11 // pred_fallthru
          _
        // Predicated region
        $region29: #{autoencoder_mlp_forward.7} parent=11 // pred_check
          %p311 = pneg %p122
        $region30: #{autoencoder_mlp_forward.7} parent=11 // pred_check_branch
          %313 = sbr.rel (%p311) target = $region32
        $region31: #{autoencoder_mlp_forward.7} parent=11 // pred_region
          _
        $region32: #{autoencoder_mlp_forward.7} parent=11 // pred_fallthru
          _
        // Predicated region
        $region33: #{autoencoder_mlp_forward.7} parent=11 // pred_check
          %p314 = pneg %p143
        $region34: #{autoencoder_mlp_forward.7} parent=11 // pred_check_branch
          %316 = sbr.rel (%p314) target = $region36
        $region35: #{autoencoder_mlp_forward.7} parent=11 // pred_region
          _
        $region36: #{autoencoder_mlp_forward.7} parent=11 // pred_fallthru
          _
        // Predicated region
        $region37: #{autoencoder_mlp_forward.7} parent=11 // pred_check
          %p317 = pneg %p164
        $region38: #{autoencoder_mlp_forward.7} parent=11 // pred_check_branch
          %319 = sbr.rel (%p317) target = $region40
        $region39: #{autoencoder_mlp_forward.7} parent=11 // pred_region
          _
        $region40: #{autoencoder_mlp_forward.7} parent=11 // pred_fallthru
          _
        // Predicated region
        $region41: #{autoencoder_mlp_forward.7} parent=11 // pred_check
          %p320 = pneg %p185
        $region42: #{autoencoder_mlp_forward.7} parent=11 // pred_check_branch
          %322 = sbr.rel (%p320) target = $region44
        $region43: #{autoencoder_mlp_forward.7} parent=11 // pred_region
          _
        $region44: #{autoencoder_mlp_forward.7} parent=11 // pred_fallthru
          _
        // Predicated region
        $region45: #{autoencoder_mlp_forward.7} parent=11 // pred_check
          %p323 = pneg %p206
        $region46: #{autoencoder_mlp_forward.7} parent=11 // pred_check_branch
          %325 = sbr.rel (%p323) target = $region48
        $region47: #{autoencoder_mlp_forward.7} parent=11 // pred_region
          _
        $region48: #{autoencoder_mlp_forward.7} parent=11 // pred_fallthru
          _
      $region12: #{autoencoder_mlp_forward.7} parent=5 // pred_fallthru
        _
      %p326 = scmp.lt.s32.totalorder %s17, 2
      // Predicated region
      $region49: #{autoencoder_mlp_forward.7} parent=5 // pred_check
        %p327 = pneg %p326
      $region50: #{autoencoder_mlp_forward.7} parent=5 // pred_check_branch
        %329 = sbr.rel (%p327) target = $region52
      $region51: #{autoencoder_mlp_forward.7} parent=5 // pred_region
        // Predicated region
        $region53: #{autoencoder_mlp_forward.7} parent=51 // pred_check
          %p330 = pneg %p226
        $region54: #{autoencoder_mlp_forward.7} parent=51 // pred_check_branch
          %332 = sbr.rel (%p330) target = $region56
        $region55: #{autoencoder_mlp_forward.7} parent=51 // pred_region
          %s333 = sand.u32 %s216, 1
          %s334 = sand.u32 %s216, 1
          %s335 = smul.addr %s334, 512
          %s336 = scalar_lea.vmem [#allocation2], %s335
          %s337 = smul.u32 4, %s17
          %s338 = smul.addr %s337, 8
          %s339 = scalar_lea.vmem %s9, %s338
          // Predicated region
          $region57: #{autoencoder_mlp_forward.7} parent=55 // pred_check
            _
          $region58: #{autoencoder_mlp_forward.7} parent=55 // pred_check_branch
            %341 = sbr.rel (0) target = $region60
          $region59: #{autoencoder_mlp_forward.7} parent=55 // pred_region
            // Predicated region
            $region61: #{autoencoder_mlp_forward.7} parent=59 // pred_check
              _
            $region62: #{autoencoder_mlp_forward.7} parent=59 // pred_check_branch
              %343 = sbr.rel (0) target = $region64
            $region63: #{autoencoder_mlp_forward.7} parent=59 // pred_region
              loop: start=0, step=1, limit=1
              $region65: #{autoencoder_mlp_forward.7} parent=63 // loop_pre_header
                _
              $region66: #{autoencoder_mlp_forward.7} parent=63 // loop_header
                %s345 = sphi 0, %s349
                %p346 = scmp.ge.s32.totalorder %s345, 1
                %s350 = sphi %s339, %s339
                %s351 = sphi %s336, %s336
              $region67: #{autoencoder_mlp_forward.7} parent=63 // loop_header_branch
                %348 = sbr.rel (%p346) target = $region71
              $region68: #{autoencoder_mlp_forward.7} parent=63 // loop_body
                %v352 = vld [vmem:[%s350] sm:$0xff]
                %353 = vst [vmem:[%s351] sm:$0xff] %v352
                %v354 = vld [vmem:[%s350 + $0x8] sm:$0xff]
                %355 = vst [vmem:[%s351 + $0x8] sm:$0xff] %v354
                %v356 = vld [vmem:[%s350 + $0x10] sm:$0xff]
                %357 = vst [vmem:[%s351 + $0x10] sm:$0xff] %v356
                %v358 = vld [vmem:[%s350 + $0x18] sm:$0xff]
                %359 = vst [vmem:[%s351 + $0x18] sm:$0xff] %v358
                %v360 = vld [vmem:[%s350 + $0x40] sm:$0xff]
                %361 = vst [vmem:[%s351 + $0x20] sm:$0xff] %v360
                %v362 = vld [vmem:[%s350 + $0x48] sm:$0xff]
                %363 = vst [vmem:[%s351 + $0x28] sm:$0xff] %v362
                %v364 = vld [vmem:[%s350 + $0x50] sm:$0xff]
                %365 = vst [vmem:[%s351 + $0x30] sm:$0xff] %v364
                %v366 = vld [vmem:[%s350 + $0x58] sm:$0xff]
                %367 = vst [vmem:[%s351 + $0x38] sm:$0xff] %v366
                %v368 = vld [vmem:[%s350 + $0x80] sm:$0xff]
                %369 = vst [vmem:[%s351 + $0x40] sm:$0xff] %v368
                %v370 = vld [vmem:[%s350 + $0x88] sm:$0xff]
                %371 = vst [vmem:[%s351 + $0x48] sm:$0xff] %v370
                %v372 = vld [vmem:[%s350 + $0x90] sm:$0xff]
                %373 = vst [vmem:[%s351 + $0x50] sm:$0xff] %v372
                %v374 = vld [vmem:[%s350 + $0x98] sm:$0xff]
                %375 = vst [vmem:[%s351 + $0x58] sm:$0xff] %v374
                %v376 = vld [vmem:[%s350 + $0xc0] sm:$0xff]
                %377 = vst [vmem:[%s351 + $0x60] sm:$0xff] %v376
                %v378 = vld [vmem:[%s350 + $0xc8] sm:$0xff]
                %379 = vst [vmem:[%s351 + $0x68] sm:$0xff] %v378
                %v380 = vld [vmem:[%s350 + $0xd0] sm:$0xff]
                %381 = vst [vmem:[%s351 + $0x70] sm:$0xff] %v380
                %v382 = vld [vmem:[%s350 + $0xd8] sm:$0xff]
                %383 = vst [vmem:[%s351 + $0x78] sm:$0xff] %v382
                %v384 = vld [vmem:[%s350 + $0x100] sm:$0xff]
                %385 = vst [vmem:[%s351 + $0x80] sm:$0xff] %v384
                %v386 = vld [vmem:[%s350 + $0x108] sm:$0xff]
                %387 = vst [vmem:[%s351 + $0x88] sm:$0xff] %v386
                %v388 = vld [vmem:[%s350 + $0x110] sm:$0xff]
                %389 = vst [vmem:[%s351 + $0x90] sm:$0xff] %v388
                %v390 = vld [vmem:[%s350 + $0x118] sm:$0xff]
                %391 = vst [vmem:[%s351 + $0x98] sm:$0xff] %v390
                %v392 = vld [vmem:[%s350 + $0x140] sm:$0xff]
                %393 = vst [vmem:[%s351 + $0xa0] sm:$0xff] %v392
                %v394 = vld [vmem:[%s350 + $0x148] sm:$0xff]
                %395 = vst [vmem:[%s351 + $0xa8] sm:$0xff] %v394
                %v396 = vld [vmem:[%s350 + $0x150] sm:$0xff]
                %397 = vst [vmem:[%s351 + $0xb0] sm:$0xff] %v396
                %v398 = vld [vmem:[%s350 + $0x158] sm:$0xff]
                %399 = vst [vmem:[%s351 + $0xb8] sm:$0xff] %v398
                %v400 = vld [vmem:[%s350 + $0x180] sm:$0xff]
                %401 = vst [vmem:[%s351 + $0xc0] sm:$0xff] %v400
                %v402 = vld [vmem:[%s350 + $0x188] sm:$0xff]
                %403 = vst [vmem:[%s351 + $0xc8] sm:$0xff] %v402
                %v404 = vld [vmem:[%s350 + $0x190] sm:$0xff]
                %405 = vst [vmem:[%s351 + $0xd0] sm:$0xff] %v404
                %v406 = vld [vmem:[%s350 + $0x198] sm:$0xff]
                %407 = vst [vmem:[%s351 + $0xd8] sm:$0xff] %v406
                %v408 = vld [vmem:[%s350 + $0x1c0] sm:$0xff]
                %409 = vst [vmem:[%s351 + $0xe0] sm:$0xff] %v408
                %v410 = vld [vmem:[%s350 + $0x1c8] sm:$0xff]
                %411 = vst [vmem:[%s351 + $0xe8] sm:$0xff] %v410
                %v412 = vld [vmem:[%s350 + $0x1d0] sm:$0xff]
                %413 = vst [vmem:[%s351 + $0xf0] sm:$0xff] %v412
                %v414 = vld [vmem:[%s350 + $0x1d8] sm:$0xff]
                %415 = vst [vmem:[%s351 + $0xf8] sm:$0xff] %v414
                %v416 = vld [vmem:[%s350 + $0x200] sm:$0xff]
                %417 = vst [vmem:[%s351 + $0x100] sm:$0xff] %v416
                %v418 = vld [vmem:[%s350 + $0x208] sm:$0xff]
                %419 = vst [vmem:[%s351 + $0x108] sm:$0xff] %v418
                %v420 = vld [vmem:[%s350 + $0x210] sm:$0xff]
                %421 = vst [vmem:[%s351 + $0x110] sm:$0xff] %v420
                %v422 = vld [vmem:[%s350 + $0x218] sm:$0xff]
                %423 = vst [vmem:[%s351 + $0x118] sm:$0xff] %v422
                %v424 = vld [vmem:[%s350 + $0x240] sm:$0xff]
                %425 = vst [vmem:[%s351 + $0x120] sm:$0xff] %v424
                %v426 = vld [vmem:[%s350 + $0x248] sm:$0xff]
                %427 = vst [vmem:[%s351 + $0x128] sm:$0xff] %v426
                %v428 = vld [vmem:[%s350 + $0x250] sm:$0xff]
                %429 = vst [vmem:[%s351 + $0x130] sm:$0xff] %v428
                %v430 = vld [vmem:[%s350 + $0x258] sm:$0xff]
                %431 = vst [vmem:[%s351 + $0x138] sm:$0xff] %v430
                %v432 = vld [vmem:[%s350 + $0x280] sm:$0xff]
                %433 = vst [vmem:[%s351 + $0x140] sm:$0xff] %v432
                %v434 = vld [vmem:[%s350 + $0x288] sm:$0xff]
                %435 = vst [vmem:[%s351 + $0x148] sm:$0xff] %v434
                %v436 = vld [vmem:[%s350 + $0x290] sm:$0xff]
                %437 = vst [vmem:[%s351 + $0x150] sm:$0xff] %v436
                %v438 = vld [vmem:[%s350 + $0x298] sm:$0xff]
                %439 = vst [vmem:[%s351 + $0x158] sm:$0xff] %v438
                %v440 = vld [vmem:[%s350 + $0x2c0] sm:$0xff]
                %441 = vst [vmem:[%s351 + $0x160] sm:$0xff] %v440
                %v442 = vld [vmem:[%s350 + $0x2c8] sm:$0xff]
                %443 = vst [vmem:[%s351 + $0x168] sm:$0xff] %v442
                %v444 = vld [vmem:[%s350 + $0x2d0] sm:$0xff]
                %445 = vst [vmem:[%s351 + $0x170] sm:$0xff] %v444
                %v446 = vld [vmem:[%s350 + $0x2d8] sm:$0xff]
                %447 = vst [vmem:[%s351 + $0x178] sm:$0xff] %v446
                %v448 = vld [vmem:[%s350 + $0x300] sm:$0xff]
                %449 = vst [vmem:[%s351 + $0x180] sm:$0xff] %v448
                %v450 = vld [vmem:[%s350 + $0x308] sm:$0xff]
                %451 = vst [vmem:[%s351 + $0x188] sm:$0xff] %v450
                %v452 = vld [vmem:[%s350 + $0x310] sm:$0xff]
                %453 = vst [vmem:[%s351 + $0x190] sm:$0xff] %v452
                %v454 = vld [vmem:[%s350 + $0x318] sm:$0xff]
                %455 = vst [vmem:[%s351 + $0x198] sm:$0xff] %v454
                %v456 = vld [vmem:[%s350 + $0x340] sm:$0xff]
                %457 = vst [vmem:[%s351 + $0x1a0] sm:$0xff] %v456
                %v458 = vld [vmem:[%s350 + $0x348] sm:$0xff]
                %459 = vst [vmem:[%s351 + $0x1a8] sm:$0xff] %v458
                %v460 = vld [vmem:[%s350 + $0x350] sm:$0xff]
                %461 = vst [vmem:[%s351 + $0x1b0] sm:$0xff] %v460
                %v462 = vld [vmem:[%s350 + $0x358] sm:$0xff]
                %463 = vst [vmem:[%s351 + $0x1b8] sm:$0xff] %v462
                %v464 = vld [vmem:[%s350 + $0x380] sm:$0xff]
                %465 = vst [vmem:[%s351 + $0x1c0] sm:$0xff] %v464
                %v466 = vld [vmem:[%s350 + $0x388] sm:$0xff]
                %467 = vst [vmem:[%s351 + $0x1c8] sm:$0xff] %v466
                %v468 = vld [vmem:[%s350 + $0x390] sm:$0xff]
                %469 = vst [vmem:[%s351 + $0x1d0] sm:$0xff] %v468
                %v470 = vld [vmem:[%s350 + $0x398] sm:$0xff]
                %471 = vst [vmem:[%s351 + $0x1d8] sm:$0xff] %v470
                %v472 = vld [vmem:[%s350 + $0x3c0] sm:$0xff]
                %473 = vst [vmem:[%s351 + $0x1e0] sm:$0xff] %v472
                %v474 = vld [vmem:[%s350 + $0x3c8] sm:$0xff]
                %475 = vst [vmem:[%s351 + $0x1e8] sm:$0xff] %v474
                %v476 = vld [vmem:[%s350 + $0x3d0] sm:$0xff]
                %477 = vst [vmem:[%s351 + $0x1f0] sm:$0xff] %v476
                %v478 = vld [vmem:[%s350 + $0x3d8] sm:$0xff]
                %479 = vst [vmem:[%s351 + $0x1f8] sm:$0xff] %v478
              $region69: #{autoencoder_mlp_forward.7} parent=63 // loop_footer
                %s349 = sadd.s32 1, %s345
              $region70: #{autoencoder_mlp_forward.7} parent=63 // loop_footer_branch
                %344 = sbr.rel target = $region66
              $region71: #{autoencoder_mlp_forward.7} parent=63 // loop_exit
                _
            $region64: #{autoencoder_mlp_forward.7} parent=59 // pred_fallthru
              _
            // Predicated region
            $region72: #{autoencoder_mlp_forward.7} parent=59 // pred_check
              _
            $region73: #{autoencoder_mlp_forward.7} parent=59 // pred_check_branch
              %481 = sbr.rel target = $region75
            $region74: #{autoencoder_mlp_forward.7} parent=59 // pred_region
              _
            $region75: #{autoencoder_mlp_forward.7} parent=59 // pred_fallthru
              _
          $region60: #{autoencoder_mlp_forward.7} parent=55 // pred_fallthru
            _
          %482 = vnop
        $region56: #{autoencoder_mlp_forward.7} parent=51 // pred_fallthru
          _
        // Predicated region
        $region76: #{autoencoder_mlp_forward.7} parent=51 // pred_check
          %p483 = pneg %p252
        $region77: #{autoencoder_mlp_forward.7} parent=51 // pred_check_branch
          %485 = sbr.rel (%p483) target = $region79
        $region78: #{autoencoder_mlp_forward.7} parent=51 // pred_region
          %s486 = smul.u32 4, %s17
          %p487 = scmp.lt.s32.totalorder %s486, 7
          %s488 = scalar_select %p487, %s486, 7
          %s489 = scalar_lea.vmem %s10, %s488
          %s490 = smul.u32 4, %s17
        $region79: #{autoencoder_mlp_forward.7} parent=51 // pred_fallthru
          _
      $region52: #{autoencoder_mlp_forward.7} parent=5 // pred_fallthru
        _
      %p491 = scmp.le.s32.totalorder 1, %s17
      %p492 = scmp.lt.s32.totalorder %s17, 3
      %p493 = pnand %p491, %p492
      %p494 = pneg %p493
      // Predicated region
      $region80: #{autoencoder_mlp_forward.7} parent=5 // pred_check
        _
      $region81: #{autoencoder_mlp_forward.7} parent=5 // pred_check_branch
        %496 = sbr.rel (%p493) target = $region83
      $region82: #{autoencoder_mlp_forward.7} parent=5 // pred_region
        %s497 = ssub.s32 %s17, 1
        %s498 = sand.u32 %s219, 1
        %s499 = sand.u32 %s219, 1
        %s500 = smul.addr %s499, 512
        %s501 = scalar_lea.vmem [#allocation2], %s500
        // Predicated region
        $region84: #{autoencoder_mlp_forward.7} parent=82 // pred_check
          %p502 = pneg %p232
        $region85: #{autoencoder_mlp_forward.7} parent=82 // pred_check_branch
          %504 = sbr.rel (%p502) target = $region87
        $region86: #{autoencoder_mlp_forward.7} parent=82 // pred_region
          _
        $region87: #{autoencoder_mlp_forward.7} parent=82 // pred_fallthru
          _
        %p505 = pneg %p38
        %p506 = pneg %p35
        %p507 = pneg %p59
        %p508 = pneg %p56
        %p509 = pneg %p80
        %p510 = pneg %p77
        %p511 = pneg %p101
        %p512 = pneg %p98
        %p513 = pneg %p122
        %p514 = pneg %p119
        %p515 = pneg %p143
        %p516 = pneg %p140
        %p517 = pneg %p164
        %p518 = pneg %p161
        %p519 = pneg %p185
        %p520 = pneg %p182
        %p521 = pneg %p206
        %p522 = pneg %p203
        %s523 = sand.u32 %s219, 1
        %s524 = sand.u32 %s219, 1
        %s525 = smul.addr %s524, 512
        %s526 = scalar_lea.vmem [#allocation2], %s525
        %p527 = pneg %p232
        %p528 = pneg %p229
        %s529 = smul.u32 4, %s22
        %p530 = scmp.lt.s32.totalorder %s529, 7
        %s531 = scalar_select %p530, %s529, 7
        %s532 = scalar_lea.vmem %s10, %s531
        %p533 = pneg %p258
        %p534 = pneg %p255
        %p535 = pneg %p284
        %p536 = pneg %p281
        %s537 = smul.u32 4, %s22
        %p538 = scmp.lt.s32.totalorder %s537, 7
        %s539 = scalar_select %p538, %s537, 7
        %s540 = smul.addr %s539, 8
        %s541 = scalar_lea.vmem %s11, %s540
        %s542 = smul.u32 4, %s22
        %s543 = smul.u32 4, %s22
        %p544 = scmp.lt.s32.totalorder %s543, 7
        %s545 = scalar_select %p544, %s543, 7
        %s546 = scalar_lea.vmem %s10, %s545
        %s547 = smul.u32 4, %s22
        %s548 = smul.u32 4, %s22
        %p549 = scmp.lt.s32.totalorder %s548, 7
        %s550 = scalar_select %p549, %s548, 7
        %s551 = smul.addr %s550, 8
        %s552 = scalar_lea.vmem %s11, %s551
        %s553 = smul.u32 4, %s22
        %v554 = vld [vmem:[%s0] sm:$0xff]
        %v555 = vld [vmem:[%s0 + $0x8] sm:$0xff]
        %v556 = vld [vmem:[%s1] sm:$0xff]
        %v557 = vld [vmem:[%s1 + $0x8] sm:$0xff]
        %v558 = vld [vmem:[%s1 + $0x10] sm:$0xff]
        %v559 = vld [vmem:[%s1 + $0x18] sm:$0xff]
        %v560 = vld [vmem:[%s1 + $0x20] sm:$0xff]
        %v561 = vld [vmem:[%s1 + $0x28] sm:$0xff]
        %v562 = vld [vmem:[%s1 + $0x30] sm:$0xff]
        %v563 = vld [vmem:[%s1 + $0x38] sm:$0xff]
        %v564 = vld [vmem:[%s1 + $0x40] sm:$0xff]
        %v565 = vld [vmem:[%s1 + $0x48] sm:$0xff]
        %v566 = vld [vmem:[%s1 + $0x50] sm:$0xff]
        %v567 = vld [vmem:[%s1 + $0x58] sm:$0xff]
        %v568 = vld [vmem:[%s1 + $0x60] sm:$0xff]
        %v569 = vld [vmem:[%s1 + $0x68] sm:$0xff]
        %v570 = vld [vmem:[%s1 + $0x70] sm:$0xff]
        %v571 = vld [vmem:[%s1 + $0x78] sm:$0xff]
        %v572 = vld [vmem:[%s1 + $0x80] sm:$0xff]
        %v573 = vld [vmem:[%s1 + $0x88] sm:$0xff]
        %v574 = vld [vmem:[%s1 + $0x90] sm:$0xff]
        %v575 = vld [vmem:[%s1 + $0x98] sm:$0xff]
        %v576 = vld [vmem:[%s1 + $0xa0] sm:$0xff]
        %v577 = vld [vmem:[%s1 + $0xa8] sm:$0xff]
        %v578 = vld [vmem:[%s1 + $0xb0] sm:$0xff]
        %v579 = vld [vmem:[%s1 + $0xb8] sm:$0xff]
        %v580 = vld [vmem:[%s1 + $0xc0] sm:$0xff]
        %v581 = vld [vmem:[%s1 + $0xc8] sm:$0xff]
        %v582 = vld [vmem:[%s1 + $0xd0] sm:$0xff]
        %v583 = vld [vmem:[%s1 + $0xd8] sm:$0xff]
        %v584 = vld [vmem:[%s1 + $0xe0] sm:$0xff]
        %v585 = vld [vmem:[%s1 + $0xe8] sm:$0xff]
        %v586 = vld [vmem:[%s1 + $0xf0] sm:$0xff]
        %v587 = vld [vmem:[%s1 + $0xf8] sm:$0xff]
        %v588 = vld [vmem:[%s2] sm:$0x1]
        %v590 = vlaneseq
        %v591 = vshrl.u32 %v590, 7
        %v592 = vsub.s32 0, %v591
        %v593 = vrot.slane %v588, %v592
        %595 = vmatprep.subr.mxu0 0.0
        %596 = vmatpush1.msra.mxu0 %v556
        %597 = vmatprep.subr.mxu0 0.0
        %598 = vmatpush1.msra.mxu0 %v557
        %599 = vmatprep.subr.mxu0 0.0
        %600 = vmatpush1.msra.mxu0 %v558
        %601 = vmatprep.subr.mxu0 0.0
        %602 = vmatpush1.msra.mxu0 %v559
        %603 = vmatprep.subr.mxu0 0.0
        %604 = vmatpush1.msra.mxu0 %v560
        %605 = vmatprep.subr.mxu0 0.0
        %606 = vmatpush1.msra.mxu0 %v561
        %607 = vmatprep.subr.mxu0 0.0
        %608 = vmatpush1.msra.mxu0 %v562
        %609 = vmatprep.subr.mxu0 0.0
        %610 = vmatpush1.msra.mxu0 %v563
        %611 = vmatprep.subr.mxu0 0.0
        %612 = vmatpush1.msra.mxu0 %v564
        %613 = vmatprep.subr.mxu0 0.0
        %614 = vmatpush1.msra.mxu0 %v565
        %615 = vmatprep.subr.mxu0 0.0
        %616 = vmatpush1.msra.mxu0 %v566
        %617 = vmatprep.subr.mxu0 0.0
        %618 = vmatpush1.msra.mxu0 %v567
        %619 = vmatprep.subr.mxu0 0.0
        %620 = vmatpush1.msra.mxu0 %v568
        %621 = vmatprep.subr.mxu0 0.0
        %622 = vmatpush1.msra.mxu0 %v569
        %623 = vmatprep.subr.mxu0 0.0
        %624 = vmatpush1.msra.mxu0 %v570
        %625 = vmatprep.subr.mxu0 0.0
        %626 = vmatpush1.msra.mxu0 %v571
        %627 = vmatprep.subr.mxu0 0.0
        %628 = vmatpush1.msra.mxu0 %v572
        %629 = vmatprep.subr.mxu0 0.0
        %630 = vmatpush1.msra.mxu0 %v573
        %631 = vmatprep.subr.mxu0 0.0
        %632 = vmatpush1.msra.mxu0 %v574
        %633 = vmatprep.subr.mxu0 0.0
        %634 = vmatpush1.msra.mxu0 %v575
        %635 = vmatprep.subr.mxu0 0.0
        %636 = vmatpush1.msra.mxu0 %v576
        %637 = vmatprep.subr.mxu0 0.0
        %638 = vmatpush1.msra.mxu0 %v577
        %639 = vmatprep.subr.mxu0 0.0
        %640 = vmatpush1.msra.mxu0 %v578
        %641 = vmatprep.subr.mxu0 0.0
        %642 = vmatpush1.msra.mxu0 %v579
        %643 = vmatprep.subr.mxu0 0.0
        %644 = vmatpush1.msra.mxu0 %v580
        %645 = vmatprep.subr.mxu0 0.0
        %646 = vmatpush1.msra.mxu0 %v581
        %647 = vmatprep.subr.mxu0 0.0
        %648 = vmatpush1.msra.mxu0 %v582
        %649 = vmatprep.subr.mxu0 0.0
        %650 = vmatpush1.msra.mxu0 %v583
        %651 = vmatprep.subr.mxu0 0.0
        %652 = vmatpush1.msra.mxu0 %v584
        %653 = vmatprep.subr.mxu0 0.0
        %654 = vmatpush1.msra.mxu0 %v585
        %655 = vmatprep.subr.mxu0 0.0
        %656 = vmatpush1.msra.mxu0 %v586
        %657 = vmatprep.subr.mxu0 0.0
        %658 = vmatpush1.msra.mxu0 %v587
        %659 = vmatprep.mubr.f32.mxu0 %v555
        %660 = vmatmul.mubr.f32.gmra.mrb[0].mxu0 %v554
        %v661 = vpop.f32.mrb[0].mxu0
        %v662 = vadd.f32 %v593, %v661
        %v663 = vpop.f32.mrb[0].mxu0
        %664 = vdwg.mxu0
        %v665 = vld [vmem:[%s3] sm:$0xff]
        %v666 = vld [vmem:[%s3 + $0x8] sm:$0xff]
        %v667 = vld [vmem:[%s4] sm:$0x1]
        %v669 = vlaneseq
        %v670 = vshrl.u32 %v669, 7
        %v671 = vsub.s32 0, %v670
        %v672 = vrot.slane %v667, %v671
        %vm674 = vcmask 130048
        %v676 = vsel %vm674, %v662, 0
        %678 = vmatprep.subr.mxu0 0.0
        %679 = vmatpush1.msra.mxu0 %v665
        %680 = vmatprep.subr.mxu0 0.0
        %681 = vmatpush1.msra.mxu0 %v666
        %682 = vmatprep.subr.mxu0 0.0
        %683 = vmatpush1.msra.mxu0 0.0
        %684 = vmatprep.subr.mxu0 0.0
        %685 = vmatpush1.msra.mxu0 0.0
        %686 = vmatprep.subr.mxu0 0.0
        %687 = vmatpush1.msra.mxu0 0.0
        %688 = vmatprep.subr.mxu0 0.0
        %689 = vmatpush1.msra.mxu0 0.0
        %690 = vmatprep.subr.mxu0 0.0
        %691 = vmatpush1.msra.mxu0 0.0
        %692 = vmatprep.subr.mxu0 0.0
        %693 = vmatpush1.msra.mxu0 0.0
        %694 = vmatprep.subr.mxu0 0.0
        %695 = vmatpush1.msra.mxu0 0.0
        %696 = vmatprep.subr.mxu0 0.0
        %697 = vmatpush1.msra.mxu0 0.0
        %698 = vmatprep.subr.mxu0 0.0
        %699 = vmatpush1.msra.mxu0 0.0
        %700 = vmatprep.subr.mxu0 0.0
        %701 = vmatpush1.msra.mxu0 0.0
        %702 = vmatprep.subr.mxu0 0.0
        %703 = vmatpush1.msra.mxu0 0.0
        %704 = vmatprep.subr.mxu0 0.0
        %705 = vmatpush1.msra.mxu0 0.0
        %706 = vmatprep.subr.mxu0 0.0
        %707 = vmatpush1.msra.mxu0 0.0
        %708 = vmatprep.subr.mxu0 0.0
        %709 = vmatpush1.msra.mxu0 0.0
        %710 = vmatprep.subr.mxu0 0.0
        %711 = vmatpush1.msra.mxu0 0.0
        %712 = vmatprep.subr.mxu0 0.0
        %713 = vmatpush1.msra.mxu0 0.0
        %714 = vmatprep.subr.mxu0 0.0
        %715 = vmatpush1.msra.mxu0 0.0
        %716 = vmatprep.subr.mxu0 0.0
        %717 = vmatpush1.msra.mxu0 0.0
        %718 = vmatprep.subr.mxu0 0.0
        %719 = vmatpush1.msra.mxu0 0.0
        %720 = vmatprep.subr.mxu0 0.0
        %721 = vmatpush1.msra.mxu0 0.0
        %722 = vmatprep.subr.mxu0 0.0
        %723 = vmatpush1.msra.mxu0 0.0
        %724 = vmatprep.subr.mxu0 0.0
        %725 = vmatpush1.msra.mxu0 0.0
        %726 = vmatprep.subr.mxu0 0.0
        %727 = vmatpush1.msra.mxu0 0.0
        %728 = vmatprep.subr.mxu0 0.0
        %729 = vmatpush1.msra.mxu0 0.0
        %730 = vmatprep.subr.mxu0 0.0
        %731 = vmatpush1.msra.mxu0 0.0
        %732 = vmatprep.subr.mxu0 0.0
        %733 = vmatpush1.msra.mxu0 0.0
        %734 = vmatprep.subr.mxu0 0.0
        %735 = vmatpush1.msra.mxu0 0.0
        %736 = vmatprep.subr.mxu0 0.0
        %737 = vmatpush1.msra.mxu0 0.0
        %738 = vmatprep.subr.mxu0 0.0
        %739 = vmatpush1.msra.mxu0 0.0
        %740 = vmatprep.subr.mxu0 0.0
        %741 = vmatpush1.msra.mxu0 0.0
        %742 = vmatprep.mubr.f32.mxu0 0.0
        %743 = vmatmul.mubr.f32.gmra.mrb[0].mxu0 %v676
        %v744 = vpop.f32.mrb[0].mxu0
        %v745 = vadd.f32 %v672, %v744
        %v746 = vpop.f32.mrb[0].mxu0
        %747 = vdwg.mxu0
        %v748 = vmax.f32 %v745, 0.0
        %v749 = vld [vmem:[%s5] sm:$0xff]
        %v750 = vld [vmem:[%s5 + $0x8] sm:$0xff]
        %v751 = vld [vmem:[%s5 + $0x10] sm:$0xff]
        %v752 = vld [vmem:[%s5 + $0x18] sm:$0xff]
        %v753 = vld [vmem:[%s5 + $0x20] sm:$0xff]
        %v754 = vld [vmem:[%s5 + $0x28] sm:$0xff]
        %v755 = vld [vmem:[%s5 + $0x30] sm:$0xff]
        %v756 = vld [vmem:[%s5 + $0x38] sm:$0xff]
        %v757 = vld [vmem:[%s5 + $0x40] sm:$0xff]
        %v758 = vld [vmem:[%s5 + $0x48] sm:$0xff]
        %v759 = vld [vmem:[%s5 + $0x50] sm:$0xff]
        %v760 = vld [vmem:[%s5 + $0x58] sm:$0xff]
        %v761 = vld [vmem:[%s5 + $0x60] sm:$0xff]
        %v762 = vld [vmem:[%s5 + $0x68] sm:$0xff]
        %v763 = vld [vmem:[%s5 + $0x70] sm:$0xff]
        %v764 = vld [vmem:[%s5 + $0x78] sm:$0xff]
        %v765 = vld [vmem:[%s6] sm:$0x1]
        %v767 = vlaneseq
        %v768 = vshrl.u32 %v767, 7
        %v769 = vsub.s32 0, %v768
        %v770 = vrot.slane %v765, %v769
        %772 = vmatprep.subr.mxu0 0.0
        %773 = vmatpush1.msra.mxu0 %v749
        %774 = vmatprep.subr.mxu0 0.0
        %775 = vmatpush1.msra.mxu0 %v750
        %776 = vmatprep.subr.mxu0 0.0
        %777 = vmatpush1.msra.mxu0 %v751
        %778 = vmatprep.subr.mxu0 0.0
        %779 = vmatpush1.msra.mxu0 %v752
        %780 = vmatprep.subr.mxu0 0.0
        %781 = vmatpush1.msra.mxu0 %v753
        %782 = vmatprep.subr.mxu0 0.0
        %783 = vmatpush1.msra.mxu0 %v754
        %784 = vmatprep.subr.mxu0 0.0
        %785 = vmatpush1.msra.mxu0 %v755
        %786 = vmatprep.subr.mxu0 0.0
        %787 = vmatpush1.msra.mxu0 %v756
        %788 = vmatprep.subr.mxu0 0.0
        %789 = vmatpush1.msra.mxu0 %v757
        %790 = vmatprep.subr.mxu0 0.0
        %791 = vmatpush1.msra.mxu0 %v758
        %792 = vmatprep.subr.mxu0 0.0
        %793 = vmatpush1.msra.mxu0 %v759
        %794 = vmatprep.subr.mxu0 0.0
        %795 = vmatpush1.msra.mxu0 %v760
        %796 = vmatprep.subr.mxu0 0.0
        %797 = vmatpush1.msra.mxu0 %v761
        %798 = vmatprep.subr.mxu0 0.0
        %799 = vmatpush1.msra.mxu0 %v762
        %800 = vmatprep.subr.mxu0 0.0
        %801 = vmatpush1.msra.mxu0 %v763
        %802 = vmatprep.subr.mxu0 0.0
        %803 = vmatpush1.msra.mxu0 %v764
        %804 = vmatprep.subr.mxu0 0.0
        %805 = vmatpush1.msra.mxu0 0.0
        %806 = vmatprep.subr.mxu0 0.0
        %807 = vmatpush1.msra.mxu0 0.0
        %808 = vmatprep.subr.mxu0 0.0
        %809 = vmatpush1.msra.mxu0 0.0
        %810 = vmatprep.subr.mxu0 0.0
        %811 = vmatpush1.msra.mxu0 0.0
        %812 = vmatprep.subr.mxu0 0.0
        %813 = vmatpush1.msra.mxu0 0.0
        %814 = vmatprep.subr.mxu0 0.0
        %815 = vmatpush1.msra.mxu0 0.0
        %816 = vmatprep.subr.mxu0 0.0
        %817 = vmatpush1.msra.mxu0 0.0
        %818 = vmatprep.subr.mxu0 0.0
        %819 = vmatpush1.msra.mxu0 0.0
        %820 = vmatprep.subr.mxu0 0.0
        %821 = vmatpush1.msra.mxu0 0.0
        %822 = vmatprep.subr.mxu0 0.0
        %823 = vmatpush1.msra.mxu0 0.0
        %824 = vmatprep.subr.mxu0 0.0
        %825 = vmatpush1.msra.mxu0 0.0
        %826 = vmatprep.subr.mxu0 0.0
        %827 = vmatpush1.msra.mxu0 0.0
        %828 = vmatprep.subr.mxu0 0.0
        %829 = vmatpush1.msra.mxu0 0.0
        %830 = vmatprep.subr.mxu0 0.0
        %831 = vmatpush1.msra.mxu0 0.0
        %832 = vmatprep.subr.mxu0 0.0
        %833 = vmatpush1.msra.mxu0 0.0
        %834 = vmatprep.subr.mxu0 0.0
        %835 = vmatpush1.msra.mxu0 0.0
        %836 = vmatprep.mubr.f32.mxu0 0.0
        %837 = vmatmul.mubr.f32.gmra.mrb[0].mxu0 %v748
        %v838 = vpop.f32.mrb[0].mxu0
        %v839 = vadd.f32 %v770, %v838
        %v840 = vpop.f32.mrb[0].mxu0
        %841 = vdwg.mxu0
        %v842 = vmax.f32 %v839, 0.0
        %v843 = vld [vmem:[%s7] sm:$0xff]
        %v844 = vld [vmem:[%s7 + $0x8] sm:$0xff]
        %v845 = vld [vmem:[%s7 + $0x10] sm:$0xff]
        %v846 = vld [vmem:[%s7 + $0x18] sm:$0xff]
        %v847 = vld [vmem:[%s7 + $0x20] sm:$0xff]
        %v848 = vld [vmem:[%s7 + $0x28] sm:$0xff]
        %v849 = vld [vmem:[%s7 + $0x30] sm:$0xff]
        %v850 = vld [vmem:[%s7 + $0x38] sm:$0xff]
        %v851 = vld [vmem:[%s7 + $0x40] sm:$0xff]
        %v852 = vld [vmem:[%s7 + $0x48] sm:$0xff]
        %v853 = vld [vmem:[%s7 + $0x50] sm:$0xff]
        %v854 = vld [vmem:[%s7 + $0x58] sm:$0xff]
        %v855 = vld [vmem:[%s7 + $0x60] sm:$0xff]
        %v856 = vld [vmem:[%s7 + $0x68] sm:$0xff]
        %v857 = vld [vmem:[%s7 + $0x70] sm:$0xff]
        %v858 = vld [vmem:[%s7 + $0x78] sm:$0xff]
        %v859 = vld [vmem:[%s8] sm:$0x1]
        %v861 = vlaneseq
        %v862 = vshrl.u32 %v861, 7
        %v863 = vsub.s32 0, %v862
        %v864 = vrot.slane %v859, %v863
        %866 = vmatprep.subr.mxu0 0.0
        %867 = vmatpush1.msra.mxu0 %v843
        %868 = vmatprep.subr.mxu0 0.0
        %869 = vmatpush1.msra.mxu0 %v844
        %870 = vmatprep.subr.mxu0 0.0
        %871 = vmatpush1.msra.mxu0 %v845
        %872 = vmatprep.subr.mxu0 0.0
        %873 = vmatpush1.msra.mxu0 %v846
        %874 = vmatprep.subr.mxu0 0.0
        %875 = vmatpush1.msra.mxu0 %v847
        %876 = vmatprep.subr.mxu0 0.0
        %877 = vmatpush1.msra.mxu0 %v848
        %878 = vmatprep.subr.mxu0 0.0
        %879 = vmatpush1.msra.mxu0 %v849
        %880 = vmatprep.subr.mxu0 0.0
        %881 = vmatpush1.msra.mxu0 %v850
        %882 = vmatprep.subr.mxu0 0.0
        %883 = vmatpush1.msra.mxu0 %v851
        %884 = vmatprep.subr.mxu0 0.0
        %885 = vmatpush1.msra.mxu0 %v852
        %886 = vmatprep.subr.mxu0 0.0
        %887 = vmatpush1.msra.mxu0 %v853
        %888 = vmatprep.subr.mxu0 0.0
        %889 = vmatpush1.msra.mxu0 %v854
        %890 = vmatprep.subr.mxu0 0.0
        %891 = vmatpush1.msra.mxu0 %v855
        %892 = vmatprep.subr.mxu0 0.0
        %893 = vmatpush1.msra.mxu0 %v856
        %894 = vmatprep.subr.mxu0 0.0
        %895 = vmatpush1.msra.mxu0 %v857
        %896 = vmatprep.subr.mxu0 0.0
        %897 = vmatpush1.msra.mxu0 %v858
        %898 = vmatprep.subr.mxu0 0.0
        %899 = vmatpush1.msra.mxu0 0.0
        %900 = vmatprep.subr.mxu0 0.0
        %901 = vmatpush1.msra.mxu0 0.0
        %902 = vmatprep.subr.mxu0 0.0
        %903 = vmatpush1.msra.mxu0 0.0
        %904 = vmatprep.subr.mxu0 0.0
        %905 = vmatpush1.msra.mxu0 0.0
        %906 = vmatprep.subr.mxu0 0.0
        %907 = vmatpush1.msra.mxu0 0.0
        %908 = vmatprep.subr.mxu0 0.0
        %909 = vmatpush1.msra.mxu0 0.0
        %910 = vmatprep.subr.mxu0 0.0
        %911 = vmatpush1.msra.mxu0 0.0
        %912 = vmatprep.subr.mxu0 0.0
        %913 = vmatpush1.msra.mxu0 0.0
        %914 = vmatprep.subr.mxu0 0.0
        %915 = vmatpush1.msra.mxu0 0.0
        %916 = vmatprep.subr.mxu0 0.0
        %917 = vmatpush1.msra.mxu0 0.0
        %918 = vmatprep.subr.mxu0 0.0
        %919 = vmatpush1.msra.mxu0 0.0
        %920 = vmatprep.subr.mxu0 0.0
        %921 = vmatpush1.msra.mxu0 0.0
        %922 = vmatprep.subr.mxu0 0.0
        %923 = vmatpush1.msra.mxu0 0.0
        %924 = vmatprep.subr.mxu0 0.0
        %925 = vmatpush1.msra.mxu0 0.0
        %926 = vmatprep.subr.mxu0 0.0
        %927 = vmatpush1.msra.mxu0 0.0
        %928 = vmatprep.subr.mxu0 0.0
        %929 = vmatpush1.msra.mxu0 0.0
        %930 = vmatprep.mubr.f32.mxu0 0.0
        %931 = vmatmul.mubr.f32.gmra.mrb[0].mxu0 %v842
        %v932 = vpop.f32.mrb[0].mxu0
        %v933 = vadd.f32 %v864, %v932
        %v934 = vpop.f32.mrb[0].mxu0
        %935 = vdwg.mxu0
        %v936 = vmax.f32 %v933, 0.0
        %v937 = vld [vmem:[%s501] sm:$0xff]
        %v938 = vld [vmem:[%s501 + $0x8] sm:$0xff]
        %v939 = vld [vmem:[%s501 + $0x10] sm:$0xff]
        %v940 = vld [vmem:[%s501 + $0x18] sm:$0xff]
        %v941 = vld [vmem:[%s501 + $0x20] sm:$0xff]
        %v942 = vld [vmem:[%s501 + $0x28] sm:$0xff]
        %v943 = vld [vmem:[%s501 + $0x30] sm:$0xff]
        %v944 = vld [vmem:[%s501 + $0x38] sm:$0xff]
        %v945 = vld [vmem:[%s501 + $0x40] sm:$0xff]
        %v946 = vld [vmem:[%s501 + $0x48] sm:$0xff]
        %v947 = vld [vmem:[%s501 + $0x50] sm:$0xff]
        %v948 = vld [vmem:[%s501 + $0x58] sm:$0xff]
        %v949 = vld [vmem:[%s501 + $0x60] sm:$0xff]
        %v950 = vld [vmem:[%s501 + $0x68] sm:$0xff]
        %v951 = vld [vmem:[%s501 + $0x70] sm:$0xff]
        %v952 = vld [vmem:[%s501 + $0x78] sm:$0xff]
        %v953 = vld [vmem:[%s501 + $0x80] sm:$0xff]
        %v954 = vld [vmem:[%s501 + $0x88] sm:$0xff]
        %v955 = vld [vmem:[%s501 + $0x90] sm:$0xff]
        %v956 = vld [vmem:[%s501 + $0x98] sm:$0xff]
        %v957 = vld [vmem:[%s501 + $0xa0] sm:$0xff]
        %v958 = vld [vmem:[%s501 + $0xa8] sm:$0xff]
        %v959 = vld [vmem:[%s501 + $0xb0] sm:$0xff]
        %v960 = vld [vmem:[%s501 + $0xb8] sm:$0xff]
        %v961 = vld [vmem:[%s501 + $0xc0] sm:$0xff]
        %v962 = vld [vmem:[%s501 + $0xc8] sm:$0xff]
        %v963 = vld [vmem:[%s501 + $0xd0] sm:$0xff]
        %v964 = vld [vmem:[%s501 + $0xd8] sm:$0xff]
        %v965 = vld [vmem:[%s501 + $0xe0] sm:$0xff]
        %v966 = vld [vmem:[%s501 + $0xe8] sm:$0xff]
        %v967 = vld [vmem:[%s501 + $0xf0] sm:$0xff]
        %v968 = vld [vmem:[%s501 + $0xf8] sm:$0xff]
        %v969 = vld [vmem:[%s501 + $0x100] sm:$0xff]
        %v970 = vld [vmem:[%s501 + $0x108] sm:$0xff]
        %v971 = vld [vmem:[%s501 + $0x110] sm:$0xff]
        %v972 = vld [vmem:[%s501 + $0x118] sm:$0xff]
        %v973 = vld [vmem:[%s501 + $0x120] sm:$0xff]
        %v974 = vld [vmem:[%s501 + $0x128] sm:$0xff]
        %v975 = vld [vmem:[%s501 + $0x130] sm:$0xff]
        %v976 = vld [vmem:[%s501 + $0x138] sm:$0xff]
        %v977 = vld [vmem:[%s501 + $0x140] sm:$0xff]
        %v978 = vld [vmem:[%s501 + $0x148] sm:$0xff]
        %v979 = vld [vmem:[%s501 + $0x150] sm:$0xff]
        %v980 = vld [vmem:[%s501 + $0x158] sm:$0xff]
        %v981 = vld [vmem:[%s501 + $0x160] sm:$0xff]
        %v982 = vld [vmem:[%s501 + $0x168] sm:$0xff]
        %v983 = vld [vmem:[%s501 + $0x170] sm:$0xff]
        %v984 = vld [vmem:[%s501 + $0x178] sm:$0xff]
        %v985 = vld [vmem:[%s501 + $0x180] sm:$0xff]
        %v986 = vld [vmem:[%s501 + $0x188] sm:$0xff]
        %v987 = vld [vmem:[%s501 + $0x190] sm:$0xff]
        %v988 = vld [vmem:[%s501 + $0x198] sm:$0xff]
        %v989 = vld [vmem:[%s501 + $0x1a0] sm:$0xff]
        %v990 = vld [vmem:[%s501 + $0x1a8] sm:$0xff]
        %v991 = vld [vmem:[%s501 + $0x1b0] sm:$0xff]
        %v992 = vld [vmem:[%s501 + $0x1b8] sm:$0xff]
        %v993 = vld [vmem:[%s501 + $0x1c0] sm:$0xff]
        %v994 = vld [vmem:[%s501 + $0x1c8] sm:$0xff]
        %v995 = vld [vmem:[%s501 + $0x1d0] sm:$0xff]
        %v996 = vld [vmem:[%s501 + $0x1d8] sm:$0xff]
        %v997 = vld [vmem:[%s501 + $0x1e0] sm:$0xff]
        %v998 = vld [vmem:[%s501 + $0x1e8] sm:$0xff]
        %v999 = vld [vmem:[%s501 + $0x1f0] sm:$0xff]
        %v1000 = vld [vmem:[%s501 + $0x1f8] sm:$0xff]
        %v1001 = vld [vmem:[%s546] sm:$0xf]
        %v1003 = vlaneseq
        %v1004 = vshrl.u32 %v1003, 7
        %v1005 = vsub.s32 0, %v1004
        %v1006 = vrot.slane %v1001, %v1005
        %v1007 = vlaneseq
        %v1008 = vshrl.u32 %v1007, 7
        %v1009 = vsub.s32 1, %v1008
        %v1010 = vrot.slane %v1001, %v1009
        %v1011 = vlaneseq
        %v1012 = vshrl.u32 %v1011, 7
        %v1013 = vsub.s32 2, %v1012
        %v1014 = vrot.slane %v1001, %v1013
        %v1015 = vlaneseq
        %v1016 = vshrl.u32 %v1015, 7
        %v1017 = vsub.s32 3, %v1016
        %v1018 = vrot.slane %v1001, %v1017
        %1023 = vmatprep.subr.mxu0 %v938
        %1024 = vmatpush1.msra.mxu0 %v937
        %1025 = vmatprep.subr.mxu0 %v942
        %1026 = vmatpush1.msra.mxu0 %v941
        %1027 = vmatprep.subr.mxu0 %v946
        %1028 = vmatpush1.msra.mxu0 %v945
        %1029 = vmatprep.subr.mxu0 %v950
        %1030 = vmatpush1.msra.mxu0 %v949
        %1031 = vmatprep.subr.mxu0 %v954
        %1032 = vmatpush1.msra.mxu0 %v953
        %1033 = vmatprep.subr.mxu0 %v958
        %1034 = vmatpush1.msra.mxu0 %v957
        %1035 = vmatprep.subr.mxu0 %v962
        %1036 = vmatpush1.msra.mxu0 %v961
        %1037 = vmatprep.subr.mxu0 %v966
        %1038 = vmatpush1.msra.mxu0 %v965
        %1039 = vmatprep.subr.mxu0 %v970
        %1040 = vmatpush1.msra.mxu0 %v969
        %1041 = vmatprep.subr.mxu0 %v974
        %1042 = vmatpush1.msra.mxu0 %v973
        %1043 = vmatprep.subr.mxu0 %v978
        %1044 = vmatpush1.msra.mxu0 %v977
        %1045 = vmatprep.subr.mxu0 %v982
        %1046 = vmatpush1.msra.mxu0 %v981
        %1047 = vmatprep.subr.mxu0 %v986
        %1048 = vmatpush1.msra.mxu0 %v985
        %1049 = vmatprep.subr.mxu0 %v990
        %1050 = vmatpush1.msra.mxu0 %v989
        %1051 = vmatprep.subr.mxu0 %v994
        %1052 = vmatpush1.msra.mxu0 %v993
        %1053 = vmatprep.subr.mxu0 %v998
        %1054 = vmatpush1.msra.mxu0 %v997
        %1055 = vmatprep.subr.mxu0 0.0
        %1056 = vmatpush1.msra.mxu0 0.0
        %1057 = vmatprep.subr.mxu0 0.0
        %1058 = vmatpush1.msra.mxu0 0.0
        %1059 = vmatprep.subr.mxu0 0.0
        %1060 = vmatpush1.msra.mxu0 0.0
        %1061 = vmatprep.subr.mxu0 0.0
        %1062 = vmatpush1.msra.mxu0 0.0
        %1063 = vmatprep.subr.mxu0 0.0
        %1064 = vmatpush1.msra.mxu0 0.0
        %1065 = vmatprep.subr.mxu0 0.0
        %1066 = vmatpush1.msra.mxu0 0.0
        %1067 = vmatprep.subr.mxu0 0.0
        %1068 = vmatpush1.msra.mxu0 0.0
        %1069 = vmatprep.subr.mxu0 0.0
        %1070 = vmatpush1.msra.mxu0 0.0
        %1071 = vmatprep.subr.mxu0 0.0
        %1072 = vmatpush1.msra.mxu0 0.0
        %1073 = vmatprep.subr.mxu0 0.0
        %1074 = vmatpush1.msra.mxu0 0.0
        %1075 = vmatprep.subr.mxu0 0.0
        %1076 = vmatpush1.msra.mxu0 0.0
        %1077 = vmatprep.subr.mxu0 0.0
        %1078 = vmatpush1.msra.mxu0 0.0
        %1079 = vmatprep.subr.mxu0 0.0
        %1080 = vmatpush1.msra.mxu0 0.0
        %1081 = vmatprep.subr.mxu0 0.0
        %1082 = vmatpush1.msra.mxu0 0.0
        %1083 = vmatprep.subr.mxu0 0.0
        %1084 = vmatpush1.msra.mxu0 0.0
        %1085 = vmatprep.subr.mxu0 0.0
        %1086 = vmatpush1.msra.mxu0 0.0
        %1087 = vmatprep.mubr.f32.mxu0 0.0
        %1088 = vmatmul.mubr.f32.gmra.mrb[0].mxu0 %v936
        %v1089 = vpop.f32.mrb[0].mxu0
        %v1090 = vadd.f32 %v1006, %v1089
        %v1091 = vpop.f32.mrb[0].mxu0
        %v1092 = vadd.f32 %v1010, %v1091
        %1093 = vdwg.mxu0
        %1094 = vmatprep.subr.mxu0 %v940
        %1095 = vmatpush1.msra.mxu0 %v939
        %1096 = vmatprep.subr.mxu0 %v944
        %1097 = vmatpush1.msra.mxu0 %v943
        %1098 = vmatprep.subr.mxu0 %v948
        %1099 = vmatpush1.msra.mxu0 %v947
        %1100 = vmatprep.subr.mxu0 %v952
        %1101 = vmatpush1.msra.mxu0 %v951
        %1102 = vmatprep.subr.mxu0 %v956
        %1103 = vmatpush1.msra.mxu0 %v955
        %1104 = vmatprep.subr.mxu0 %v960
        %1105 = vmatpush1.msra.mxu0 %v959
        %1106 = vmatprep.subr.mxu0 %v964
        %1107 = vmatpush1.msra.mxu0 %v963
        %1108 = vmatprep.subr.mxu0 %v968
        %1109 = vmatpush1.msra.mxu0 %v967
        %1110 = vmatprep.subr.mxu0 %v972
        %1111 = vmatpush1.msra.mxu0 %v971
        %1112 = vmatprep.subr.mxu0 %v976
        %1113 = vmatpush1.msra.mxu0 %v975
        %1114 = vmatprep.subr.mxu0 %v980
        %1115 = vmatpush1.msra.mxu0 %v979
        %1116 = vmatprep.subr.mxu0 %v984
        %1117 = vmatpush1.msra.mxu0 %v983
        %1118 = vmatprep.subr.mxu0 %v988
        %1119 = vmatpush1.msra.mxu0 %v987
        %1120 = vmatprep.subr.mxu0 %v992
        %1121 = vmatpush1.msra.mxu0 %v991
        %1122 = vmatprep.subr.mxu0 %v996
        %1123 = vmatpush1.msra.mxu0 %v995
        %1124 = vmatprep.subr.mxu0 %v1000
        %1125 = vmatpush1.msra.mxu0 %v999
        %1126 = vmatprep.subr.mxu0 0.0
        %1127 = vmatpush1.msra.mxu0 0.0
        %1128 = vmatprep.subr.mxu0 0.0
        %1129 = vmatpush1.msra.mxu0 0.0
        %1130 = vmatprep.subr.mxu0 0.0
        %1131 = vmatpush1.msra.mxu0 0.0
        %1132 = vmatprep.subr.mxu0 0.0
        %1133 = vmatpush1.msra.mxu0 0.0
        %1134 = vmatprep.subr.mxu0 0.0
        %1135 = vmatpush1.msra.mxu0 0.0
        %1136 = vmatprep.subr.mxu0 0.0
        %1137 = vmatpush1.msra.mxu0 0.0
        %1138 = vmatprep.subr.mxu0 0.0
        %1139 = vmatpush1.msra.mxu0 0.0
        %1140 = vmatprep.subr.mxu0 0.0
        %1141 = vmatpush1.msra.mxu0 0.0
        %1142 = vmatprep.subr.mxu0 0.0
        %1143 = vmatpush1.msra.mxu0 0.0
        %1144 = vmatprep.subr.mxu0 0.0
        %1145 = vmatpush1.msra.mxu0 0.0
        %1146 = vmatprep.subr.mxu0 0.0
        %1147 = vmatpush1.msra.mxu0 0.0
        %1148 = vmatprep.subr.mxu0 0.0
        %1149 = vmatpush1.msra.mxu0 0.0
        %1150 = vmatprep.subr.mxu0 0.0
        %1151 = vmatpush1.msra.mxu0 0.0
        %1152 = vmatprep.subr.mxu0 0.0
        %1153 = vmatpush1.msra.mxu0 0.0
        %1154 = vmatprep.subr.mxu0 0.0
        %1155 = vmatpush1.msra.mxu0 0.0
        %1156 = vmatprep.subr.mxu0 0.0
        %1157 = vmatpush1.msra.mxu0 0.0
        %1158 = vmatprep.mubr.f32.mxu0 0.0
        %1159 = vmatmul.mubr.f32.gmra.mrb[0].mxu0 %v936
        %v1160 = vpop.f32.mrb[0].mxu0
        %v1161 = vadd.f32 %v1014, %v1160
        %v1162 = vpop.f32.mrb[0].mxu0
        %v1163 = vadd.f32 %v1018, %v1162
        %1164 = vdwg.mxu0
        %1165 = vst [vmem:[%s552] sm:$0xff] %v1090
        %1166 = vst [vmem:[%s552 + $0x8] sm:$0xff] %v1092
        %1167 = vst [vmem:[%s552 + $0x10] sm:$0xff] %v1161
        %1168 = vst [vmem:[%s552 + $0x18] sm:$0xff] %v1163
        %s1169 = smul.u32 4, %s22
        %p1170 = scmp.lt.s32.totalorder %s1169, 7
        %s1171 = scalar_select %p1170, %s1169, 7
        %s1172 = smul.addr %s1171, 8
        %s1173 = scalar_lea.vmem %s11, %s1172
        // Predicated region
        $region88: #{autoencoder_mlp_forward.7} parent=82 // pred_check
          %p1174 = pneg %p281
        $region89: #{autoencoder_mlp_forward.7} parent=82 // pred_check_branch
          %1176 = sbr.rel (%p1174) target = $region91
        $region90: #{autoencoder_mlp_forward.7} parent=82 // pred_region
          %s1177 = smul.u32 4, %s22
        $region91: #{autoencoder_mlp_forward.7} parent=82 // pred_fallthru
          _
      $region83: #{autoencoder_mlp_forward.7} parent=5 // pred_fallthru
        _
      %p1178 = scmp.le.s32.totalorder 2, %s17
      // Predicated region
      $region92: #{autoencoder_mlp_forward.7} parent=5 // pred_check
        %p1179 = pneg %p1178
      $region93: #{autoencoder_mlp_forward.7} parent=5 // pred_check_branch
        %1181 = sbr.rel (%p1179) target = $region95
      $region94: #{autoencoder_mlp_forward.7} parent=5 // pred_region
        %s1182 = ssub.s32 %s17, 2
        // Predicated region
        $region96: #{autoencoder_mlp_forward.7} parent=94 // pred_check
          %p1183 = pneg %p287
        $region97: #{autoencoder_mlp_forward.7} parent=94 // pred_check_branch
          %1185 = sbr.rel (%p1183) target = $region99
        $region98: #{autoencoder_mlp_forward.7} parent=94 // pred_region
          %s1186 = smul.u32 4, %s23
          %p1187 = scmp.lt.s32.totalorder %s1186, 7
          %s1188 = scalar_select %p1187, %s1186, 7
          %s1189 = smul.addr %s1188, 8
          %s1190 = scalar_lea.vmem %s11, %s1189
        $region99: #{autoencoder_mlp_forward.7} parent=94 // pred_fallthru
          _
      $region95: #{autoencoder_mlp_forward.7} parent=5 // pred_fallthru
        _
    $region6: #{autoencoder_mlp_forward.7} parent=1 // loop_footer
      %s21 = sadd.s32 1, %s17
    $region7: #{autoencoder_mlp_forward.7} parent=1 // loop_footer_branch
      %16 = sbr.rel target = $region3
    $region8: #{autoencoder_mlp_forward.7} parent=1 // loop_exit
      _

</llo_original>
